<compile_context>
chip_gen: v6e
topology: v6e:2x2x1
jax: 0.10.0
libtpu: 0.0.40
codegen_flags: <defaults>
</compile_context>

<pallas_src>
import math
import functools

import jax
import jax.numpy as jnp
from jax.experimental import pallas as pl
from jax.experimental.pallas import tpu as pltpu


_LANE = 128
_BLOCK_BYTES = 8 << 20        # target per-buffer output block size
_MIN_BLOCK_BYTES = 2 << 20    # never shrink below this when hunting an even grid
# 2 x 8 MiB double-buffered output + tiny inputs + compiler scratch.  Above
# v5e's 16 MiB default scoped VMEM, comfortably below v7x's 64 MiB physical.
_VMEM_LIMIT_BYTES = 40 << 20


def _pos_embed_sine_kernel(y_ref, x_ref, out_ref, *, num_pos_feats, temperature):
    """One (1, C, tS) output tile of the sine positional embedding.

    y_ref, x_ref : (1, 1, tS) f32  flattened row/col cumsum embeddings
    out_ref      : (1, 2P, tS)     NC(HW) tile; spatial = lane axis (dense vst),
                                   channels = sublane axis (two dense halves)
    """
    P = num_pos_feats

    # Per-channel constants rebuilt from iota at trace time (no extra inputs,
    # BlockSpecs, double buffers or setup DMAs — perf-review item).
    #   inv_dim[k] = temperature ** (-2*floor(k/2)/P)  == 1 / dim_t[k]
    #   phase[k]   = (k % 2) * pi/2                     (cos(z) = sin(z + pi/2))
    k = jax.lax.broadcasted_iota(jnp.int32, (P, 1), 0).astype(jnp.float32)
    pair = jnp.floor(k * 0.5)                 # floor(k/2), exact in f32
    parity = k - 2.0 * pair                   # 0.0 / 1.0, exact
    inv_dim = jnp.exp(pair * (-2.0 * math.log(temperature) / P))   # (P, 1)
    phase = parity * (math.pi / 2.0)                               # (P, 1)

    # (1, tS) rows; jnp broadcasting replicates them across the P sublanes
    # (load-path / VPU broadcast; the binding slot here is the VALU sin poly).
    y = y_ref[0]
    x = x_ref[0]

    # out[c, s] = sin(embed[s] * inv_dim[c] + phase[c]).
    # The phase fold keeps the channel axis dense (no sublane-strided or
    # interleaved stores); it does NOT reduce the sin/cos polynomial count.
    # Sharing the argument across each sin/cos pair (P/2 rows) would only pay
    # off if the required channel interleave is cheaper than the saved
    # multiplies — per review this needs bundle-dump verification, so the
    # dense-store form is kept.
    # TODO(synk): for normalize=False with very large H/W the +pi/2 fold loses
    # ~|z|*eps of argument precision vs. an exact cos (up to ~1e-4 at z~1e3).
    out_ref[0, :P, :] = jnp.sin(y * inv_dim + phase).astype(out_ref.dtype)
    out_ref[0, P:, :] = jnp.sin(x * inv_dim + phase).astype(out_ref.dtype)


def _pick_spatial_tile(HW, C, itemsize, batch):
    """Spatial (lane) tile: a 128-multiple no larger than the byte budget,
    preferring (a) an even total grid-step count (v7x dual-core balance) and
    (b) a tiling with no ragged last tile, without shrinking the block below
    ~_MIN_BLOCK_BYTES.  Works for any HW (ragged tails are masked by Pallas)."""
    hw_pad = pl.cdiv(HW, _LANE) * _LANE
    cap = max(_LANE, (_BLOCK_BYTES // (C * itemsize)) // _LANE * _LANE)
    cap = min(cap, hw_pad)
    floor_t = max(_LANE, min(cap, (_MIN_BLOCK_BYTES // (C * itemsize)) // _LANE * _LANE))

    best_t, best_key = cap, None
    t = cap
    while t >= floor_t:
        n_steps = batch * pl.cdiv(HW, t)
        key = (n_steps % 2 == 0 or n_steps == 1,   # balanced across 2 TCs
               hw_pad % t == 0,                    # no masked ragged tile
               t)                                  # biggest tile wins ties
        if best_key is None or key > best_key:
            best_key, best_t = key, t
        t -= _LANE
    return best_t


def position_embedding_sine(mask, *, num_pos_feats=64, temperature=10000,
                            normalize=False, scale=None, out_dtype=jnp.float32):
    """mask: (B, H, W) bool, True == padded.  Returns (B, 2*num_pos_feats, H, W)."""
    if scale is not None and normalize is False:
        raise ValueError("normalize should be True if scale is passed")
    if scale is None:
        scale = 2 * math.pi

    B, H, W = mask.shape
    P = num_pos_feats
    C = 2 * P
    HW = H * W

    # Tiny prologue in plain JAX: cross-row/col cumsums over the (B,H,W) mask.
    not_mask = (~mask).astype(jnp.float32)
    y_embed = jnp.cumsum(not_mask, axis=1)
    x_embed = jnp.cumsum(not_mask, axis=2)
    if normalize:
        eps = 1e-6
        y_embed = y_embed / (y_embed[:, -1:, :] + eps) * scale
        x_embed = x_embed / (x_embed[:, :, -1:] + eps) * scale

    y3 = y_embed.reshape(B, 1, HW)     # contiguous reshapes (free)
    x3 = x_embed.reshape(B, 1, HW)

    out_dtype = jnp.dtype(out_dtype)
    tS = _pick_spatial_tile(HW, C, out_dtype.itemsize, B)
    grid = (B, pl.cdiv(HW, tS))        # ragged last spatial tile is masked

    kernel = functools.partial(_pos_embed_sine_kernel,
                               num_pos_feats=P, temperature=float(temperature))

    out = pl.pallas_call(
        kernel,
        out_shape=jax.ShapeDtypeStruct((B, C, HW), out_dtype),
        grid=grid,
        in_specs=[
            pl.BlockSpec((1, 1, tS), lambda b, s: (b, 0, s)),   # y_embed
            pl.BlockSpec((1, 1, tS), lambda b, s: (b, 0, s)),   # x_embed
        ],
        out_specs=pl.BlockSpec((1, C, tS), lambda b, s: (b, 0, s)),
        compiler_params=pltpu.CompilerParams(
            dimension_semantics=("parallel", "parallel"),
            vmem_limit_bytes=_VMEM_LIMIT_BYTES),
    )(y3, x3)

    # NC(HW) -> NCHW is a contiguous reshape: no transpose, no copy.
    return out.reshape(B, C, H, W)


def _reference(mask, *, num_pos_feats=64, temperature=10000, normalize=False,
               scale=None):
    """Pure-JAX transcription of the PyTorch forward, for validation."""
    if scale is None:
        scale = 2 * math.pi
    not_mask = (~mask).astype(jnp.float32)
    y_embed = jnp.cumsum(not_mask, axis=1)
    x_embed = jnp.cumsum(not_mask, axis=2)
    if normalize:
        eps = 1e-6
        y_embed = y_embed / (y_embed[:, -1:, :] + eps) * scale
        x_embed = x_embed / (x_embed[:, :, -1:] + eps) * scale
    dim_t = jnp.arange(num_pos_feats, dtype=jnp.float32)
    dim_t = temperature ** (2 * jnp.floor(dim_t / 2) / num_pos_feats)
    pos_x = x_embed[:, :, :, None] / dim_t
    pos_y = y_embed[:, :, :, None] / dim_t
    B, H, W = mask.shape
    pos_x = jnp.stack((jnp.sin(pos_x[..., 0::2]), jnp.cos(pos_x[..., 1::2])),
                      axis=4).reshape(B, H, W, -1)
    pos_y = jnp.stack((jnp.sin(pos_y[..., 0::2]), jnp.cos(pos_y[..., 1::2])),
                      axis=4).reshape(B, H, W, -1)
    pos = jnp.concatenate((pos_y, pos_x), axis=3)
    return jnp.transpose(pos, (0, 3, 1, 2))


if __name__ == "__main__":
    key = jax.random.PRNGKey(0)
    B, Cin, H, W = 2, 4, 16, 16
    num_pos_feats = 64

    kx, km = jax.random.split(key)
    # x (tensor_list.tensors) is only used for its device in the PyTorch module.
    x = jax.random.normal(kx, (B, Cin, H, W), dtype=jnp.float32)
    # mask (tensor_list.mask): True == padded position.
    mask = jax.random.bernoulli(km, p=0.2, shape=(B, H, W))

    # normalize=False path
    pos = position_embedding_sine(mask, num_pos_feats=num_pos_feats,
                                  temperature=10000, normalize=False)
    pos = jax.block_until_ready(pos)
    ref = _reference(mask, num_pos_feats=num_pos_feats, temperature=10000,
                     normalize=False)
    assert pos.shape == (B, 2 * num_pos_feats, H, W), pos.shape
    assert jnp.allclose(pos, ref, atol=5e-5, rtol=1e-5), "mismatch (normalize=False)"

    # normalize=True path
    pos_n = position_embedding_sine(mask, num_pos_feats=num_pos_feats,
                                    temperature=10000, normalize=True)
    pos_n = jax.block_until_ready(pos_n)
    ref_n = _reference(mask, num_pos_feats=num_pos_feats, temperature=10000,
                       normalize=True)
    assert jnp.allclose(pos_n, ref_n, atol=5e-5, rtol=1e-5), "mismatch (normalize=True)"

    # bf16 output path (store-side cast only; compute stays f32 -> v5e-safe).
    pos_bf = position_embedding_sine(mask, num_pos_feats=num_pos_feats,
                                     temperature=10000, normalize=True,
                                     out_dtype=jnp.bfloat16)
    pos_bf = jax.block_until_ready(pos_bf)
    assert pos_bf.dtype == jnp.bfloat16
    assert jnp.allclose(pos_bf.astype(jnp.float32), ref_n, atol=2e-2, rtol=0), \
        "mismatch (bf16 output)"

    print("KERNEL_OK")
</pallas_src>

<mosaic_0001>
module attributes {stable_mosaic.version = 11 : i64} {
  func.func @_pos_embed_sine_kernel(%arg0: i32, %arg1: i32, %arg2: memref<1x1x256xf32, #tpu.memory_space<vmem>>, %arg3: memref<1x1x256xf32, #tpu.memory_space<vmem>>, %arg4: memref<1x128x256xf32, #tpu.memory_space<vmem>>) attributes {dimension_semantics = [#tpu.dimension_semantics<parallel>, #tpu.dimension_semantics<parallel>], iteration_bounds = array<i64: 2, 1>, scalar_prefetch = 0 : i64, scratch_operands = 0 : i64, tpu.core_type = #tpu.core_type<tc>, window_params = [{transform_indices = @transform_0, window_bounds = array<i64: 1, 1, 256>}, {transform_indices = @transform_1, window_bounds = array<i64: 1, 1, 256>}, {transform_indices = @transform_2, window_bounds = array<i64: 1, 128, 256>}]} {
    %0 = tpu.iota {dimensions = array<i32: 0>} : vector<64x1xi32>
    %1 = arith.sitofp %0 : vector<64x1xi32> to vector<64x1xf32>
    %cst = arith.constant 5.000000e-01 : f32
    %2 = vector.broadcast %cst : f32 to vector<64x1xf32>
    %3 = arith.mulf %1, %2 : vector<64x1xf32>
    %4 = math.floor %3 : vector<64x1xf32>
    %cst_0 = arith.constant 2.000000e+00 : f32
    %5 = vector.broadcast %cst_0 : f32 to vector<64x1xf32>
    %6 = arith.mulf %5, %4 : vector<64x1xf32>
    %7 = arith.subf %1, %6 : vector<64x1xf32>
    %cst_1 = arith.constant -0.287823141 : f32
    %8 = vector.broadcast %cst_1 : f32 to vector<64x1xf32>
    %9 = arith.mulf %4, %8 : vector<64x1xf32>
    %10 = math.exp %9 : vector<64x1xf32>
    %cst_2 = arith.constant 1.57079637 : f32
    %11 = vector.broadcast %cst_2 : f32 to vector<64x1xf32>
    %12 = arith.mulf %7, %11 : vector<64x1xf32>
    %c0 = arith.constant 0 : index
    %c0_3 = arith.constant 0 : index
    %c0_4 = arith.constant 0 : index
    %13 = vector.load %arg2[%c0, %c0_3, %c0_4] : memref<1x1x256xf32, #tpu.memory_space<vmem>>, vector<1x1x256xf32>
    %14 = vector.shape_cast %13 : vector<1x1x256xf32> to vector<1x256xf32>
    %c0_5 = arith.constant 0 : index
    %c0_6 = arith.constant 0 : index
    %c0_7 = arith.constant 0 : index
    %15 = vector.load %arg3[%c0_5, %c0_6, %c0_7] : memref<1x1x256xf32, #tpu.memory_space<vmem>>, vector<1x1x256xf32>
    %16 = vector.shape_cast %15 : vector<1x1x256xf32> to vector<1x256xf32>
    %17 = vector.broadcast %14 : vector<1x256xf32> to vector<64x256xf32>
    %18 = vector.broadcast %10 : vector<64x1xf32> to vector<64x256xf32>
    %19 = arith.mulf %17, %18 : vector<64x256xf32>
    %20 = vector.broadcast %12 : vector<64x1xf32> to vector<64x256xf32>
    %21 = arith.addf %19, %20 : vector<64x256xf32>
    %22 = math.sin %21 : vector<64x256xf32>
    %c0_8 = arith.constant 0 : index
    %c0_9 = arith.constant 0 : index
    %c0_10 = arith.constant 0 : index
    %23 = vector.load %arg4[%c0_8, %c0_9, %c0_10] : memref<1x128x256xf32, #tpu.memory_space<vmem>>, vector<1x64x256xf32>
    %24 = vector.shape_cast %23 : vector<1x64x256xf32> to vector<64x256xf32>
    %25 = vector.shape_cast %22 : vector<64x256xf32> to vector<1x64x256xf32>
    tpu.vector_store %arg4[%c0_8, %c0_9, %c0_10], %25 {strides = array<i32>} : memref<1x128x256xf32, #tpu.memory_space<vmem>>, vector<1x64x256xf32>,
    %26 = vector.broadcast %16 : vector<1x256xf32> to vector<64x256xf32>
    %27 = vector.broadcast %10 : vector<64x1xf32> to vector<64x256xf32>
    %28 = arith.mulf %26, %27 : vector<64x256xf32>
    %29 = vector.broadcast %12 : vector<64x1xf32> to vector<64x256xf32>
    %30 = arith.addf %28, %29 : vector<64x256xf32>
    %31 = math.sin %30 : vector<64x256xf32>
    %c0_11 = arith.constant 0 : index
    %c64 = arith.constant 64 : index
    %c0_12 = arith.constant 0 : index
    %32 = vector.load %arg4[%c0_11, %c64, %c0_12] : memref<1x128x256xf32, #tpu.memory_space<vmem>>, vector<1x64x256xf32>
    %33 = vector.shape_cast %32 : vector<1x64x256xf32> to vector<64x256xf32>
    %34 = vector.shape_cast %31 : vector<64x256xf32> to vector<1x64x256xf32>
    tpu.vector_store %arg4[%c0_11, %c64, %c0_12], %34 {strides = array<i32>} : memref<1x128x256xf32, #tpu.memory_space<vmem>>, vector<1x64x256xf32>,
    return
  }
  func.func @transform_0(%arg0: i32, %arg1: i32) -> (i32, i32, i32) {
    %c0_i32 = arith.constant 0 : i32
    %c0_i32_0 = arith.constant 0 : i32
    return %arg0, %c0_i32, %arg1 : i32, i32, i32
  }
  func.func @transform_1(%arg0: i32, %arg1: i32) -> (i32, i32, i32) {
    %c0_i32 = arith.constant 0 : i32
    %c0_i32_0 = arith.constant 0 : i32
    return %arg0, %c0_i32, %arg1 : i32, i32, i32
  }
  func.func @transform_2(%arg0: i32, %arg1: i32) -> (i32, i32, i32) {
    %c0_i32 = arith.constant 0 : i32
    %c0_i32_0 = arith.constant 0 : i32
    return %arg0, %c0_i32, %arg1 : i32, i32, i32
  }
}

</mosaic_0001>

<llo_original>
// kernel: tpu_custom_call.1
$region0: #{tpu_custom_call.1}
  #allocation0 [shape = 'u32[]', space=smem, size = 0x4, offset = 0x4, fixed_abs, tag = 'smem constant byte address 0x4 - core index']
  #allocation1 [shape = 'u32[144,128]{1,0:T(1,128)}', space=vmem, size = 0x12000, scoped, tag = 'internal scratch']
  %s0 = inlined_call_operand.hbm [shape: f32[2,1,256], index: 0, kind: input, shape index: {}]
  %s1 = inlined_call_operand.hbm [shape: f32[2,1,256], index: 1, kind: input, shape index: {}]
  %s2 = inlined_call_operand.hbm [shape: f32[2,128,256], index: 2, kind: output, shape index: {}]
  %s3 = sld [smem:[#allocation0]]
  $region49: #{tpu_custom_call.1} parent=0
    _
  %s5 = ssub.s32 1, %s3
  %s6 = scalar_select 0, %s5, %s3
  $region1: #{tpu_custom_call.1} parent=0
    #allocation2 [shape = 'u8[2048]{0}', space=vmem, size = 0x800, scoped, tag = 'input window, operand 0']
    #allocation3 [shape = 's32[2]{0}', space=sflag, size = 0x8, scoped, tag = 'scoped memory for tpu_custom_call.1']
    #allocation4 [shape = 's32[2]{0}', space=sflag, size = 0x8, scoped, tag = 'scoped memory for tpu_custom_call.1']
    #allocation5 [shape = 'u8[2048]{0}', space=vmem, size = 0x800, scoped, tag = 'input window, operand 1']
    #allocation6 [shape = 's32[2]{0}', space=sflag, size = 0x8, scoped, tag = 'scoped memory for tpu_custom_call.1']
    #allocation7 [shape = 'u8[262144]{0}', space=vmem, size = 0x40000, scoped, tag = 'output window, operand 0']
    %7 = vsyncpa [#allocation3], 0
    %s8 = scalar_lea.sflag [#allocation3], 1
    %9 = vsyncpa %s8, 0
    %10 = vsyncpa [#allocation6], 0
    %s11 = scalar_lea.sflag [#allocation6], 1
    %12 = vsyncpa %s11, 0
    %13 = vsyncpa [#allocation4], 0
    %s14 = scalar_lea.sflag [#allocation4], 1
    %15 = vsyncpa %s14, 0
    loop: start=0, step=1, limit=4
    $region2: #{tpu_custom_call.1} parent=1 // loop_pre_header
      _
    $region3: #{tpu_custom_call.1} parent=1 // loop_header
      %s17 = sphi 0, %s21
      %p18 = scmp.ge.s32.totalorder %s17, 4
      %s24 = sphi 0, %s36
      %s25 = sphi 0, %s32
      %s26 = sphi 0, %s24
      %s27 = sphi 0, %s25
      %s28 = sphi 0, %s26
      %s29 = sphi 0, %s27
      %s41 = sphi 0, %s43
      %s44 = sphi 0, %s41
      %s45 = sphi 0, %s44
      %s61 = sphi 0, %s45
      %s69 = sphi 0, %s71
      %s72 = sphi 0, %s69
      %s73 = sphi 0, %s72
      %s89 = sphi 0, %s73
      %s97 = sphi 0, %s99
      %s100 = sphi 0, %s97
      %s101 = sphi 0, %s100
      %s117 = sphi 0, %s101
    $region4: #{tpu_custom_call.1} parent=1 // loop_header_branch
      %20 = sbr.rel (%p18) target = $region8
    $region5: #{tpu_custom_call.1} parent=1 // loop_body
      %s22 = ssub.s32 %s17, 1
      %s23 = ssub.s32 %s17, 2
      %s30 = sadd.s32 1, %s25
      %p31 = scmp.ge.s32.totalorder %s30, 1
      %s32 = scalar_select %p31, 0, %s30
      %s33 = sadd.s32 1, %s24
      %s34 = scalar_select %p31, %s33, %s24
      %p35 = scmp.ge.s32.totalorder %s34, 2
      %s36 = scalar_select %p35, 0, %s34
      %s37 = ssub.s32 %s24, %s36
      %s38 = ssub.s32 %s25, %s32
      %s39 = sor.u32 %s37, %s38
      %p40 = scmp.eq.s32.totalorder %s39, 0
      %s42 = sadd.s32 %s41, 1
      %s43 = scalar_select %p40, %s41, %s42
      %p46 = pneg %p40
      %p47 = scmp.eq.s32.totalorder %s17, 1
      %p48 = por %p46, %p47
      %p49 = scmp.ne.s32.totalorder %s41, %s44
      %p50 = scmp.eq.s32.totalorder %s17, 0
      %p51 = por %p49, %p50
      %p52 = scmp.ne.s32.totalorder %s41, %s44
      %p53 = scmp.eq.s32.totalorder %s22, 1
      %p54 = por %p52, %p53
      %p55 = scmp.ne.s32.totalorder %s44, %s45
      %p56 = scmp.eq.s32.totalorder %s22, 0
      %p57 = por %p55, %p56
      %p58 = scmp.ne.s32.totalorder %s44, %s45
      %p59 = scmp.eq.s32.totalorder %s23, 1
      %p60 = por %p58, %p59
      %p62 = scmp.ne.s32.totalorder %s45, %s61
      %p63 = scmp.eq.s32.totalorder %s23, 0
      %p64 = por %p62, %p63
      %s65 = ssub.s32 %s24, %s36
      %s66 = ssub.s32 %s25, %s32
      %s67 = sor.u32 %s65, %s66
      %p68 = scmp.eq.s32.totalorder %s67, 0
      %s70 = sadd.s32 %s69, 1
      %s71 = scalar_select %p68, %s69, %s70
      %p74 = pneg %p68
      %p75 = scmp.eq.s32.totalorder %s17, 1
      %p76 = por %p74, %p75
      %p77 = scmp.ne.s32.totalorder %s69, %s72
      %p78 = scmp.eq.s32.totalorder %s17, 0
      %p79 = por %p77, %p78
      %p80 = scmp.ne.s32.totalorder %s69, %s72
      %p81 = scmp.eq.s32.totalorder %s22, 1
      %p82 = por %p80, %p81
      %p83 = scmp.ne.s32.totalorder %s72, %s73
      %p84 = scmp.eq.s32.totalorder %s22, 0
      %p85 = por %p83, %p84
      %p86 = scmp.ne.s32.totalorder %s72, %s73
      %p87 = scmp.eq.s32.totalorder %s23, 1
      %p88 = por %p86, %p87
      %p90 = scmp.ne.s32.totalorder %s73, %s89
      %p91 = scmp.eq.s32.totalorder %s23, 0
      %p92 = por %p90, %p91
      %s93 = ssub.s32 %s24, %s36
      %s94 = ssub.s32 %s25, %s32
      %s95 = sor.u32 %s93, %s94
      %p96 = scmp.eq.s32.totalorder %s95, 0
      %s98 = sadd.s32 %s97, 1
      %s99 = scalar_select %p96, %s97, %s98
      %p102 = pneg %p96
      %p103 = scmp.eq.s32.totalorder %s17, 1
      %p104 = por %p102, %p103
      %p105 = scmp.ne.s32.totalorder %s97, %s100
      %p106 = scmp.eq.s32.totalorder %s17, 0
      %p107 = por %p105, %p106
      %p108 = scmp.ne.s32.totalorder %s97, %s100
      %p109 = scmp.eq.s32.totalorder %s22, 1
      %p110 = por %p108, %p109
      %p111 = scmp.ne.s32.totalorder %s100, %s101
      %p112 = scmp.eq.s32.totalorder %s22, 0
      %p113 = por %p111, %p112
      %p114 = scmp.ne.s32.totalorder %s100, %s101
      %p115 = scmp.eq.s32.totalorder %s23, 1
      %p116 = por %p114, %p115
      %p118 = scmp.ne.s32.totalorder %s101, %s117
      %p119 = scmp.eq.s32.totalorder %s23, 0
      %p120 = por %p118, %p119
      %p121 = scmp.le.s32.totalorder 1, %s17
      %p122 = scmp.lt.s32.totalorder %s17, 3
      %p123 = pnand %p121, %p122
      %p124 = pneg %p123
      // Predicated region
      $region9: #{tpu_custom_call.1} parent=5 // pred_check
        _
      $region10: #{tpu_custom_call.1} parent=5 // pred_check_branch
        %126 = sbr.rel (%p123) target = $region12
      $region11: #{tpu_custom_call.1} parent=5 // pred_region
        %s127 = ssub.s32 %s17, 1
      $region12: #{tpu_custom_call.1} parent=5 // pred_fallthru
        _
      %p128 = scmp.lt.s32.totalorder %s17, 2
      // Predicated region
      $region13: #{tpu_custom_call.1} parent=5 // pred_check
        %p129 = pneg %p128
      $region14: #{tpu_custom_call.1} parent=5 // pred_check_branch
        %131 = sbr.rel (%p129) target = $region16
      $region15: #{tpu_custom_call.1} parent=5 // pred_region
        // Predicated region
        $region17: #{tpu_custom_call.1} parent=15 // pred_check
          %p132 = pneg %p51
        $region18: #{tpu_custom_call.1} parent=15 // pred_check_branch
          %134 = sbr.rel (%p132) target = $region20
        $region19: #{tpu_custom_call.1} parent=15 // pred_region
          %s135 = sand.u32 %s41, 1
          %s136 = scalar_lea.sflag [#allocation3], %s135
          %s137 = sand.u32 %s41, 1
          %s138 = smul.addr %s137, 2
          %s139 = scalar_lea.vmem [#allocation2], %s138
          %s140 = smul.u32 2, %s25
          %s142 = ssub.s32 32, 32
          %143 = vsyncadd %s136, %s142
          %s144 = smul.addr %s24, 2
          %s145 = sadd.s32 %s140, %s144
          %s146 = smul.addr %s145, 16
          %s147 = scalar_lea.hbm %s0, %s146
          %s149 = sshll.u32 %s139, 4
          %s150 = int_to_ptr.vmem [resolvable:$true] %s149
          %152 = dma.hbm_to_vmem [thread:$0]  %s147, 32, %s150, %s136
        $region20: #{tpu_custom_call.1} parent=15 // pred_fallthru
          _
        // Predicated region
        $region21: #{tpu_custom_call.1} parent=15 // pred_check
          %p153 = pneg %p79
        $region22: #{tpu_custom_call.1} parent=15 // pred_check_branch
          %155 = sbr.rel (%p153) target = $region24
        $region23: #{tpu_custom_call.1} parent=15 // pred_region
          %s156 = sand.u32 %s69, 1
          %s157 = scalar_lea.sflag [#allocation6], %s156
          %s158 = sand.u32 %s69, 1
          %s159 = smul.addr %s158, 2
          %s160 = scalar_lea.vmem [#allocation5], %s159
          %s161 = smul.u32 2, %s25
          %s163 = ssub.s32 32, 32
          %164 = vsyncadd %s157, %s163
          %s165 = smul.addr %s24, 2
          %s166 = sadd.s32 %s161, %s165
          %s167 = smul.addr %s166, 16
          %s168 = scalar_lea.hbm %s1, %s167
          %s170 = sshll.u32 %s160, 4
          %s171 = int_to_ptr.vmem [resolvable:$true] %s170
          %173 = dma.hbm_to_vmem [thread:$0]  %s168, 32, %s171, %s157
        $region24: #{tpu_custom_call.1} parent=15 // pred_fallthru
          _
      $region16: #{tpu_custom_call.1} parent=5 // pred_fallthru
        _
      %p174 = scmp.le.s32.totalorder 1, %s17
      %p175 = scmp.lt.s32.totalorder %s17, 3
      %p176 = pnand %p174, %p175
      %p177 = pneg %p176
      // Predicated region
      $region25: #{tpu_custom_call.1} parent=5 // pred_check
        _
      $region26: #{tpu_custom_call.1} parent=5 // pred_check_branch
        %179 = sbr.rel (%p176) target = $region28
      $region27: #{tpu_custom_call.1} parent=5 // pred_region
        %s180 = ssub.s32 %s17, 1
        %s181 = sand.u32 %s44, 1
        %s182 = scalar_lea.sflag [#allocation3], %s181
        %s183 = sand.u32 %s44, 1
        %s184 = smul.addr %s183, 2
        %s185 = scalar_lea.vmem [#allocation2], %s184
        // Predicated region
        $region29: #{tpu_custom_call.1} parent=27 // pred_check
          %p186 = pneg %p57
        $region30: #{tpu_custom_call.1} parent=27 // pred_check_branch
          %188 = sbr.rel (%p186) target = $region32
        $region31: #{tpu_custom_call.1} parent=27 // pred_region
          %189 = dma.done %s182, 32
        $region32: #{tpu_custom_call.1} parent=27 // pred_fallthru
          _
        %s190 = sand.u32 %s72, 1
        %s191 = scalar_lea.sflag [#allocation6], %s190
        %s192 = sand.u32 %s72, 1
        %s193 = smul.addr %s192, 2
        %s194 = scalar_lea.vmem [#allocation5], %s193
        // Predicated region
        $region33: #{tpu_custom_call.1} parent=27 // pred_check
          %p195 = pneg %p85
        $region34: #{tpu_custom_call.1} parent=27 // pred_check_branch
          %197 = sbr.rel (%p195) target = $region36
        $region35: #{tpu_custom_call.1} parent=27 // pred_region
          %198 = dma.done %s191, 32
        $region36: #{tpu_custom_call.1} parent=27 // pred_fallthru
          _
        %s199 = sand.u32 %s44, 1
        %s200 = scalar_lea.sflag [#allocation3], %s199
        %s201 = sand.u32 %s44, 1
        %s202 = smul.addr %s201, 2
        %s203 = scalar_lea.vmem [#allocation2], %s202
        %p204 = pneg %p57
        %p205 = pneg %p54
        %s206 = sand.u32 %s72, 1
        %s207 = scalar_lea.sflag [#allocation6], %s206
        %s208 = sand.u32 %s72, 1
        %s209 = smul.addr %s208, 2
        %s210 = scalar_lea.vmem [#allocation5], %s209
        %p211 = pneg %p85
        %p212 = pneg %p82
        %p213 = pneg %p113
        %p214 = pneg %p110
        %s215 = sand.u32 %s100, 1
        %s216 = scalar_lea.sflag [#allocation4], %s215
        %s217 = sand.u32 %s100, 1
        %s218 = smul.addr %s217, 256
        %s219 = scalar_lea.vmem [#allocation7], %s218
        %s220 = smul.u32 2, %s27
        %s221 = smul.u32 2, %s27
        %s222 = smul.u32 2, %s27
        %v223 = vlaneseq
        %v224 = vshrl.u32 %v223, 7
        %v225 = vadd.s32 %v224, 8
        %v226 = vadd.s32 %v224, 16
        %v227 = vadd.s32 %v224, 24
        %v228 = vadd.s32 %v224, 32
        %v229 = vadd.s32 %v224, 40
        %v230 = vadd.s32 %v224, 48
        %v231 = vadd.s32 %v224, 56
        %v232 = vcvt.s32.f32 %v224
        %v233 = vcvt.s32.f32 %v225
        %v234 = vcvt.s32.f32 %v226
        %v235 = vcvt.s32.f32 %v227
        %v236 = vcvt.s32.f32 %v228
        %v237 = vcvt.s32.f32 %v229
        %v238 = vcvt.s32.f32 %v230
        %v239 = vcvt.s32.f32 %v231
        %v240 = vmul.f32 %v232, 0.5
        %v241 = vmul.f32 %v233, 0.5
        %v242 = vmul.f32 %v234, 0.5
        %v243 = vmul.f32 %v235, 0.5
        %v244 = vmul.f32 %v236, 0.5
        %v245 = vmul.f32 %v237, 0.5
        %v246 = vmul.f32 %v238, 0.5
        %v247 = vmul.f32 %v239, 0.5
        %v248 = vfloor.f32 %v240
        %v249 = vfloor.f32 %v241
        %v250 = vfloor.f32 %v242
        %v251 = vfloor.f32 %v243
        %v252 = vfloor.f32 %v244
        %v253 = vfloor.f32 %v245
        %v254 = vfloor.f32 %v246
        %v255 = vfloor.f32 %v247
        %v256 = vmul.f32 %v248, 2.0
        %v257 = vmul.f32 %v249, 2.0
        %v258 = vmul.f32 %v250, 2.0
        %v259 = vmul.f32 %v251, 2.0
        %v260 = vmul.f32 %v252, 2.0
        %v261 = vmul.f32 %v253, 2.0
        %v262 = vmul.f32 %v254, 2.0
        %v263 = vmul.f32 %v255, 2.0
        %v264 = vsub.f32 %v232, %v256
        %v265 = vsub.f32 %v233, %v257
        %v266 = vsub.f32 %v234, %v258
        %v267 = vsub.f32 %v235, %v259
        %v268 = vsub.f32 %v236, %v260
        %v269 = vsub.f32 %v237, %v261
        %v270 = vsub.f32 %v238, %v262
        %v271 = vsub.f32 %v239, %v263
        %v272 = vmul.f32 %v248, -0.28782314
        %v273 = vmul.f32 %v249, -0.28782314
        %v274 = vmul.f32 %v250, -0.28782314
        %v275 = vmul.f32 %v251, -0.28782314
        %v276 = vmul.f32 %v252, -0.28782314
        %v277 = vmul.f32 %v253, -0.28782314
        %v278 = vmul.f32 %v254, -0.28782314
        %v279 = vmul.f32 %v255, -0.28782314
        %v280 = vmul.f32 %v272, 1.442695
        %v281 = vpow.pop %v280
        %v282 = vmul.f32 %v273, 1.442695
        %v283 = vpow.pop %v282
        %v284 = vmul.f32 %v274, 1.442695
        %v285 = vpow.pop %v284
        %v286 = vmul.f32 %v275, 1.442695
        %v287 = vpow.pop %v286
        %v288 = vmul.f32 %v276, 1.442695
        %v289 = vpow.pop %v288
        %v290 = vmul.f32 %v277, 1.442695
        %v291 = vpow.pop %v290
        %v292 = vmul.f32 %v278, 1.442695
        %v293 = vpow.pop %v292
        %v294 = vmul.f32 %v279, 1.442695
        %v295 = vpow.pop %v294
        %v296 = vmul.f32 %v264, 1.5707964
        %v297 = vmul.f32 %v265, 1.5707964
        %v298 = vmul.f32 %v266, 1.5707964
        %v299 = vmul.f32 %v267, 1.5707964
        %v300 = vmul.f32 %v268, 1.5707964
        %v301 = vmul.f32 %v269, 1.5707964
        %v302 = vmul.f32 %v270, 1.5707964
        %v303 = vmul.f32 %v271, 1.5707964
        %v304 = vld [vmem:[%s185] sm:$0x3]
        %v305 = vld [vmem:[%s194] sm:$0x3]
        %v307 = vlaneseq
        %v308 = vshrl.u32 %v307, 7
        %v309 = vsub.s32 0, %v308
        %v310 = vrot.slane %v304, %v309
        %v311 = vlaneseq
        %v312 = vshrl.u32 %v311, 7
        %v313 = vsub.s32 1, %v312
        %v314 = vrot.slane %v304, %v313
        %v317 = vmul.f32 %v310, %v281
        %v318 = vmul.f32 %v314, %v281
        %v319 = vmul.f32 %v310, %v283
        %v320 = vmul.f32 %v314, %v283
        %v321 = vmul.f32 %v310, %v285
        %v322 = vmul.f32 %v314, %v285
        %v323 = vmul.f32 %v310, %v287
        %v324 = vmul.f32 %v314, %v287
        %v325 = vmul.f32 %v310, %v289
        %v326 = vmul.f32 %v314, %v289
        %v327 = vmul.f32 %v310, %v291
        %v328 = vmul.f32 %v314, %v291
        %v329 = vmul.f32 %v310, %v293
        %v330 = vmul.f32 %v314, %v293
        %v331 = vmul.f32 %v310, %v295
        %v332 = vmul.f32 %v314, %v295
        %v333 = vadd.f32 %v317, %v296
        %v334 = vadd.f32 %v318, %v296
        %v335 = vadd.f32 %v319, %v297
        %v336 = vadd.f32 %v320, %v297
        %v337 = vadd.f32 %v321, %v298
        %v338 = vadd.f32 %v322, %v298
        %v339 = vadd.f32 %v323, %v299
        %v340 = vadd.f32 %v324, %v299
        %v341 = vadd.f32 %v325, %v300
        %v342 = vadd.f32 %v326, %v300
        %v343 = vadd.f32 %v327, %v301
        %v344 = vadd.f32 %v328, %v301
        %v345 = vadd.f32 %v329, %v302
        %v346 = vadd.f32 %v330, %v302
        %v347 = vadd.f32 %v331, %v303
        %v348 = vadd.f32 %v332, %v303
        %v349 = vand.u32 2147483647, %v333
        %vm350 = vcmp.le.f32.partialorder %v349, 0.7853982
        %vm351 = vcmp.lt.s32.totalorder %v333, 0
        %v352 = vand.u32 %v333, 2139095040
        %v353 = vshrl.u32 %v352, 23
        %v354 = vsub.s32 %v353, 127
        %v355 = vand.u32 2147483647, %v333
        %v356 = vand.u32 %v355, 8388607
        %v357 = vor.u32 %v356, 8388608
        %v358 = vsub.s32 0, %v357
        %v359 = vadd.s32 %v354, 1
        %vm360 = vcmp.gt.s32.totalorder %v359, 0
        %v361 = vsel %vm360, %v359, 0
        %v362 = vshrl.u32 %v361, 5
        %v363 = vand.u32 %v361, 31
        %v364 = vsub.s32 32, %v363
        %v365 = vshrl.u32 683565275, %v364
        %v366 = vshll.u32 683565275, %v363
        %v367 = vshrl.u32 2475754826, %v364
        %v368 = vor.u32 %v366, %v367
        %v369 = vshll.u32 2475754826, %v363
        %v370 = vshrl.u32 2131351028, %v364
        %v371 = vor.u32 %v369, %v370
        %v372 = vshll.u32 2131351028, %v363
        %v373 = vshrl.u32 2102212464, %v364
        %v374 = vor.u32 %v372, %v373
        %v375 = vshll.u32 2102212464, %v363
        %v376 = vshrl.u32 920167782, %v364
        %v377 = vor.u32 %v375, %v376
        %v378 = vshll.u32 920167782, %v363
        %v379 = vshrl.u32 1326507024, %v364
        %v380 = vor.u32 %v378, %v379
        %vm381 = vcmp.lt.s32.totalorder %v362, 1
        %vm382 = vcmp.lt.s32.totalorder %v362, 2
        %vm383 = vcmp.lt.s32.totalorder %v362, 3
        %vm384 = vcmp.lt.s32.totalorder %v362, 4
        %v385 = vsel %vm381, %v365, %v368
        %v386 = vsel %vm384, %v374, 2102212464
        %v387 = vsel %vm383, %v371, %v386
        %v388 = vsel %vm382, %v385, %v387
        %v389 = vsel %vm381, %v368, %v371
        %v390 = vsel %vm384, %v377, 920167782
        %v391 = vsel %vm383, %v374, %v390
        %v392 = vsel %vm382, %v389, %v391
        %v393 = vsel %vm381, %v371, %v374
        %v394 = vsel %vm384, %v380, 1326507024
        %v395 = vsel %vm383, %v377, %v394
        %v396 = vsel %vm382, %v393, %v395
        %v397 = vshll.u32 %v357, 8
        %v398 = vmul.u32.u64.compose %v397, %v396
        %v399 = vextract.low.u32 %v398
        %v400 = vextract.high.u32 %v398
        %v401 = vmul.u32.u64.compose %v397, %v392
        %v402 = vextract.low.u32 %v401
        %v403 = vextract.high.u32 %v401
        %v404 = vmul.u32 %v397, %v388
        %v405 = vadd.s32 %v400, %v402
        %vm406 = vc.u32 %v400, %v402
        %v407 = vadd.s32 %v403, 1
        %v408 = vsel %vm406, %v407, %v403
        %v409 = vadd.s32 %v404, %v408
        %v410 = vadd.s32 %v409, 536870912
        %v411 = vshrl.u32 %v410, 30
        %v412 = vshll.u32 %v411, 30
        %v413 = vsub.s32 %v409, %v412
        %vm414 = vcmp.lt.s32.totalorder %v413, 0
        %v415 = vsub.s32 0, %v413
        %v416 = vsel %vm414, %v415, %v413
        %v417 = vclz %v416
        %v418 = vsub.s32 %v417, 2
        %vm419 = vcmp.gt.s32.totalorder 0, %v418
        %v420 = vsel %vm419, 0, %v418
        %v421 = vsub.s32 32, %v420
        %v422 = vshll.u32 %v413, %v420
        %v423 = vshrl.u32 %v405, %v421
        %v424 = vor.u32 %v422, %v423
        %v425 = vsub.s32 4294967266, %v420
        %v426 = vadd.s32 %v425, 127
        %v427 = vshll.u32 %v426, 23
        %v428 = vor.u32 4788187, %v427
        %v429 = vand.u32 2147483647, %v428
        %v431 = vcvt.s32.f32 %v424
        %v432 = vmul.f32 %v431, %v429
        %v433 = vxor.u32 %v432, 2147483648
        %v434 = vsel %vm351, %v433, %v432
        %v435 = vsub.s32 4, %v411
        %v436 = vsel %vm351, %v435, %v411
        %v437 = vsel %vm350, %v333, %v434
        %v438 = vsel %vm350, 0, %v436
        %v439 = vcosq.f32.pop %v437
        %v440 = vsinq.f32.pop %v437
        %vm441 = vweird.f32 %v333
        %v442 = vadd.s32 %v438, 3
        %v443 = vand.u32 %v442, 3
        %vm444 = vcmp.lt.s32.totalorder %v443, 2
        %vm445 = vcmp.eq.s32.totalorder %v443, 0
        %v446 = vxor.u32 %v440, 2147483648
        %v447 = vsel %vm445, %v439, %v446
        %vm448 = vcmp.eq.s32.totalorder %v443, 2
        %v449 = vxor.u32 %v439, 2147483648
        %v450 = vsel %vm448, %v449, %v440
        %v451 = vsel %vm444, %v447, %v450
        %v452 = vsel %vm441, nan, %v451
        %v453 = vand.u32 2147483647, %v334
        %vm454 = vcmp.le.f32.partialorder %v453, 0.7853982
        %vm455 = vcmp.lt.s32.totalorder %v334, 0
        %v456 = vand.u32 %v334, 2139095040
        %v457 = vshrl.u32 %v456, 23
        %v458 = vsub.s32 %v457, 127
        %v459 = vand.u32 2147483647, %v334
        %v460 = vand.u32 %v459, 8388607
        %v461 = vor.u32 %v460, 8388608
        %v462 = vsub.s32 0, %v461
        %v463 = vadd.s32 %v458, 1
        %vm464 = vcmp.gt.s32.totalorder %v463, 0
        %v465 = vsel %vm464, %v463, 0
        %v466 = vshrl.u32 %v465, 5
        %v467 = vand.u32 %v465, 31
        %v468 = vsub.s32 32, %v467
        %v469 = vshrl.u32 683565275, %v468
        %v470 = vshll.u32 683565275, %v467
        %v471 = vshrl.u32 2475754826, %v468
        %v472 = vor.u32 %v470, %v471
        %v473 = vshll.u32 2475754826, %v467
        %v474 = vshrl.u32 2131351028, %v468
        %v475 = vor.u32 %v473, %v474
        %v476 = vshll.u32 2131351028, %v467
        %v477 = vshrl.u32 2102212464, %v468
        %v478 = vor.u32 %v476, %v477
        %v479 = vshll.u32 2102212464, %v467
        %v480 = vshrl.u32 920167782, %v468
        %v481 = vor.u32 %v479, %v480
        %v482 = vshll.u32 920167782, %v467
        %v483 = vshrl.u32 1326507024, %v468
        %v484 = vor.u32 %v482, %v483
        %vm485 = vcmp.lt.s32.totalorder %v466, 1
        %vm486 = vcmp.lt.s32.totalorder %v466, 2
        %vm487 = vcmp.lt.s32.totalorder %v466, 3
        %vm488 = vcmp.lt.s32.totalorder %v466, 4
        %v489 = vsel %vm485, %v469, %v472
        %v490 = vsel %vm488, %v478, 2102212464
        %v491 = vsel %vm487, %v475, %v490
        %v492 = vsel %vm486, %v489, %v491
        %v493 = vsel %vm485, %v472, %v475
        %v494 = vsel %vm488, %v481, 920167782
        %v495 = vsel %vm487, %v478, %v494
        %v496 = vsel %vm486, %v493, %v495
        %v497 = vsel %vm485, %v475, %v478
        %v498 = vsel %vm488, %v484, 1326507024
        %v499 = vsel %vm487, %v481, %v498
        %v500 = vsel %vm486, %v497, %v499
        %v501 = vshll.u32 %v461, 8
        %v502 = vmul.u32.u64.compose %v501, %v500
        %v503 = vextract.low.u32 %v502
        %v504 = vextract.high.u32 %v502
        %v505 = vmul.u32.u64.compose %v501, %v496
        %v506 = vextract.low.u32 %v505
        %v507 = vextract.high.u32 %v505
        %v508 = vmul.u32 %v501, %v492
        %v509 = vadd.s32 %v504, %v506
        %vm510 = vc.u32 %v504, %v506
        %v511 = vadd.s32 %v507, 1
        %v512 = vsel %vm510, %v511, %v507
        %v513 = vadd.s32 %v508, %v512
        %v514 = vadd.s32 %v513, 536870912
        %v515 = vshrl.u32 %v514, 30
        %v516 = vshll.u32 %v515, 30
        %v517 = vsub.s32 %v513, %v516
        %vm518 = vcmp.lt.s32.totalorder %v517, 0
        %v519 = vsub.s32 0, %v517
        %v520 = vsel %vm518, %v519, %v517
        %v521 = vclz %v520
        %v522 = vsub.s32 %v521, 2
        %vm523 = vcmp.gt.s32.totalorder 0, %v522
        %v524 = vsel %vm523, 0, %v522
        %v525 = vsub.s32 32, %v524
        %v526 = vshll.u32 %v517, %v524
        %v527 = vshrl.u32 %v509, %v525
        %v528 = vor.u32 %v526, %v527
        %v529 = vsub.s32 4294967266, %v524
        %v530 = vadd.s32 %v529, 127
        %v531 = vshll.u32 %v530, 23
        %v532 = vor.u32 4788187, %v531
        %v533 = vand.u32 2147483647, %v532
        %v535 = vcvt.s32.f32 %v528
        %v536 = vmul.f32 %v535, %v533
        %v537 = vxor.u32 %v536, 2147483648
        %v538 = vsel %vm455, %v537, %v536
        %v539 = vsub.s32 4, %v515
        %v540 = vsel %vm455, %v539, %v515
        %v541 = vsel %vm454, %v334, %v538
        %v542 = vsel %vm454, 0, %v540
        %v543 = vcosq.f32.pop %v541
        %v544 = vsinq.f32.pop %v541
        %vm545 = vweird.f32 %v334
        %v546 = vadd.s32 %v542, 3
        %v547 = vand.u32 %v546, 3
        %vm548 = vcmp.lt.s32.totalorder %v547, 2
        %vm549 = vcmp.eq.s32.totalorder %v547, 0
        %v550 = vxor.u32 %v544, 2147483648
        %v551 = vsel %vm549, %v543, %v550
        %vm552 = vcmp.eq.s32.totalorder %v547, 2
        %v553 = vxor.u32 %v543, 2147483648
        %v554 = vsel %vm552, %v553, %v544
        %v555 = vsel %vm548, %v551, %v554
        %v556 = vsel %vm545, nan, %v555
        %v557 = vand.u32 2147483647, %v335
        %vm558 = vcmp.le.f32.partialorder %v557, 0.7853982
        %vm559 = vcmp.lt.s32.totalorder %v335, 0
        %v560 = vand.u32 %v335, 2139095040
        %v561 = vshrl.u32 %v560, 23
        %v562 = vsub.s32 %v561, 127
        %v563 = vand.u32 2147483647, %v335
        %v564 = vand.u32 %v563, 8388607
        %v565 = vor.u32 %v564, 8388608
        %v566 = vsub.s32 0, %v565
        %v567 = vadd.s32 %v562, 1
        %vm568 = vcmp.gt.s32.totalorder %v567, 0
        %v569 = vsel %vm568, %v567, 0
        %v570 = vshrl.u32 %v569, 5
        %v571 = vand.u32 %v569, 31
        %v572 = vsub.s32 32, %v571
        %v573 = vshrl.u32 683565275, %v572
        %v574 = vshll.u32 683565275, %v571
        %v575 = vshrl.u32 2475754826, %v572
        %v576 = vor.u32 %v574, %v575
        %v577 = vshll.u32 2475754826, %v571
        %v578 = vshrl.u32 2131351028, %v572
        %v579 = vor.u32 %v577, %v578
        %v580 = vshll.u32 2131351028, %v571
        %v581 = vshrl.u32 2102212464, %v572
        %v582 = vor.u32 %v580, %v581
        %v583 = vshll.u32 2102212464, %v571
        %v584 = vshrl.u32 920167782, %v572
        %v585 = vor.u32 %v583, %v584
        %v586 = vshll.u32 920167782, %v571
        %v587 = vshrl.u32 1326507024, %v572
        %v588 = vor.u32 %v586, %v587
        %vm589 = vcmp.lt.s32.totalorder %v570, 1
        %vm590 = vcmp.lt.s32.totalorder %v570, 2
        %vm591 = vcmp.lt.s32.totalorder %v570, 3
        %vm592 = vcmp.lt.s32.totalorder %v570, 4
        %v593 = vsel %vm589, %v573, %v576
        %v594 = vsel %vm592, %v582, 2102212464
        %v595 = vsel %vm591, %v579, %v594
        %v596 = vsel %vm590, %v593, %v595
        %v597 = vsel %vm589, %v576, %v579
        %v598 = vsel %vm592, %v585, 920167782
        %v599 = vsel %vm591, %v582, %v598
        %v600 = vsel %vm590, %v597, %v599
        %v601 = vsel %vm589, %v579, %v582
        %v602 = vsel %vm592, %v588, 1326507024
        %v603 = vsel %vm591, %v585, %v602
        %v604 = vsel %vm590, %v601, %v603
        %v605 = vshll.u32 %v565, 8
        %v606 = vmul.u32.u64.compose %v605, %v604
        %v607 = vextract.low.u32 %v606
        %v608 = vextract.high.u32 %v606
        %v609 = vmul.u32.u64.compose %v605, %v600
        %v610 = vextract.low.u32 %v609
        %v611 = vextract.high.u32 %v609
        %v612 = vmul.u32 %v605, %v596
        %v613 = vadd.s32 %v608, %v610
        %vm614 = vc.u32 %v608, %v610
        %v615 = vadd.s32 %v611, 1
        %v616 = vsel %vm614, %v615, %v611
        %v617 = vadd.s32 %v612, %v616
        %v618 = vadd.s32 %v617, 536870912
        %v619 = vshrl.u32 %v618, 30
        %v620 = vshll.u32 %v619, 30
        %v621 = vsub.s32 %v617, %v620
        %vm622 = vcmp.lt.s32.totalorder %v621, 0
        %v623 = vsub.s32 0, %v621
        %v624 = vsel %vm622, %v623, %v621
        %v625 = vclz %v624
        %v626 = vsub.s32 %v625, 2
        %vm627 = vcmp.gt.s32.totalorder 0, %v626
        %v628 = vsel %vm627, 0, %v626
        %v629 = vsub.s32 32, %v628
        %v630 = vshll.u32 %v621, %v628
        %v631 = vshrl.u32 %v613, %v629
        %v632 = vor.u32 %v630, %v631
        %v633 = vsub.s32 4294967266, %v628
        %v634 = vadd.s32 %v633, 127
        %v635 = vshll.u32 %v634, 23
        %v636 = vor.u32 4788187, %v635
        %v637 = vand.u32 2147483647, %v636
        %v639 = vcvt.s32.f32 %v632
        %v640 = vmul.f32 %v639, %v637
        %v641 = vxor.u32 %v640, 2147483648
        %v642 = vsel %vm559, %v641, %v640
        %v643 = vsub.s32 4, %v619
        %v644 = vsel %vm559, %v643, %v619
        %v645 = vsel %vm558, %v335, %v642
        %v646 = vsel %vm558, 0, %v644
        %v647 = vcosq.f32.pop %v645
        %v648 = vsinq.f32.pop %v645
        %vm649 = vweird.f32 %v335
        %v650 = vadd.s32 %v646, 3
        %v651 = vand.u32 %v650, 3
        %vm652 = vcmp.lt.s32.totalorder %v651, 2
        %vm653 = vcmp.eq.s32.totalorder %v651, 0
        %v654 = vxor.u32 %v648, 2147483648
        %v655 = vsel %vm653, %v647, %v654
        %vm656 = vcmp.eq.s32.totalorder %v651, 2
        %v657 = vxor.u32 %v647, 2147483648
        %v658 = vsel %vm656, %v657, %v648
        %v659 = vsel %vm652, %v655, %v658
        %v660 = vsel %vm649, nan, %v659
        %v661 = vand.u32 2147483647, %v336
        %vm662 = vcmp.le.f32.partialorder %v661, 0.7853982
        %vm663 = vcmp.lt.s32.totalorder %v336, 0
        %v664 = vand.u32 %v336, 2139095040
        %v665 = vshrl.u32 %v664, 23
        %v666 = vsub.s32 %v665, 127
        %v667 = vand.u32 2147483647, %v336
        %v668 = vand.u32 %v667, 8388607
        %v669 = vor.u32 %v668, 8388608
        %v670 = vsub.s32 0, %v669
        %v671 = vadd.s32 %v666, 1
        %vm672 = vcmp.gt.s32.totalorder %v671, 0
        %v673 = vsel %vm672, %v671, 0
        %v674 = vshrl.u32 %v673, 5
        %v675 = vand.u32 %v673, 31
        %v676 = vsub.s32 32, %v675
        %v677 = vshrl.u32 683565275, %v676
        %v678 = vshll.u32 683565275, %v675
        %v679 = vshrl.u32 2475754826, %v676
        %v680 = vor.u32 %v678, %v679
        %v681 = vshll.u32 2475754826, %v675
        %v682 = vshrl.u32 2131351028, %v676
        %v683 = vor.u32 %v681, %v682
        %v684 = vshll.u32 2131351028, %v675
        %v685 = vshrl.u32 2102212464, %v676
        %v686 = vor.u32 %v684, %v685
        %v687 = vshll.u32 2102212464, %v675
        %v688 = vshrl.u32 920167782, %v676
        %v689 = vor.u32 %v687, %v688
        %v690 = vshll.u32 920167782, %v675
        %v691 = vshrl.u32 1326507024, %v676
        %v692 = vor.u32 %v690, %v691
        %vm693 = vcmp.lt.s32.totalorder %v674, 1
        %vm694 = vcmp.lt.s32.totalorder %v674, 2
        %vm695 = vcmp.lt.s32.totalorder %v674, 3
        %vm696 = vcmp.lt.s32.totalorder %v674, 4
        %v697 = vsel %vm693, %v677, %v680
        %v698 = vsel %vm696, %v686, 2102212464
        %v699 = vsel %vm695, %v683, %v698
        %v700 = vsel %vm694, %v697, %v699
        %v701 = vsel %vm693, %v680, %v683
        %v702 = vsel %vm696, %v689, 920167782
        %v703 = vsel %vm695, %v686, %v702
        %v704 = vsel %vm694, %v701, %v703
        %v705 = vsel %vm693, %v683, %v686
        %v706 = vsel %vm696, %v692, 1326507024
        %v707 = vsel %vm695, %v689, %v706
        %v708 = vsel %vm694, %v705, %v707
        %v709 = vshll.u32 %v669, 8
        %v710 = vmul.u32.u64.compose %v709, %v708
        %v711 = vextract.low.u32 %v710
        %v712 = vextract.high.u32 %v710
        %v713 = vmul.u32.u64.compose %v709, %v704
        %v714 = vextract.low.u32 %v713
        %v715 = vextract.high.u32 %v713
        %v716 = vmul.u32 %v709, %v700
        %v717 = vadd.s32 %v712, %v714
        %vm718 = vc.u32 %v712, %v714
        %v719 = vadd.s32 %v715, 1
        %v720 = vsel %vm718, %v719, %v715
        %v721 = vadd.s32 %v716, %v720
        %v722 = vadd.s32 %v721, 536870912
        %v723 = vshrl.u32 %v722, 30
        %v724 = vshll.u32 %v723, 30
        %v725 = vsub.s32 %v721, %v724
        %vm726 = vcmp.lt.s32.totalorder %v725, 0
        %v727 = vsub.s32 0, %v725
        %v728 = vsel %vm726, %v727, %v725
        %v729 = vclz %v728
        %v730 = vsub.s32 %v729, 2
        %vm731 = vcmp.gt.s32.totalorder 0, %v730
        %v732 = vsel %vm731, 0, %v730
        %v733 = vsub.s32 32, %v732
        %v734 = vshll.u32 %v725, %v732
        %v735 = vshrl.u32 %v717, %v733
        %v736 = vor.u32 %v734, %v735
        %v737 = vsub.s32 4294967266, %v732
        %v738 = vadd.s32 %v737, 127
        %v739 = vshll.u32 %v738, 23
        %v740 = vor.u32 4788187, %v739
        %v741 = vand.u32 2147483647, %v740
        %v743 = vcvt.s32.f32 %v736
        %v744 = vmul.f32 %v743, %v741
        %v745 = vxor.u32 %v744, 2147483648
        %v746 = vsel %vm663, %v745, %v744
        %v747 = vsub.s32 4, %v723
        %v748 = vsel %vm663, %v747, %v723
        %v749 = vsel %vm662, %v336, %v746
        %v750 = vsel %vm662, 0, %v748
        %v751 = vcosq.f32.pop %v749
        %v752 = vsinq.f32.pop %v749
        %vm753 = vweird.f32 %v336
        %v754 = vadd.s32 %v750, 3
        %v755 = vand.u32 %v754, 3
        %vm756 = vcmp.lt.s32.totalorder %v755, 2
        %vm757 = vcmp.eq.s32.totalorder %v755, 0
        %v758 = vxor.u32 %v752, 2147483648
        %v759 = vsel %vm757, %v751, %v758
        %vm760 = vcmp.eq.s32.totalorder %v755, 2
        %v761 = vxor.u32 %v751, 2147483648
        %v762 = vsel %vm760, %v761, %v752
        %v763 = vsel %vm756, %v759, %v762
        %v764 = vsel %vm753, nan, %v763
        %v765 = vand.u32 2147483647, %v337
        %vm766 = vcmp.le.f32.partialorder %v765, 0.7853982
        %vm767 = vcmp.lt.s32.totalorder %v337, 0
        %v768 = vand.u32 %v337, 2139095040
        %v769 = vshrl.u32 %v768, 23
        %v770 = vsub.s32 %v769, 127
        %v771 = vand.u32 2147483647, %v337
        %v772 = vand.u32 %v771, 8388607
        %v773 = vor.u32 %v772, 8388608
        %v774 = vsub.s32 0, %v773
        %v775 = vadd.s32 %v770, 1
        %vm776 = vcmp.gt.s32.totalorder %v775, 0
        %v777 = vsel %vm776, %v775, 0
        %v778 = vshrl.u32 %v777, 5
        %v779 = vand.u32 %v777, 31
        %v780 = vsub.s32 32, %v779
        %v781 = vshrl.u32 683565275, %v780
        %v782 = vshll.u32 683565275, %v779
        %v783 = vshrl.u32 2475754826, %v780
        %v784 = vor.u32 %v782, %v783
        %v785 = vshll.u32 2475754826, %v779
        %v786 = vshrl.u32 2131351028, %v780
        %v787 = vor.u32 %v785, %v786
        %v788 = vshll.u32 2131351028, %v779
        %v789 = vshrl.u32 2102212464, %v780
        %v790 = vor.u32 %v788, %v789
        %v791 = vshll.u32 2102212464, %v779
        %v792 = vshrl.u32 920167782, %v780
        %v793 = vor.u32 %v791, %v792
        %v794 = vshll.u32 920167782, %v779
        %v795 = vshrl.u32 1326507024, %v780
        %v796 = vor.u32 %v794, %v795
        %vm797 = vcmp.lt.s32.totalorder %v778, 1
        %vm798 = vcmp.lt.s32.totalorder %v778, 2
        %vm799 = vcmp.lt.s32.totalorder %v778, 3
        %vm800 = vcmp.lt.s32.totalorder %v778, 4
        %v801 = vsel %vm797, %v781, %v784
        %v802 = vsel %vm800, %v790, 2102212464
        %v803 = vsel %vm799, %v787, %v802
        %v804 = vsel %vm798, %v801, %v803
        %v805 = vsel %vm797, %v784, %v787
        %v806 = vsel %vm800, %v793, 920167782
        %v807 = vsel %vm799, %v790, %v806
        %v808 = vsel %vm798, %v805, %v807
        %v809 = vsel %vm797, %v787, %v790
        %v810 = vsel %vm800, %v796, 1326507024
        %v811 = vsel %vm799, %v793, %v810
        %v812 = vsel %vm798, %v809, %v811
        %v813 = vshll.u32 %v773, 8
        %v814 = vmul.u32.u64.compose %v813, %v812
        %v815 = vextract.low.u32 %v814
        %v816 = vextract.high.u32 %v814
        %v817 = vmul.u32.u64.compose %v813, %v808
        %v818 = vextract.low.u32 %v817
        %v819 = vextract.high.u32 %v817
        %v820 = vmul.u32 %v813, %v804
        %v821 = vadd.s32 %v816, %v818
        %vm822 = vc.u32 %v816, %v818
        %v823 = vadd.s32 %v819, 1
        %v824 = vsel %vm822, %v823, %v819
        %v825 = vadd.s32 %v820, %v824
        %v826 = vadd.s32 %v825, 536870912
        %v827 = vshrl.u32 %v826, 30
        %v828 = vshll.u32 %v827, 30
        %v829 = vsub.s32 %v825, %v828
        %vm830 = vcmp.lt.s32.totalorder %v829, 0
        %v831 = vsub.s32 0, %v829
        %v832 = vsel %vm830, %v831, %v829
        %v833 = vclz %v832
        %v834 = vsub.s32 %v833, 2
        %vm835 = vcmp.gt.s32.totalorder 0, %v834
        %v836 = vsel %vm835, 0, %v834
        %v837 = vsub.s32 32, %v836
        %v838 = vshll.u32 %v829, %v836
        %v839 = vshrl.u32 %v821, %v837
        %v840 = vor.u32 %v838, %v839
        %v841 = vsub.s32 4294967266, %v836
        %v842 = vadd.s32 %v841, 127
        %v843 = vshll.u32 %v842, 23
        %v844 = vor.u32 4788187, %v843
        %v845 = vand.u32 2147483647, %v844
        %v847 = vcvt.s32.f32 %v840
        %v848 = vmul.f32 %v847, %v845
        %v849 = vxor.u32 %v848, 2147483648
        %v850 = vsel %vm767, %v849, %v848
        %v851 = vsub.s32 4, %v827
        %v852 = vsel %vm767, %v851, %v827
        %v853 = vsel %vm766, %v337, %v850
        %v854 = vsel %vm766, 0, %v852
        %v855 = vcosq.f32.pop %v853
        %v856 = vsinq.f32.pop %v853
        %vm857 = vweird.f32 %v337
        %v858 = vadd.s32 %v854, 3
        %v859 = vand.u32 %v858, 3
        %vm860 = vcmp.lt.s32.totalorder %v859, 2
        %vm861 = vcmp.eq.s32.totalorder %v859, 0
        %v862 = vxor.u32 %v856, 2147483648
        %v863 = vsel %vm861, %v855, %v862
        %vm864 = vcmp.eq.s32.totalorder %v859, 2
        %v865 = vxor.u32 %v855, 2147483648
        %v866 = vsel %vm864, %v865, %v856
        %v867 = vsel %vm860, %v863, %v866
        %v868 = vsel %vm857, nan, %v867
        %v869 = vand.u32 2147483647, %v338
        %vm870 = vcmp.le.f32.partialorder %v869, 0.7853982
        %vm871 = vcmp.lt.s32.totalorder %v338, 0
        %v872 = vand.u32 %v338, 2139095040
        %v873 = vshrl.u32 %v872, 23
        %v874 = vsub.s32 %v873, 127
        %v875 = vand.u32 2147483647, %v338
        %v876 = vand.u32 %v875, 8388607
        %v877 = vor.u32 %v876, 8388608
        %v878 = vsub.s32 0, %v877
        %v879 = vadd.s32 %v874, 1
        %vm880 = vcmp.gt.s32.totalorder %v879, 0
        %v881 = vsel %vm880, %v879, 0
        %v882 = vshrl.u32 %v881, 5
        %v883 = vand.u32 %v881, 31
        %v884 = vsub.s32 32, %v883
        %v885 = vshrl.u32 683565275, %v884
        %v886 = vshll.u32 683565275, %v883
        %v887 = vshrl.u32 2475754826, %v884
        %v888 = vor.u32 %v886, %v887
        %v889 = vshll.u32 2475754826, %v883
        %v890 = vshrl.u32 2131351028, %v884
        %v891 = vor.u32 %v889, %v890
        %v892 = vshll.u32 2131351028, %v883
        %v893 = vshrl.u32 2102212464, %v884
        %v894 = vor.u32 %v892, %v893
        %v895 = vshll.u32 2102212464, %v883
        %v896 = vshrl.u32 920167782, %v884
        %v897 = vor.u32 %v895, %v896
        %v898 = vshll.u32 920167782, %v883
        %v899 = vshrl.u32 1326507024, %v884
        %v900 = vor.u32 %v898, %v899
        %vm901 = vcmp.lt.s32.totalorder %v882, 1
        %vm902 = vcmp.lt.s32.totalorder %v882, 2
        %vm903 = vcmp.lt.s32.totalorder %v882, 3
        %vm904 = vcmp.lt.s32.totalorder %v882, 4
        %v905 = vsel %vm901, %v885, %v888
        %v906 = vsel %vm904, %v894, 2102212464
        %v907 = vsel %vm903, %v891, %v906
        %v908 = vsel %vm902, %v905, %v907
        %v909 = vsel %vm901, %v888, %v891
        %v910 = vsel %vm904, %v897, 920167782
        %v911 = vsel %vm903, %v894, %v910
        %v912 = vsel %vm902, %v909, %v911
        %v913 = vsel %vm901, %v891, %v894
        %v914 = vsel %vm904, %v900, 1326507024
        %v915 = vsel %vm903, %v897, %v914
        %v916 = vsel %vm902, %v913, %v915
        %v917 = vshll.u32 %v877, 8
        %v918 = vmul.u32.u64.compose %v917, %v916
        %v919 = vextract.low.u32 %v918
        %v920 = vextract.high.u32 %v918
        %v921 = vmul.u32.u64.compose %v917, %v912
        %v922 = vextract.low.u32 %v921
        %v923 = vextract.high.u32 %v921
        %v924 = vmul.u32 %v917, %v908
        %v925 = vadd.s32 %v920, %v922
        %vm926 = vc.u32 %v920, %v922
        %v927 = vadd.s32 %v923, 1
        %v928 = vsel %vm926, %v927, %v923
        %v929 = vadd.s32 %v924, %v928
        %v930 = vadd.s32 %v929, 536870912
        %v931 = vshrl.u32 %v930, 30
        %v932 = vshll.u32 %v931, 30
        %v933 = vsub.s32 %v929, %v932
        %vm934 = vcmp.lt.s32.totalorder %v933, 0
        %v935 = vsub.s32 0, %v933
        %v936 = vsel %vm934, %v935, %v933
        %v937 = vclz %v936
        %v938 = vsub.s32 %v937, 2
        %vm939 = vcmp.gt.s32.totalorder 0, %v938
        %v940 = vsel %vm939, 0, %v938
        %v941 = vsub.s32 32, %v940
        %v942 = vshll.u32 %v933, %v940
        %v943 = vshrl.u32 %v925, %v941
        %v944 = vor.u32 %v942, %v943
        %v945 = vsub.s32 4294967266, %v940
        %v946 = vadd.s32 %v945, 127
        %v947 = vshll.u32 %v946, 23
        %v948 = vor.u32 4788187, %v947
        %v949 = vand.u32 2147483647, %v948
        %v951 = vcvt.s32.f32 %v944
        %v952 = vmul.f32 %v951, %v949
        %v953 = vxor.u32 %v952, 2147483648
        %v954 = vsel %vm871, %v953, %v952
        %v955 = vsub.s32 4, %v931
        %v956 = vsel %vm871, %v955, %v931
        %v957 = vsel %vm870, %v338, %v954
        %v958 = vsel %vm870, 0, %v956
        %v959 = vcosq.f32.pop %v957
        %v960 = vsinq.f32.pop %v957
        %vm961 = vweird.f32 %v338
        %v962 = vadd.s32 %v958, 3
        %v963 = vand.u32 %v962, 3
        %vm964 = vcmp.lt.s32.totalorder %v963, 2
        %vm965 = vcmp.eq.s32.totalorder %v963, 0
        %v966 = vxor.u32 %v960, 2147483648
        %v967 = vsel %vm965, %v959, %v966
        %vm968 = vcmp.eq.s32.totalorder %v963, 2
        %v969 = vxor.u32 %v959, 2147483648
        %v970 = vsel %vm968, %v969, %v960
        %v971 = vsel %vm964, %v967, %v970
        %v972 = vsel %vm961, nan, %v971
        %v973 = vand.u32 2147483647, %v339
        %vm974 = vcmp.le.f32.partialorder %v973, 0.7853982
        %vm975 = vcmp.lt.s32.totalorder %v339, 0
        %v976 = vand.u32 %v339, 2139095040
        %v977 = vshrl.u32 %v976, 23
        %v978 = vsub.s32 %v977, 127
        %v979 = vand.u32 2147483647, %v339
        %v980 = vand.u32 %v979, 8388607
        %v981 = vor.u32 %v980, 8388608
        %v982 = vsub.s32 0, %v981
        %v983 = vadd.s32 %v978, 1
        %vm984 = vcmp.gt.s32.totalorder %v983, 0
        %v985 = vsel %vm984, %v983, 0
        %v986 = vshrl.u32 %v985, 5
        %v987 = vand.u32 %v985, 31
        %v988 = vsub.s32 32, %v987
        %v989 = vshrl.u32 683565275, %v988
        %v990 = vshll.u32 683565275, %v987
        %v991 = vshrl.u32 2475754826, %v988
        %v992 = vor.u32 %v990, %v991
        %v993 = vshll.u32 2475754826, %v987
        %v994 = vshrl.u32 2131351028, %v988
        %v995 = vor.u32 %v993, %v994
        %v996 = vshll.u32 2131351028, %v987
        %v997 = vshrl.u32 2102212464, %v988
        %v998 = vor.u32 %v996, %v997
        %v999 = vshll.u32 2102212464, %v987
        %v1000 = vshrl.u32 920167782, %v988
        %v1001 = vor.u32 %v999, %v1000
        %v1002 = vshll.u32 920167782, %v987
        %v1003 = vshrl.u32 1326507024, %v988
        %v1004 = vor.u32 %v1002, %v1003
        %vm1005 = vcmp.lt.s32.totalorder %v986, 1
        %vm1006 = vcmp.lt.s32.totalorder %v986, 2
        %vm1007 = vcmp.lt.s32.totalorder %v986, 3
        %vm1008 = vcmp.lt.s32.totalorder %v986, 4
        %v1009 = vsel %vm1005, %v989, %v992
        %v1010 = vsel %vm1008, %v998, 2102212464
        %v1011 = vsel %vm1007, %v995, %v1010
        %v1012 = vsel %vm1006, %v1009, %v1011
        %v1013 = vsel %vm1005, %v992, %v995
        %v1014 = vsel %vm1008, %v1001, 920167782
        %v1015 = vsel %vm1007, %v998, %v1014
        %v1016 = vsel %vm1006, %v1013, %v1015
        %v1017 = vsel %vm1005, %v995, %v998
        %v1018 = vsel %vm1008, %v1004, 1326507024
        %v1019 = vsel %vm1007, %v1001, %v1018
        %v1020 = vsel %vm1006, %v1017, %v1019
        %v1021 = vshll.u32 %v981, 8
        %v1022 = vmul.u32.u64.compose %v1021, %v1020
        %v1023 = vextract.low.u32 %v1022
        %v1024 = vextract.high.u32 %v1022
        %v1025 = vmul.u32.u64.compose %v1021, %v1016
        %v1026 = vextract.low.u32 %v1025
        %v1027 = vextract.high.u32 %v1025
        %v1028 = vmul.u32 %v1021, %v1012
        %v1029 = vadd.s32 %v1024, %v1026
        %vm1030 = vc.u32 %v1024, %v1026
        %v1031 = vadd.s32 %v1027, 1
        %v1032 = vsel %vm1030, %v1031, %v1027
        %v1033 = vadd.s32 %v1028, %v1032
        %v1034 = vadd.s32 %v1033, 536870912
        %v1035 = vshrl.u32 %v1034, 30
        %v1036 = vshll.u32 %v1035, 30
        %v1037 = vsub.s32 %v1033, %v1036
        %vm1038 = vcmp.lt.s32.totalorder %v1037, 0
        %v1039 = vsub.s32 0, %v1037
        %v1040 = vsel %vm1038, %v1039, %v1037
        %v1041 = vclz %v1040
        %v1042 = vsub.s32 %v1041, 2
        %vm1043 = vcmp.gt.s32.totalorder 0, %v1042
        %v1044 = vsel %vm1043, 0, %v1042
        %v1045 = vsub.s32 32, %v1044
        %v1046 = vshll.u32 %v1037, %v1044
        %v1047 = vshrl.u32 %v1029, %v1045
        %v1048 = vor.u32 %v1046, %v1047
        %v1049 = vsub.s32 4294967266, %v1044
        %v1050 = vadd.s32 %v1049, 127
        %v1051 = vshll.u32 %v1050, 23
        %v1052 = vor.u32 4788187, %v1051
        %v1053 = vand.u32 2147483647, %v1052
        %v1055 = vcvt.s32.f32 %v1048
        %v1056 = vmul.f32 %v1055, %v1053
        %v1057 = vxor.u32 %v1056, 2147483648
        %v1058 = vsel %vm975, %v1057, %v1056
        %v1059 = vsub.s32 4, %v1035
        %v1060 = vsel %vm975, %v1059, %v1035
        %v1061 = vsel %vm974, %v339, %v1058
        %v1062 = vsel %vm974, 0, %v1060
        %v1063 = vcosq.f32.pop %v1061
        %v1064 = vsinq.f32.pop %v1061
        %vm1065 = vweird.f32 %v339
        %v1066 = vadd.s32 %v1062, 3
        %v1067 = vand.u32 %v1066, 3
        %vm1068 = vcmp.lt.s32.totalorder %v1067, 2
        %vm1069 = vcmp.eq.s32.totalorder %v1067, 0
        %v1070 = vxor.u32 %v1064, 2147483648
        %v1071 = vsel %vm1069, %v1063, %v1070
        %vm1072 = vcmp.eq.s32.totalorder %v1067, 2
        %v1073 = vxor.u32 %v1063, 2147483648
        %v1074 = vsel %vm1072, %v1073, %v1064
        %v1075 = vsel %vm1068, %v1071, %v1074
        %v1076 = vsel %vm1065, nan, %v1075
        %v1077 = vand.u32 2147483647, %v340
        %vm1078 = vcmp.le.f32.partialorder %v1077, 0.7853982
        %vm1079 = vcmp.lt.s32.totalorder %v340, 0
        %v1080 = vand.u32 %v340, 2139095040
        %v1081 = vshrl.u32 %v1080, 23
        %v1082 = vsub.s32 %v1081, 127
        %v1083 = vand.u32 2147483647, %v340
        %v1084 = vand.u32 %v1083, 8388607
        %v1085 = vor.u32 %v1084, 8388608
        %v1086 = vsub.s32 0, %v1085
        %v1087 = vadd.s32 %v1082, 1
        %vm1088 = vcmp.gt.s32.totalorder %v1087, 0
        %v1089 = vsel %vm1088, %v1087, 0
        %v1090 = vshrl.u32 %v1089, 5
        %v1091 = vand.u32 %v1089, 31
        %v1092 = vsub.s32 32, %v1091
        %v1093 = vshrl.u32 683565275, %v1092
        %v1094 = vshll.u32 683565275, %v1091
        %v1095 = vshrl.u32 2475754826, %v1092
        %v1096 = vor.u32 %v1094, %v1095
        %v1097 = vshll.u32 2475754826, %v1091
        %v1098 = vshrl.u32 2131351028, %v1092
        %v1099 = vor.u32 %v1097, %v1098
        %v1100 = vshll.u32 2131351028, %v1091
        %v1101 = vshrl.u32 2102212464, %v1092
        %v1102 = vor.u32 %v1100, %v1101
        %v1103 = vshll.u32 2102212464, %v1091
        %v1104 = vshrl.u32 920167782, %v1092
        %v1105 = vor.u32 %v1103, %v1104
        %v1106 = vshll.u32 920167782, %v1091
        %v1107 = vshrl.u32 1326507024, %v1092
        %v1108 = vor.u32 %v1106, %v1107
        %vm1109 = vcmp.lt.s32.totalorder %v1090, 1
        %vm1110 = vcmp.lt.s32.totalorder %v1090, 2
        %vm1111 = vcmp.lt.s32.totalorder %v1090, 3
        %vm1112 = vcmp.lt.s32.totalorder %v1090, 4
        %v1113 = vsel %vm1109, %v1093, %v1096
        %v1114 = vsel %vm1112, %v1102, 2102212464
        %v1115 = vsel %vm1111, %v1099, %v1114
        %v1116 = vsel %vm1110, %v1113, %v1115
        %v1117 = vsel %vm1109, %v1096, %v1099
        %v1118 = vsel %vm1112, %v1105, 920167782
        %v1119 = vsel %vm1111, %v1102, %v1118
        %v1120 = vsel %vm1110, %v1117, %v1119
        %v1121 = vsel %vm1109, %v1099, %v1102
        %v1122 = vsel %vm1112, %v1108, 1326507024
        %v1123 = vsel %vm1111, %v1105, %v1122
        %v1124 = vsel %vm1110, %v1121, %v1123
        %v1125 = vshll.u32 %v1085, 8
        %v1126 = vmul.u32.u64.compose %v1125, %v1124
        %v1127 = vextract.low.u32 %v1126
        %v1128 = vextract.high.u32 %v1126
        %v1129 = vmul.u32.u64.compose %v1125, %v1120
        %v1130 = vextract.low.u32 %v1129
        %v1131 = vextract.high.u32 %v1129
        %v1132 = vmul.u32 %v1125, %v1116
        %v1133 = vadd.s32 %v1128, %v1130
        %vm1134 = vc.u32 %v1128, %v1130
        %v1135 = vadd.s32 %v1131, 1
        %v1136 = vsel %vm1134, %v1135, %v1131
        %v1137 = vadd.s32 %v1132, %v1136
        %v1138 = vadd.s32 %v1137, 536870912
        %v1139 = vshrl.u32 %v1138, 30
        %v1140 = vshll.u32 %v1139, 30
        %v1141 = vsub.s32 %v1137, %v1140
        %vm1142 = vcmp.lt.s32.totalorder %v1141, 0
        %v1143 = vsub.s32 0, %v1141
        %v1144 = vsel %vm1142, %v1143, %v1141
        %v1145 = vclz %v1144
        %v1146 = vsub.s32 %v1145, 2
        %vm1147 = vcmp.gt.s32.totalorder 0, %v1146
        %v1148 = vsel %vm1147, 0, %v1146
        %v1149 = vsub.s32 32, %v1148
        %v1150 = vshll.u32 %v1141, %v1148
        %v1151 = vshrl.u32 %v1133, %v1149
        %v1152 = vor.u32 %v1150, %v1151
        %v1153 = vsub.s32 4294967266, %v1148
        %v1154 = vadd.s32 %v1153, 127
        %v1155 = vshll.u32 %v1154, 23
        %v1156 = vor.u32 4788187, %v1155
        %v1157 = vand.u32 2147483647, %v1156
        %v1159 = vcvt.s32.f32 %v1152
        %v1160 = vmul.f32 %v1159, %v1157
        %v1161 = vxor.u32 %v1160, 2147483648
        %v1162 = vsel %vm1079, %v1161, %v1160
        %v1163 = vsub.s32 4, %v1139
        %v1164 = vsel %vm1079, %v1163, %v1139
        %v1165 = vsel %vm1078, %v340, %v1162
        %v1166 = vsel %vm1078, 0, %v1164
        %v1167 = vcosq.f32.pop %v1165
        %v1168 = vsinq.f32.pop %v1165
        %vm1169 = vweird.f32 %v340
        %v1170 = vadd.s32 %v1166, 3
        %v1171 = vand.u32 %v1170, 3
        %vm1172 = vcmp.lt.s32.totalorder %v1171, 2
        %vm1173 = vcmp.eq.s32.totalorder %v1171, 0
        %v1174 = vxor.u32 %v1168, 2147483648
        %v1175 = vsel %vm1173, %v1167, %v1174
        %vm1176 = vcmp.eq.s32.totalorder %v1171, 2
        %v1177 = vxor.u32 %v1167, 2147483648
        %v1178 = vsel %vm1176, %v1177, %v1168
        %v1179 = vsel %vm1172, %v1175, %v1178
        %v1180 = vsel %vm1169, nan, %v1179
        %v1181 = vand.u32 2147483647, %v341
        %vm1182 = vcmp.le.f32.partialorder %v1181, 0.7853982
        %vm1183 = vcmp.lt.s32.totalorder %v341, 0
        %v1184 = vand.u32 %v341, 2139095040
        %v1185 = vshrl.u32 %v1184, 23
        %v1186 = vsub.s32 %v1185, 127
        %v1187 = vand.u32 2147483647, %v341
        %v1188 = vand.u32 %v1187, 8388607
        %v1189 = vor.u32 %v1188, 8388608
        %v1190 = vsub.s32 0, %v1189
        %v1191 = vadd.s32 %v1186, 1
        %vm1192 = vcmp.gt.s32.totalorder %v1191, 0
        %v1193 = vsel %vm1192, %v1191, 0
        %v1194 = vshrl.u32 %v1193, 5
        %v1195 = vand.u32 %v1193, 31
        %v1196 = vsub.s32 32, %v1195
        %v1197 = vshrl.u32 683565275, %v1196
        %v1198 = vshll.u32 683565275, %v1195
        %v1199 = vshrl.u32 2475754826, %v1196
        %v1200 = vor.u32 %v1198, %v1199
        %v1201 = vshll.u32 2475754826, %v1195
        %v1202 = vshrl.u32 2131351028, %v1196
        %v1203 = vor.u32 %v1201, %v1202
        %v1204 = vshll.u32 2131351028, %v1195
        %v1205 = vshrl.u32 2102212464, %v1196
        %v1206 = vor.u32 %v1204, %v1205
        %v1207 = vshll.u32 2102212464, %v1195
        %v1208 = vshrl.u32 920167782, %v1196
        %v1209 = vor.u32 %v1207, %v1208
        %v1210 = vshll.u32 920167782, %v1195
        %v1211 = vshrl.u32 1326507024, %v1196
        %v1212 = vor.u32 %v1210, %v1211
        %vm1213 = vcmp.lt.s32.totalorder %v1194, 1
        %vm1214 = vcmp.lt.s32.totalorder %v1194, 2
        %vm1215 = vcmp.lt.s32.totalorder %v1194, 3
        %vm1216 = vcmp.lt.s32.totalorder %v1194, 4
        %v1217 = vsel %vm1213, %v1197, %v1200
        %v1218 = vsel %vm1216, %v1206, 2102212464
        %v1219 = vsel %vm1215, %v1203, %v1218
        %v1220 = vsel %vm1214, %v1217, %v1219
        %v1221 = vsel %vm1213, %v1200, %v1203
        %v1222 = vsel %vm1216, %v1209, 920167782
        %v1223 = vsel %vm1215, %v1206, %v1222
        %v1224 = vsel %vm1214, %v1221, %v1223
        %v1225 = vsel %vm1213, %v1203, %v1206
        %v1226 = vsel %vm1216, %v1212, 1326507024
        %v1227 = vsel %vm1215, %v1209, %v1226
        %v1228 = vsel %vm1214, %v1225, %v1227
        %v1229 = vshll.u32 %v1189, 8
        %v1230 = vmul.u32.u64.compose %v1229, %v1228
        %v1231 = vextract.low.u32 %v1230
        %v1232 = vextract.high.u32 %v1230
        %v1233 = vmul.u32.u64.compose %v1229, %v1224
        %v1234 = vextract.low.u32 %v1233
        %v1235 = vextract.high.u32 %v1233
        %v1236 = vmul.u32 %v1229, %v1220
        %v1237 = vadd.s32 %v1232, %v1234
        %vm1238 = vc.u32 %v1232, %v1234
        %v1239 = vadd.s32 %v1235, 1
        %v1240 = vsel %vm1238, %v1239, %v1235
        %v1241 = vadd.s32 %v1236, %v1240
        %v1242 = vadd.s32 %v1241, 536870912
        %v1243 = vshrl.u32 %v1242, 30
        %v1244 = vshll.u32 %v1243, 30
        %v1245 = vsub.s32 %v1241, %v1244
        %vm1246 = vcmp.lt.s32.totalorder %v1245, 0
        %v1247 = vsub.s32 0, %v1245
        %v1248 = vsel %vm1246, %v1247, %v1245
        %v1249 = vclz %v1248
        %v1250 = vsub.s32 %v1249, 2
        %vm1251 = vcmp.gt.s32.totalorder 0, %v1250
        %v1252 = vsel %vm1251, 0, %v1250
        %v1253 = vsub.s32 32, %v1252
        %v1254 = vshll.u32 %v1245, %v1252
        %v1255 = vshrl.u32 %v1237, %v1253
        %v1256 = vor.u32 %v1254, %v1255
        %v1257 = vsub.s32 4294967266, %v1252
        %v1258 = vadd.s32 %v1257, 127
        %v1259 = vshll.u32 %v1258, 23
        %v1260 = vor.u32 4788187, %v1259
        %v1261 = vand.u32 2147483647, %v1260
        %v1263 = vcvt.s32.f32 %v1256
        %v1264 = vmul.f32 %v1263, %v1261
        %v1265 = vxor.u32 %v1264, 2147483648
        %v1266 = vsel %vm1183, %v1265, %v1264
        %v1267 = vsub.s32 4, %v1243
        %v1268 = vsel %vm1183, %v1267, %v1243
        %v1269 = vsel %vm1182, %v341, %v1266
        %v1270 = vsel %vm1182, 0, %v1268
        %v1271 = vcosq.f32.pop %v1269
        %v1272 = vsinq.f32.pop %v1269
        %vm1273 = vweird.f32 %v341
        %v1274 = vadd.s32 %v1270, 3
        %v1275 = vand.u32 %v1274, 3
        %vm1276 = vcmp.lt.s32.totalorder %v1275, 2
        %vm1277 = vcmp.eq.s32.totalorder %v1275, 0
        %v1278 = vxor.u32 %v1272, 2147483648
        %v1279 = vsel %vm1277, %v1271, %v1278
        %vm1280 = vcmp.eq.s32.totalorder %v1275, 2
        %v1281 = vxor.u32 %v1271, 2147483648
        %v1282 = vsel %vm1280, %v1281, %v1272
        %v1283 = vsel %vm1276, %v1279, %v1282
        %v1284 = vsel %vm1273, nan, %v1283
        %v1285 = vand.u32 2147483647, %v342
        %vm1286 = vcmp.le.f32.partialorder %v1285, 0.7853982
        %vm1287 = vcmp.lt.s32.totalorder %v342, 0
        %v1288 = vand.u32 %v342, 2139095040
        %v1289 = vshrl.u32 %v1288, 23
        %v1290 = vsub.s32 %v1289, 127
        %v1291 = vand.u32 2147483647, %v342
        %v1292 = vand.u32 %v1291, 8388607
        %v1293 = vor.u32 %v1292, 8388608
        %v1294 = vsub.s32 0, %v1293
        %v1295 = vadd.s32 %v1290, 1
        %vm1296 = vcmp.gt.s32.totalorder %v1295, 0
        %v1297 = vsel %vm1296, %v1295, 0
        %v1298 = vshrl.u32 %v1297, 5
        %v1299 = vand.u32 %v1297, 31
        %v1300 = vsub.s32 32, %v1299
        %v1301 = vshrl.u32 683565275, %v1300
        %v1302 = vshll.u32 683565275, %v1299
        %v1303 = vshrl.u32 2475754826, %v1300
        %v1304 = vor.u32 %v1302, %v1303
        %v1305 = vshll.u32 2475754826, %v1299
        %v1306 = vshrl.u32 2131351028, %v1300
        %v1307 = vor.u32 %v1305, %v1306
        %v1308 = vshll.u32 2131351028, %v1299
        %v1309 = vshrl.u32 2102212464, %v1300
        %v1310 = vor.u32 %v1308, %v1309
        %v1311 = vshll.u32 2102212464, %v1299
        %v1312 = vshrl.u32 920167782, %v1300
        %v1313 = vor.u32 %v1311, %v1312
        %v1314 = vshll.u32 920167782, %v1299
        %v1315 = vshrl.u32 1326507024, %v1300
        %v1316 = vor.u32 %v1314, %v1315
        %vm1317 = vcmp.lt.s32.totalorder %v1298, 1
        %vm1318 = vcmp.lt.s32.totalorder %v1298, 2
        %vm1319 = vcmp.lt.s32.totalorder %v1298, 3
        %vm1320 = vcmp.lt.s32.totalorder %v1298, 4
        %v1321 = vsel %vm1317, %v1301, %v1304
        %v1322 = vsel %vm1320, %v1310, 2102212464
        %v1323 = vsel %vm1319, %v1307, %v1322
        %v1324 = vsel %vm1318, %v1321, %v1323
        %v1325 = vsel %vm1317, %v1304, %v1307
        %v1326 = vsel %vm1320, %v1313, 920167782
        %v1327 = vsel %vm1319, %v1310, %v1326
        %v1328 = vsel %vm1318, %v1325, %v1327
        %v1329 = vsel %vm1317, %v1307, %v1310
        %v1330 = vsel %vm1320, %v1316, 1326507024
        %v1331 = vsel %vm1319, %v1313, %v1330
        %v1332 = vsel %vm1318, %v1329, %v1331
        %v1333 = vshll.u32 %v1293, 8
        %v1334 = vmul.u32.u64.compose %v1333, %v1332
        %v1335 = vextract.low.u32 %v1334
        %v1336 = vextract.high.u32 %v1334
        %v1337 = vmul.u32.u64.compose %v1333, %v1328
        %v1338 = vextract.low.u32 %v1337
        %v1339 = vextract.high.u32 %v1337
        %v1340 = vmul.u32 %v1333, %v1324
        %v1341 = vadd.s32 %v1336, %v1338
        %vm1342 = vc.u32 %v1336, %v1338
        %v1343 = vadd.s32 %v1339, 1
        %v1344 = vsel %vm1342, %v1343, %v1339
        %v1345 = vadd.s32 %v1340, %v1344
        %v1346 = vadd.s32 %v1345, 536870912
        %v1347 = vshrl.u32 %v1346, 30
        %v1348 = vshll.u32 %v1347, 30
        %v1349 = vsub.s32 %v1345, %v1348
        %vm1350 = vcmp.lt.s32.totalorder %v1349, 0
        %v1351 = vsub.s32 0, %v1349
        %v1352 = vsel %vm1350, %v1351, %v1349
        %v1353 = vclz %v1352
        %v1354 = vsub.s32 %v1353, 2
        %vm1355 = vcmp.gt.s32.totalorder 0, %v1354
        %v1356 = vsel %vm1355, 0, %v1354
        %v1357 = vsub.s32 32, %v1356
        %v1358 = vshll.u32 %v1349, %v1356
        %v1359 = vshrl.u32 %v1341, %v1357
        %v1360 = vor.u32 %v1358, %v1359
        %v1361 = vsub.s32 4294967266, %v1356
        %v1362 = vadd.s32 %v1361, 127
        %v1363 = vshll.u32 %v1362, 23
        %v1364 = vor.u32 4788187, %v1363
        %v1365 = vand.u32 2147483647, %v1364
        %v1367 = vcvt.s32.f32 %v1360
        %v1368 = vmul.f32 %v1367, %v1365
        %v1369 = vxor.u32 %v1368, 2147483648
        %v1370 = vsel %vm1287, %v1369, %v1368
        %v1371 = vsub.s32 4, %v1347
        %v1372 = vsel %vm1287, %v1371, %v1347
        %v1373 = vsel %vm1286, %v342, %v1370
        %v1374 = vsel %vm1286, 0, %v1372
        %v1375 = vcosq.f32.pop %v1373
        %v1376 = vsinq.f32.pop %v1373
        %vm1377 = vweird.f32 %v342
        %v1378 = vadd.s32 %v1374, 3
        %v1379 = vand.u32 %v1378, 3
        %vm1380 = vcmp.lt.s32.totalorder %v1379, 2
        %vm1381 = vcmp.eq.s32.totalorder %v1379, 0
        %v1382 = vxor.u32 %v1376, 2147483648
        %v1383 = vsel %vm1381, %v1375, %v1382
        %vm1384 = vcmp.eq.s32.totalorder %v1379, 2
        %v1385 = vxor.u32 %v1375, 2147483648
        %v1386 = vsel %vm1384, %v1385, %v1376
        %v1387 = vsel %vm1380, %v1383, %v1386
        %v1388 = vsel %vm1377, nan, %v1387
        %v1389 = vand.u32 2147483647, %v343
        %vm1390 = vcmp.le.f32.partialorder %v1389, 0.7853982
        %vm1391 = vcmp.lt.s32.totalorder %v343, 0
        %v1392 = vand.u32 %v343, 2139095040
        %v1393 = vshrl.u32 %v1392, 23
        %v1394 = vsub.s32 %v1393, 127
        %v1395 = vand.u32 2147483647, %v343
        %v1396 = vand.u32 %v1395, 8388607
        %v1397 = vor.u32 %v1396, 8388608
        %v1398 = vsub.s32 0, %v1397
        %v1399 = vadd.s32 %v1394, 1
        %vm1400 = vcmp.gt.s32.totalorder %v1399, 0
        %v1401 = vsel %vm1400, %v1399, 0
        %v1402 = vshrl.u32 %v1401, 5
        %v1403 = vand.u32 %v1401, 31
        %v1404 = vsub.s32 32, %v1403
        %v1405 = vshrl.u32 683565275, %v1404
        %v1406 = vshll.u32 683565275, %v1403
        %v1407 = vshrl.u32 2475754826, %v1404
        %v1408 = vor.u32 %v1406, %v1407
        %v1409 = vshll.u32 2475754826, %v1403
        %v1410 = vshrl.u32 2131351028, %v1404
        %v1411 = vor.u32 %v1409, %v1410
        %v1412 = vshll.u32 2131351028, %v1403
        %v1413 = vshrl.u32 2102212464, %v1404
        %v1414 = vor.u32 %v1412, %v1413
        %v1415 = vshll.u32 2102212464, %v1403
        %v1416 = vshrl.u32 920167782, %v1404
        %v1417 = vor.u32 %v1415, %v1416
        %v1418 = vshll.u32 920167782, %v1403
        %v1419 = vshrl.u32 1326507024, %v1404
        %v1420 = vor.u32 %v1418, %v1419
        %vm1421 = vcmp.lt.s32.totalorder %v1402, 1
        %vm1422 = vcmp.lt.s32.totalorder %v1402, 2
        %vm1423 = vcmp.lt.s32.totalorder %v1402, 3
        %vm1424 = vcmp.lt.s32.totalorder %v1402, 4
        %v1425 = vsel %vm1421, %v1405, %v1408
        %v1426 = vsel %vm1424, %v1414, 2102212464
        %v1427 = vsel %vm1423, %v1411, %v1426
        %v1428 = vsel %vm1422, %v1425, %v1427
        %v1429 = vsel %vm1421, %v1408, %v1411
        %v1430 = vsel %vm1424, %v1417, 920167782
        %v1431 = vsel %vm1423, %v1414, %v1430
        %v1432 = vsel %vm1422, %v1429, %v1431
        %v1433 = vsel %vm1421, %v1411, %v1414
        %v1434 = vsel %vm1424, %v1420, 1326507024
        %v1435 = vsel %vm1423, %v1417, %v1434
        %v1436 = vsel %vm1422, %v1433, %v1435
        %v1437 = vshll.u32 %v1397, 8
        %v1438 = vmul.u32.u64.compose %v1437, %v1436
        %v1439 = vextract.low.u32 %v1438
        %v1440 = vextract.high.u32 %v1438
        %v1441 = vmul.u32.u64.compose %v1437, %v1432
        %v1442 = vextract.low.u32 %v1441
        %v1443 = vextract.high.u32 %v1441
        %v1444 = vmul.u32 %v1437, %v1428
        %v1445 = vadd.s32 %v1440, %v1442
        %vm1446 = vc.u32 %v1440, %v1442
        %v1447 = vadd.s32 %v1443, 1
        %v1448 = vsel %vm1446, %v1447, %v1443
        %v1449 = vadd.s32 %v1444, %v1448
        %v1450 = vadd.s32 %v1449, 536870912
        %v1451 = vshrl.u32 %v1450, 30
        %v1452 = vshll.u32 %v1451, 30
        %v1453 = vsub.s32 %v1449, %v1452
        %vm1454 = vcmp.lt.s32.totalorder %v1453, 0
        %v1455 = vsub.s32 0, %v1453
        %v1456 = vsel %vm1454, %v1455, %v1453
        %v1457 = vclz %v1456
        %v1458 = vsub.s32 %v1457, 2
        %vm1459 = vcmp.gt.s32.totalorder 0, %v1458
        %v1460 = vsel %vm1459, 0, %v1458
        %v1461 = vsub.s32 32, %v1460
        %v1462 = vshll.u32 %v1453, %v1460
        %v1463 = vshrl.u32 %v1445, %v1461
        %v1464 = vor.u32 %v1462, %v1463
        %v1465 = vsub.s32 4294967266, %v1460
        %v1466 = vadd.s32 %v1465, 127
        %v1467 = vshll.u32 %v1466, 23
        %v1468 = vor.u32 4788187, %v1467
        %v1469 = vand.u32 2147483647, %v1468
        %v1471 = vcvt.s32.f32 %v1464
        %v1472 = vmul.f32 %v1471, %v1469
        %v1473 = vxor.u32 %v1472, 2147483648
        %v1474 = vsel %vm1391, %v1473, %v1472
        %v1475 = vsub.s32 4, %v1451
        %v1476 = vsel %vm1391, %v1475, %v1451
        %v1477 = vsel %vm1390, %v343, %v1474
        %v1478 = vsel %vm1390, 0, %v1476
        %v1479 = vcosq.f32.pop %v1477
        %v1480 = vsinq.f32.pop %v1477
        %vm1481 = vweird.f32 %v343
        %v1482 = vadd.s32 %v1478, 3
        %v1483 = vand.u32 %v1482, 3
        %vm1484 = vcmp.lt.s32.totalorder %v1483, 2
        %vm1485 = vcmp.eq.s32.totalorder %v1483, 0
        %v1486 = vxor.u32 %v1480, 2147483648
        %v1487 = vsel %vm1485, %v1479, %v1486
        %vm1488 = vcmp.eq.s32.totalorder %v1483, 2
        %v1489 = vxor.u32 %v1479, 2147483648
        %v1490 = vsel %vm1488, %v1489, %v1480
        %v1491 = vsel %vm1484, %v1487, %v1490
        %v1492 = vsel %vm1481, nan, %v1491
        %v1493 = vand.u32 2147483647, %v344
        %vm1494 = vcmp.le.f32.partialorder %v1493, 0.7853982
        %vm1495 = vcmp.lt.s32.totalorder %v344, 0
        %v1496 = vand.u32 %v344, 2139095040
        %v1497 = vshrl.u32 %v1496, 23
        %v1498 = vsub.s32 %v1497, 127
        %v1499 = vand.u32 2147483647, %v344
        %v1500 = vand.u32 %v1499, 8388607
        %v1501 = vor.u32 %v1500, 8388608
        %v1502 = vsub.s32 0, %v1501
        %v1503 = vadd.s32 %v1498, 1
        %vm1504 = vcmp.gt.s32.totalorder %v1503, 0
        %v1505 = vsel %vm1504, %v1503, 0
        %v1506 = vshrl.u32 %v1505, 5
        %v1507 = vand.u32 %v1505, 31
        %v1508 = vsub.s32 32, %v1507
        %v1509 = vshrl.u32 683565275, %v1508
        %v1510 = vshll.u32 683565275, %v1507
        %v1511 = vshrl.u32 2475754826, %v1508
        %v1512 = vor.u32 %v1510, %v1511
        %v1513 = vshll.u32 2475754826, %v1507
        %v1514 = vshrl.u32 2131351028, %v1508
        %v1515 = vor.u32 %v1513, %v1514
        %v1516 = vshll.u32 2131351028, %v1507
        %v1517 = vshrl.u32 2102212464, %v1508
        %v1518 = vor.u32 %v1516, %v1517
        %v1519 = vshll.u32 2102212464, %v1507
        %v1520 = vshrl.u32 920167782, %v1508
        %v1521 = vor.u32 %v1519, %v1520
        %v1522 = vshll.u32 920167782, %v1507
        %v1523 = vshrl.u32 1326507024, %v1508
        %v1524 = vor.u32 %v1522, %v1523
        %vm1525 = vcmp.lt.s32.totalorder %v1506, 1
        %vm1526 = vcmp.lt.s32.totalorder %v1506, 2
        %vm1527 = vcmp.lt.s32.totalorder %v1506, 3
        %vm1528 = vcmp.lt.s32.totalorder %v1506, 4
        %v1529 = vsel %vm1525, %v1509, %v1512
        %v1530 = vsel %vm1528, %v1518, 2102212464
        %v1531 = vsel %vm1527, %v1515, %v1530
        %v1532 = vsel %vm1526, %v1529, %v1531
        %v1533 = vsel %vm1525, %v1512, %v1515
        %v1534 = vsel %vm1528, %v1521, 920167782
        %v1535 = vsel %vm1527, %v1518, %v1534
        %v1536 = vsel %vm1526, %v1533, %v1535
        %v1537 = vsel %vm1525, %v1515, %v1518
        %v1538 = vsel %vm1528, %v1524, 1326507024
        %v1539 = vsel %vm1527, %v1521, %v1538
        %v1540 = vsel %vm1526, %v1537, %v1539
        %v1541 = vshll.u32 %v1501, 8
        %v1542 = vmul.u32.u64.compose %v1541, %v1540
        %v1543 = vextract.low.u32 %v1542
        %v1544 = vextract.high.u32 %v1542
        %v1545 = vmul.u32.u64.compose %v1541, %v1536
        %v1546 = vextract.low.u32 %v1545
        %v1547 = vextract.high.u32 %v1545
        %v1548 = vmul.u32 %v1541, %v1532
        %v1549 = vadd.s32 %v1544, %v1546
        %vm1550 = vc.u32 %v1544, %v1546
        %v1551 = vadd.s32 %v1547, 1
        %v1552 = vsel %vm1550, %v1551, %v1547
        %v1553 = vadd.s32 %v1548, %v1552
        %v1554 = vadd.s32 %v1553, 536870912
        %v1555 = vshrl.u32 %v1554, 30
        %v1556 = vshll.u32 %v1555, 30
        %v1557 = vsub.s32 %v1553, %v1556
        %vm1558 = vcmp.lt.s32.totalorder %v1557, 0
        %v1559 = vsub.s32 0, %v1557
        %v1560 = vsel %vm1558, %v1559, %v1557
        %v1561 = vclz %v1560
        %v1562 = vsub.s32 %v1561, 2
        %vm1563 = vcmp.gt.s32.totalorder 0, %v1562
        %v1564 = vsel %vm1563, 0, %v1562
        %v1565 = vsub.s32 32, %v1564
        %v1566 = vshll.u32 %v1557, %v1564
        %v1567 = vshrl.u32 %v1549, %v1565
        %v1568 = vor.u32 %v1566, %v1567
        %v1569 = vsub.s32 4294967266, %v1564
        %v1570 = vadd.s32 %v1569, 127
        %v1571 = vshll.u32 %v1570, 23
        %v1572 = vor.u32 4788187, %v1571
        %v1573 = vand.u32 2147483647, %v1572
        %v1575 = vcvt.s32.f32 %v1568
        %v1576 = vmul.f32 %v1575, %v1573
        %v1577 = vxor.u32 %v1576, 2147483648
        %v1578 = vsel %vm1495, %v1577, %v1576
        %v1579 = vsub.s32 4, %v1555
        %v1580 = vsel %vm1495, %v1579, %v1555
        %v1581 = vsel %vm1494, %v344, %v1578
        %v1582 = vsel %vm1494, 0, %v1580
        %v1583 = vcosq.f32.pop %v1581
        %v1584 = vsinq.f32.pop %v1581
        %vm1585 = vweird.f32 %v344
        %v1586 = vadd.s32 %v1582, 3
        %v1587 = vand.u32 %v1586, 3
        %vm1588 = vcmp.lt.s32.totalorder %v1587, 2
        %vm1589 = vcmp.eq.s32.totalorder %v1587, 0
        %v1590 = vxor.u32 %v1584, 2147483648
        %v1591 = vsel %vm1589, %v1583, %v1590
        %vm1592 = vcmp.eq.s32.totalorder %v1587, 2
        %v1593 = vxor.u32 %v1583, 2147483648
        %v1594 = vsel %vm1592, %v1593, %v1584
        %v1595 = vsel %vm1588, %v1591, %v1594
        %v1596 = vsel %vm1585, nan, %v1595
        %v1597 = vand.u32 2147483647, %v345
        %vm1598 = vcmp.le.f32.partialorder %v1597, 0.7853982
        %vm1599 = vcmp.lt.s32.totalorder %v345, 0
        %v1600 = vand.u32 %v345, 2139095040
        %v1601 = vshrl.u32 %v1600, 23
        %v1602 = vsub.s32 %v1601, 127
        %v1603 = vand.u32 2147483647, %v345
        %v1604 = vand.u32 %v1603, 8388607
        %v1605 = vor.u32 %v1604, 8388608
        %v1606 = vsub.s32 0, %v1605
        %v1607 = vadd.s32 %v1602, 1
        %vm1608 = vcmp.gt.s32.totalorder %v1607, 0
        %v1609 = vsel %vm1608, %v1607, 0
        %v1610 = vshrl.u32 %v1609, 5
        %v1611 = vand.u32 %v1609, 31
        %v1612 = vsub.s32 32, %v1611
        %v1613 = vshrl.u32 683565275, %v1612
        %v1614 = vshll.u32 683565275, %v1611
        %v1615 = vshrl.u32 2475754826, %v1612
        %v1616 = vor.u32 %v1614, %v1615
        %v1617 = vshll.u32 2475754826, %v1611
        %v1618 = vshrl.u32 2131351028, %v1612
        %v1619 = vor.u32 %v1617, %v1618
        %v1620 = vshll.u32 2131351028, %v1611
        %v1621 = vshrl.u32 2102212464, %v1612
        %v1622 = vor.u32 %v1620, %v1621
        %v1623 = vshll.u32 2102212464, %v1611
        %v1624 = vshrl.u32 920167782, %v1612
        %v1625 = vor.u32 %v1623, %v1624
        %v1626 = vshll.u32 920167782, %v1611
        %v1627 = vshrl.u32 1326507024, %v1612
        %v1628 = vor.u32 %v1626, %v1627
        %vm1629 = vcmp.lt.s32.totalorder %v1610, 1
        %vm1630 = vcmp.lt.s32.totalorder %v1610, 2
        %vm1631 = vcmp.lt.s32.totalorder %v1610, 3
        %vm1632 = vcmp.lt.s32.totalorder %v1610, 4
        %v1633 = vsel %vm1629, %v1613, %v1616
        %v1634 = vsel %vm1632, %v1622, 2102212464
        %v1635 = vsel %vm1631, %v1619, %v1634
        %v1636 = vsel %vm1630, %v1633, %v1635
        %v1637 = vsel %vm1629, %v1616, %v1619
        %v1638 = vsel %vm1632, %v1625, 920167782
        %v1639 = vsel %vm1631, %v1622, %v1638
        %v1640 = vsel %vm1630, %v1637, %v1639
        %v1641 = vsel %vm1629, %v1619, %v1622
        %v1642 = vsel %vm1632, %v1628, 1326507024
        %v1643 = vsel %vm1631, %v1625, %v1642
        %v1644 = vsel %vm1630, %v1641, %v1643
        %v1645 = vshll.u32 %v1605, 8
        %v1646 = vmul.u32.u64.compose %v1645, %v1644
        %v1647 = vextract.low.u32 %v1646
        %v1648 = vextract.high.u32 %v1646
        %v1649 = vmul.u32.u64.compose %v1645, %v1640
        %v1650 = vextract.low.u32 %v1649
        %v1651 = vextract.high.u32 %v1649
        %v1652 = vmul.u32 %v1645, %v1636
        %v1653 = vadd.s32 %v1648, %v1650
        %vm1654 = vc.u32 %v1648, %v1650
        %v1655 = vadd.s32 %v1651, 1
        %v1656 = vsel %vm1654, %v1655, %v1651
        %v1657 = vadd.s32 %v1652, %v1656
        %v1658 = vadd.s32 %v1657, 536870912
        %v1659 = vshrl.u32 %v1658, 30
        %v1660 = vshll.u32 %v1659, 30
        %v1661 = vsub.s32 %v1657, %v1660
        %vm1662 = vcmp.lt.s32.totalorder %v1661, 0
        %v1663 = vsub.s32 0, %v1661
        %v1664 = vsel %vm1662, %v1663, %v1661
        %v1665 = vclz %v1664
        %v1666 = vsub.s32 %v1665, 2
        %vm1667 = vcmp.gt.s32.totalorder 0, %v1666
        %v1668 = vsel %vm1667, 0, %v1666
        %v1669 = vsub.s32 32, %v1668
        %v1670 = vshll.u32 %v1661, %v1668
        %v1671 = vshrl.u32 %v1653, %v1669
        %v1672 = vor.u32 %v1670, %v1671
        %v1673 = vsub.s32 4294967266, %v1668
        %v1674 = vadd.s32 %v1673, 127
        %v1675 = vshll.u32 %v1674, 23
        %v1676 = vor.u32 4788187, %v1675
        %v1677 = vand.u32 2147483647, %v1676
        %v1679 = vcvt.s32.f32 %v1672
        %v1680 = vmul.f32 %v1679, %v1677
        %v1681 = vxor.u32 %v1680, 2147483648
        %v1682 = vsel %vm1599, %v1681, %v1680
        %v1683 = vsub.s32 4, %v1659
        %v1684 = vsel %vm1599, %v1683, %v1659
        %v1685 = vsel %vm1598, %v345, %v1682
        %v1686 = vsel %vm1598, 0, %v1684
        %v1687 = vcosq.f32.pop %v1685
        %v1688 = vsinq.f32.pop %v1685
        %vm1689 = vweird.f32 %v345
        %v1690 = vadd.s32 %v1686, 3
        %v1691 = vand.u32 %v1690, 3
        %vm1692 = vcmp.lt.s32.totalorder %v1691, 2
        %vm1693 = vcmp.eq.s32.totalorder %v1691, 0
        %v1694 = vxor.u32 %v1688, 2147483648
        %v1695 = vsel %vm1693, %v1687, %v1694
        %vm1696 = vcmp.eq.s32.totalorder %v1691, 2
        %v1697 = vxor.u32 %v1687, 2147483648
        %v1698 = vsel %vm1696, %v1697, %v1688
        %v1699 = vsel %vm1692, %v1695, %v1698
        %v1700 = vsel %vm1689, nan, %v1699
        %v1701 = vand.u32 2147483647, %v346
        %vm1702 = vcmp.le.f32.partialorder %v1701, 0.7853982
        %vm1703 = vcmp.lt.s32.totalorder %v346, 0
        %v1704 = vand.u32 %v346, 2139095040
        %v1705 = vshrl.u32 %v1704, 23
        %v1706 = vsub.s32 %v1705, 127
        %v1707 = vand.u32 2147483647, %v346
        %v1708 = vand.u32 %v1707, 8388607
        %v1709 = vor.u32 %v1708, 8388608
        %v1710 = vsub.s32 0, %v1709
        %v1711 = vadd.s32 %v1706, 1
        %vm1712 = vcmp.gt.s32.totalorder %v1711, 0
        %v1713 = vsel %vm1712, %v1711, 0
        %v1714 = vshrl.u32 %v1713, 5
        %v1715 = vand.u32 %v1713, 31
        %v1716 = vsub.s32 32, %v1715
        %v1717 = vshrl.u32 683565275, %v1716
        %v1718 = vshll.u32 683565275, %v1715
        %v1719 = vshrl.u32 2475754826, %v1716
        %v1720 = vor.u32 %v1718, %v1719
        %v1721 = vshll.u32 2475754826, %v1715
        %v1722 = vshrl.u32 2131351028, %v1716
        %v1723 = vor.u32 %v1721, %v1722
        %v1724 = vshll.u32 2131351028, %v1715
        %v1725 = vshrl.u32 2102212464, %v1716
        %v1726 = vor.u32 %v1724, %v1725
        %v1727 = vshll.u32 2102212464, %v1715
        %v1728 = vshrl.u32 920167782, %v1716
        %v1729 = vor.u32 %v1727, %v1728
        %v1730 = vshll.u32 920167782, %v1715
        %v1731 = vshrl.u32 1326507024, %v1716
        %v1732 = vor.u32 %v1730, %v1731
        %vm1733 = vcmp.lt.s32.totalorder %v1714, 1
        %vm1734 = vcmp.lt.s32.totalorder %v1714, 2
        %vm1735 = vcmp.lt.s32.totalorder %v1714, 3
        %vm1736 = vcmp.lt.s32.totalorder %v1714, 4
        %v1737 = vsel %vm1733, %v1717, %v1720
        %v1738 = vsel %vm1736, %v1726, 2102212464
        %v1739 = vsel %vm1735, %v1723, %v1738
        %v1740 = vsel %vm1734, %v1737, %v1739
        %v1741 = vsel %vm1733, %v1720, %v1723
        %v1742 = vsel %vm1736, %v1729, 920167782
        %v1743 = vsel %vm1735, %v1726, %v1742
        %v1744 = vsel %vm1734, %v1741, %v1743
        %v1745 = vsel %vm1733, %v1723, %v1726
        %v1746 = vsel %vm1736, %v1732, 1326507024
        %v1747 = vsel %vm1735, %v1729, %v1746
        %v1748 = vsel %vm1734, %v1745, %v1747
        %v1749 = vshll.u32 %v1709, 8
        %v1750 = vmul.u32.u64.compose %v1749, %v1748
        %v1751 = vextract.low.u32 %v1750
        %v1752 = vextract.high.u32 %v1750
        %v1753 = vmul.u32.u64.compose %v1749, %v1744
        %v1754 = vextract.low.u32 %v1753
        %v1755 = vextract.high.u32 %v1753
        %v1756 = vmul.u32 %v1749, %v1740
        %v1757 = vadd.s32 %v1752, %v1754
        %vm1758 = vc.u32 %v1752, %v1754
        %v1759 = vadd.s32 %v1755, 1
        %v1760 = vsel %vm1758, %v1759, %v1755
        %v1761 = vadd.s32 %v1756, %v1760
        %v1762 = vadd.s32 %v1761, 536870912
        %v1763 = vshrl.u32 %v1762, 30
        %v1764 = vshll.u32 %v1763, 30
        %v1765 = vsub.s32 %v1761, %v1764
        %vm1766 = vcmp.lt.s32.totalorder %v1765, 0
        %v1767 = vsub.s32 0, %v1765
        %v1768 = vsel %vm1766, %v1767, %v1765
        %v1769 = vclz %v1768
        %v1770 = vsub.s32 %v1769, 2
        %vm1771 = vcmp.gt.s32.totalorder 0, %v1770
        %v1772 = vsel %vm1771, 0, %v1770
        %v1773 = vsub.s32 32, %v1772
        %v1774 = vshll.u32 %v1765, %v1772
        %v1775 = vshrl.u32 %v1757, %v1773
        %v1776 = vor.u32 %v1774, %v1775
        %v1777 = vsub.s32 4294967266, %v1772
        %v1778 = vadd.s32 %v1777, 127
        %v1779 = vshll.u32 %v1778, 23
        %v1780 = vor.u32 4788187, %v1779
        %v1781 = vand.u32 2147483647, %v1780
        %v1783 = vcvt.s32.f32 %v1776
        %v1784 = vmul.f32 %v1783, %v1781
        %v1785 = vxor.u32 %v1784, 2147483648
        %v1786 = vsel %vm1703, %v1785, %v1784
        %v1787 = vsub.s32 4, %v1763
        %v1788 = vsel %vm1703, %v1787, %v1763
        %v1789 = vsel %vm1702, %v346, %v1786
        %v1790 = vsel %vm1702, 0, %v1788
        %v1791 = vcosq.f32.pop %v1789
        %v1792 = vsinq.f32.pop %v1789
        %vm1793 = vweird.f32 %v346
        %v1794 = vadd.s32 %v1790, 3
        %v1795 = vand.u32 %v1794, 3
        %vm1796 = vcmp.lt.s32.totalorder %v1795, 2
        %vm1797 = vcmp.eq.s32.totalorder %v1795, 0
        %v1798 = vxor.u32 %v1792, 2147483648
        %v1799 = vsel %vm1797, %v1791, %v1798
        %vm1800 = vcmp.eq.s32.totalorder %v1795, 2
        %v1801 = vxor.u32 %v1791, 2147483648
        %v1802 = vsel %vm1800, %v1801, %v1792
        %v1803 = vsel %vm1796, %v1799, %v1802
        %v1804 = vsel %vm1793, nan, %v1803
        %v1805 = vand.u32 2147483647, %v347
        %vm1806 = vcmp.le.f32.partialorder %v1805, 0.7853982
        %vm1807 = vcmp.lt.s32.totalorder %v347, 0
        %v1808 = vand.u32 %v347, 2139095040
        %v1809 = vshrl.u32 %v1808, 23
        %v1810 = vsub.s32 %v1809, 127
        %v1811 = vand.u32 2147483647, %v347
        %v1812 = vand.u32 %v1811, 8388607
        %v1813 = vor.u32 %v1812, 8388608
        %v1814 = vsub.s32 0, %v1813
        %v1815 = vadd.s32 %v1810, 1
        %vm1816 = vcmp.gt.s32.totalorder %v1815, 0
        %v1817 = vsel %vm1816, %v1815, 0
        %v1818 = vshrl.u32 %v1817, 5
        %v1819 = vand.u32 %v1817, 31
        %v1820 = vsub.s32 32, %v1819
        %v1821 = vshrl.u32 683565275, %v1820
        %v1822 = vshll.u32 683565275, %v1819
        %v1823 = vshrl.u32 2475754826, %v1820
        %v1824 = vor.u32 %v1822, %v1823
        %v1825 = vshll.u32 2475754826, %v1819
        %v1826 = vshrl.u32 2131351028, %v1820
        %v1827 = vor.u32 %v1825, %v1826
        %v1828 = vshll.u32 2131351028, %v1819
        %v1829 = vshrl.u32 2102212464, %v1820
        %v1830 = vor.u32 %v1828, %v1829
        %v1831 = vshll.u32 2102212464, %v1819
        %v1832 = vshrl.u32 920167782, %v1820
        %v1833 = vor.u32 %v1831, %v1832
        %v1834 = vshll.u32 920167782, %v1819
        %v1835 = vshrl.u32 1326507024, %v1820
        %v1836 = vor.u32 %v1834, %v1835
        %vm1837 = vcmp.lt.s32.totalorder %v1818, 1
        %vm1838 = vcmp.lt.s32.totalorder %v1818, 2
        %vm1839 = vcmp.lt.s32.totalorder %v1818, 3
        %vm1840 = vcmp.lt.s32.totalorder %v1818, 4
        %v1841 = vsel %vm1837, %v1821, %v1824
        %v1842 = vsel %vm1840, %v1830, 2102212464
        %v1843 = vsel %vm1839, %v1827, %v1842
        %v1844 = vsel %vm1838, %v1841, %v1843
        %v1845 = vsel %vm1837, %v1824, %v1827
        %v1846 = vsel %vm1840, %v1833, 920167782
        %v1847 = vsel %vm1839, %v1830, %v1846
        %v1848 = vsel %vm1838, %v1845, %v1847
        %v1849 = vsel %vm1837, %v1827, %v1830
        %v1850 = vsel %vm1840, %v1836, 1326507024
        %v1851 = vsel %vm1839, %v1833, %v1850
        %v1852 = vsel %vm1838, %v1849, %v1851
        %v1853 = vshll.u32 %v1813, 8
        %v1854 = vmul.u32.u64.compose %v1853, %v1852
        %v1855 = vextract.low.u32 %v1854
        %v1856 = vextract.high.u32 %v1854
        %v1857 = vmul.u32.u64.compose %v1853, %v1848
        %v1858 = vextract.low.u32 %v1857
        %v1859 = vextract.high.u32 %v1857
        %v1860 = vmul.u32 %v1853, %v1844
        %v1861 = vadd.s32 %v1856, %v1858
        %vm1862 = vc.u32 %v1856, %v1858
        %v1863 = vadd.s32 %v1859, 1
        %v1864 = vsel %vm1862, %v1863, %v1859
        %v1865 = vadd.s32 %v1860, %v1864
        %v1866 = vadd.s32 %v1865, 536870912
        %v1867 = vshrl.u32 %v1866, 30
        %v1868 = vshll.u32 %v1867, 30
        %v1869 = vsub.s32 %v1865, %v1868
        %vm1870 = vcmp.lt.s32.totalorder %v1869, 0
        %v1871 = vsub.s32 0, %v1869
        %v1872 = vsel %vm1870, %v1871, %v1869
        %v1873 = vclz %v1872
        %v1874 = vsub.s32 %v1873, 2
        %vm1875 = vcmp.gt.s32.totalorder 0, %v1874
        %v1876 = vsel %vm1875, 0, %v1874
        %v1877 = vsub.s32 32, %v1876
        %v1878 = vshll.u32 %v1869, %v1876
        %v1879 = vshrl.u32 %v1861, %v1877
        %v1880 = vor.u32 %v1878, %v1879
        %v1881 = vsub.s32 4294967266, %v1876
        %v1882 = vadd.s32 %v1881, 127
        %v1883 = vshll.u32 %v1882, 23
        %v1884 = vor.u32 4788187, %v1883
        %v1885 = vand.u32 2147483647, %v1884
        %v1887 = vcvt.s32.f32 %v1880
        %v1888 = vmul.f32 %v1887, %v1885
        %v1889 = vxor.u32 %v1888, 2147483648
        %v1890 = vsel %vm1807, %v1889, %v1888
        %v1891 = vsub.s32 4, %v1867
        %v1892 = vsel %vm1807, %v1891, %v1867
        %v1893 = vsel %vm1806, %v347, %v1890
        %v1894 = vsel %vm1806, 0, %v1892
        %v1895 = vcosq.f32.pop %v1893
        %v1896 = vsinq.f32.pop %v1893
        %vm1897 = vweird.f32 %v347
        %v1898 = vadd.s32 %v1894, 3
        %v1899 = vand.u32 %v1898, 3
        %vm1900 = vcmp.lt.s32.totalorder %v1899, 2
        %vm1901 = vcmp.eq.s32.totalorder %v1899, 0
        %v1902 = vxor.u32 %v1896, 2147483648
        %v1903 = vsel %vm1901, %v1895, %v1902
        %vm1904 = vcmp.eq.s32.totalorder %v1899, 2
        %v1905 = vxor.u32 %v1895, 2147483648
        %v1906 = vsel %vm1904, %v1905, %v1896
        %v1907 = vsel %vm1900, %v1903, %v1906
        %v1908 = vsel %vm1897, nan, %v1907
        %v1909 = vand.u32 2147483647, %v348
        %vm1910 = vcmp.le.f32.partialorder %v1909, 0.7853982
        %vm1911 = vcmp.lt.s32.totalorder %v348, 0
        %v1912 = vand.u32 %v348, 2139095040
        %v1913 = vshrl.u32 %v1912, 23
        %v1914 = vsub.s32 %v1913, 127
        %v1915 = vand.u32 2147483647, %v348
        %v1916 = vand.u32 %v1915, 8388607
        %v1917 = vor.u32 %v1916, 8388608
        %v1918 = vsub.s32 0, %v1917
        %v1919 = vadd.s32 %v1914, 1
        %vm1920 = vcmp.gt.s32.totalorder %v1919, 0
        %v1921 = vsel %vm1920, %v1919, 0
        %v1922 = vshrl.u32 %v1921, 5
        %v1923 = vand.u32 %v1921, 31
        %v1924 = vsub.s32 32, %v1923
        %v1925 = vshrl.u32 683565275, %v1924
        %v1926 = vshll.u32 683565275, %v1923
        %v1927 = vshrl.u32 2475754826, %v1924
        %v1928 = vor.u32 %v1926, %v1927
        %v1929 = vshll.u32 2475754826, %v1923
        %v1930 = vshrl.u32 2131351028, %v1924
        %v1931 = vor.u32 %v1929, %v1930
        %v1932 = vshll.u32 2131351028, %v1923
        %v1933 = vshrl.u32 2102212464, %v1924
        %v1934 = vor.u32 %v1932, %v1933
        %v1935 = vshll.u32 2102212464, %v1923
        %v1936 = vshrl.u32 920167782, %v1924
        %v1937 = vor.u32 %v1935, %v1936
        %v1938 = vshll.u32 920167782, %v1923
        %v1939 = vshrl.u32 1326507024, %v1924
        %v1940 = vor.u32 %v1938, %v1939
        %vm1941 = vcmp.lt.s32.totalorder %v1922, 1
        %vm1942 = vcmp.lt.s32.totalorder %v1922, 2
        %vm1943 = vcmp.lt.s32.totalorder %v1922, 3
        %vm1944 = vcmp.lt.s32.totalorder %v1922, 4
        %v1945 = vsel %vm1941, %v1925, %v1928
        %v1946 = vsel %vm1944, %v1934, 2102212464
        %v1947 = vsel %vm1943, %v1931, %v1946
        %v1948 = vsel %vm1942, %v1945, %v1947
        %v1949 = vsel %vm1941, %v1928, %v1931
        %v1950 = vsel %vm1944, %v1937, 920167782
        %v1951 = vsel %vm1943, %v1934, %v1950
        %v1952 = vsel %vm1942, %v1949, %v1951
        %v1953 = vsel %vm1941, %v1931, %v1934
        %v1954 = vsel %vm1944, %v1940, 1326507024
        %v1955 = vsel %vm1943, %v1937, %v1954
        %v1956 = vsel %vm1942, %v1953, %v1955
        %v1957 = vshll.u32 %v1917, 8
        %v1958 = vmul.u32.u64.compose %v1957, %v1956
        %v1959 = vextract.low.u32 %v1958
        %v1960 = vextract.high.u32 %v1958
        %v1961 = vmul.u32.u64.compose %v1957, %v1952
        %v1962 = vextract.low.u32 %v1961
        %v1963 = vextract.high.u32 %v1961
        %v1964 = vmul.u32 %v1957, %v1948
        %v1965 = vadd.s32 %v1960, %v1962
        %vm1966 = vc.u32 %v1960, %v1962
        %v1967 = vadd.s32 %v1963, 1
        %v1968 = vsel %vm1966, %v1967, %v1963
        %v1969 = vadd.s32 %v1964, %v1968
        %v1970 = vadd.s32 %v1969, 536870912
        %v1971 = vshrl.u32 %v1970, 30
        %v1972 = vshll.u32 %v1971, 30
        %v1973 = vsub.s32 %v1969, %v1972
        %vm1974 = vcmp.lt.s32.totalorder %v1973, 0
        %v1975 = vsub.s32 0, %v1973
        %v1976 = vsel %vm1974, %v1975, %v1973
        %v1977 = vclz %v1976
        %v1978 = vsub.s32 %v1977, 2
        %vm1979 = vcmp.gt.s32.totalorder 0, %v1978
        %v1980 = vsel %vm1979, 0, %v1978
        %v1981 = vsub.s32 32, %v1980
        %v1982 = vshll.u32 %v1973, %v1980
        %v1983 = vshrl.u32 %v1965, %v1981
        %v1984 = vor.u32 %v1982, %v1983
        %v1985 = vsub.s32 4294967266, %v1980
        %v1986 = vadd.s32 %v1985, 127
        %v1987 = vshll.u32 %v1986, 23
        %v1988 = vor.u32 4788187, %v1987
        %v1989 = vand.u32 2147483647, %v1988
        %v1991 = vcvt.s32.f32 %v1984
        %v1992 = vmul.f32 %v1991, %v1989
        %v1993 = vxor.u32 %v1992, 2147483648
        %v1994 = vsel %vm1911, %v1993, %v1992
        %v1995 = vsub.s32 4, %v1971
        %v1996 = vsel %vm1911, %v1995, %v1971
        %v1997 = vsel %vm1910, %v348, %v1994
        %v1998 = vsel %vm1910, 0, %v1996
        %v1999 = vcosq.f32.pop %v1997
        %v2000 = vsinq.f32.pop %v1997
        %vm2001 = vweird.f32 %v348
        %v2002 = vadd.s32 %v1998, 3
        %v2003 = vand.u32 %v2002, 3
        %vm2004 = vcmp.lt.s32.totalorder %v2003, 2
        %vm2005 = vcmp.eq.s32.totalorder %v2003, 0
        %v2006 = vxor.u32 %v2000, 2147483648
        %v2007 = vsel %vm2005, %v1999, %v2006
        %vm2008 = vcmp.eq.s32.totalorder %v2003, 2
        %v2009 = vxor.u32 %v1999, 2147483648
        %v2010 = vsel %vm2008, %v2009, %v2000
        %v2011 = vsel %vm2004, %v2007, %v2010
        %v2012 = vsel %vm2001, nan, %v2011
        %2013 = vst [vmem:[%s219] sm:$0xff] %v452
        %2014 = vst [vmem:[%s219 + $0x8] sm:$0xff] %v556
        %2015 = vst [vmem:[%s219 + $0x10] sm:$0xff] %v660
        %2016 = vst [vmem:[%s219 + $0x18] sm:$0xff] %v764
        %2017 = vst [vmem:[%s219 + $0x20] sm:$0xff] %v868
        %2018 = vst [vmem:[%s219 + $0x28] sm:$0xff] %v972
        %2019 = vst [vmem:[%s219 + $0x30] sm:$0xff] %v1076
        %2020 = vst [vmem:[%s219 + $0x38] sm:$0xff] %v1180
        %2021 = vst [vmem:[%s219 + $0x40] sm:$0xff] %v1284
        %2022 = vst [vmem:[%s219 + $0x48] sm:$0xff] %v1388
        %2023 = vst [vmem:[%s219 + $0x50] sm:$0xff] %v1492
        %2024 = vst [vmem:[%s219 + $0x58] sm:$0xff] %v1596
        %2025 = vst [vmem:[%s219 + $0x60] sm:$0xff] %v1700
        %2026 = vst [vmem:[%s219 + $0x68] sm:$0xff] %v1804
        %2027 = vst [vmem:[%s219 + $0x70] sm:$0xff] %v1908
        %2028 = vst [vmem:[%s219 + $0x78] sm:$0xff] %v2012
        %v2030 = vlaneseq
        %v2031 = vshrl.u32 %v2030, 7
        %v2032 = vsub.s32 0, %v2031
        %v2033 = vrot.slane %v305, %v2032
        %v2034 = vlaneseq
        %v2035 = vshrl.u32 %v2034, 7
        %v2036 = vsub.s32 1, %v2035
        %v2037 = vrot.slane %v305, %v2036
        %v2040 = vmul.f32 %v2033, %v281
        %v2041 = vmul.f32 %v2037, %v281
        %v2042 = vmul.f32 %v2033, %v283
        %v2043 = vmul.f32 %v2037, %v283
        %v2044 = vmul.f32 %v2033, %v285
        %v2045 = vmul.f32 %v2037, %v285
        %v2046 = vmul.f32 %v2033, %v287
        %v2047 = vmul.f32 %v2037, %v287
        %v2048 = vmul.f32 %v2033, %v289
        %v2049 = vmul.f32 %v2037, %v289
        %v2050 = vmul.f32 %v2033, %v291
        %v2051 = vmul.f32 %v2037, %v291
        %v2052 = vmul.f32 %v2033, %v293
        %v2053 = vmul.f32 %v2037, %v293
        %v2054 = vmul.f32 %v2033, %v295
        %v2055 = vmul.f32 %v2037, %v295
        %v2056 = vadd.f32 %v2040, %v296
        %v2057 = vadd.f32 %v2041, %v296
        %v2058 = vadd.f32 %v2042, %v297
        %v2059 = vadd.f32 %v2043, %v297
        %v2060 = vadd.f32 %v2044, %v298
        %v2061 = vadd.f32 %v2045, %v298
        %v2062 = vadd.f32 %v2046, %v299
        %v2063 = vadd.f32 %v2047, %v299
        %v2064 = vadd.f32 %v2048, %v300
        %v2065 = vadd.f32 %v2049, %v300
        %v2066 = vadd.f32 %v2050, %v301
        %v2067 = vadd.f32 %v2051, %v301
        %v2068 = vadd.f32 %v2052, %v302
        %v2069 = vadd.f32 %v2053, %v302
        %v2070 = vadd.f32 %v2054, %v303
        %v2071 = vadd.f32 %v2055, %v303
        %v2072 = vand.u32 2147483647, %v2056
        %vm2073 = vcmp.le.f32.partialorder %v2072, 0.7853982
        %vm2074 = vcmp.lt.s32.totalorder %v2056, 0
        %v2075 = vand.u32 %v2056, 2139095040
        %v2076 = vshrl.u32 %v2075, 23
        %v2077 = vsub.s32 %v2076, 127
        %v2078 = vand.u32 2147483647, %v2056
        %v2079 = vand.u32 %v2078, 8388607
        %v2080 = vor.u32 %v2079, 8388608
        %v2081 = vsub.s32 0, %v2080
        %v2082 = vadd.s32 %v2077, 1
        %vm2083 = vcmp.gt.s32.totalorder %v2082, 0
        %v2084 = vsel %vm2083, %v2082, 0
        %v2085 = vshrl.u32 %v2084, 5
        %v2086 = vand.u32 %v2084, 31
        %v2087 = vsub.s32 32, %v2086
        %v2088 = vshrl.u32 683565275, %v2087
        %v2089 = vshll.u32 683565275, %v2086
        %v2090 = vshrl.u32 2475754826, %v2087
        %v2091 = vor.u32 %v2089, %v2090
        %v2092 = vshll.u32 2475754826, %v2086
        %v2093 = vshrl.u32 2131351028, %v2087
        %v2094 = vor.u32 %v2092, %v2093
        %v2095 = vshll.u32 2131351028, %v2086
        %v2096 = vshrl.u32 2102212464, %v2087
        %v2097 = vor.u32 %v2095, %v2096
        %v2098 = vshll.u32 2102212464, %v2086
        %v2099 = vshrl.u32 920167782, %v2087
        %v2100 = vor.u32 %v2098, %v2099
        %v2101 = vshll.u32 920167782, %v2086
        %v2102 = vshrl.u32 1326507024, %v2087
        %v2103 = vor.u32 %v2101, %v2102
        %vm2104 = vcmp.lt.s32.totalorder %v2085, 1
        %vm2105 = vcmp.lt.s32.totalorder %v2085, 2
        %vm2106 = vcmp.lt.s32.totalorder %v2085, 3
        %vm2107 = vcmp.lt.s32.totalorder %v2085, 4
        %v2108 = vsel %vm2104, %v2088, %v2091
        %v2109 = vsel %vm2107, %v2097, 2102212464
        %v2110 = vsel %vm2106, %v2094, %v2109
        %v2111 = vsel %vm2105, %v2108, %v2110
        %v2112 = vsel %vm2104, %v2091, %v2094
        %v2113 = vsel %vm2107, %v2100, 920167782
        %v2114 = vsel %vm2106, %v2097, %v2113
        %v2115 = vsel %vm2105, %v2112, %v2114
        %v2116 = vsel %vm2104, %v2094, %v2097
        %v2117 = vsel %vm2107, %v2103, 1326507024
        %v2118 = vsel %vm2106, %v2100, %v2117
        %v2119 = vsel %vm2105, %v2116, %v2118
        %v2120 = vshll.u32 %v2080, 8
        %v2121 = vmul.u32.u64.compose %v2120, %v2119
        %v2122 = vextract.low.u32 %v2121
        %v2123 = vextract.high.u32 %v2121
        %v2124 = vmul.u32.u64.compose %v2120, %v2115
        %v2125 = vextract.low.u32 %v2124
        %v2126 = vextract.high.u32 %v2124
        %v2127 = vmul.u32 %v2120, %v2111
        %v2128 = vadd.s32 %v2123, %v2125
        %vm2129 = vc.u32 %v2123, %v2125
        %v2130 = vadd.s32 %v2126, 1
        %v2131 = vsel %vm2129, %v2130, %v2126
        %v2132 = vadd.s32 %v2127, %v2131
        %v2133 = vadd.s32 %v2132, 536870912
        %v2134 = vshrl.u32 %v2133, 30
        %v2135 = vshll.u32 %v2134, 30
        %v2136 = vsub.s32 %v2132, %v2135
        %vm2137 = vcmp.lt.s32.totalorder %v2136, 0
        %v2138 = vsub.s32 0, %v2136
        %v2139 = vsel %vm2137, %v2138, %v2136
        %v2140 = vclz %v2139
        %v2141 = vsub.s32 %v2140, 2
        %vm2142 = vcmp.gt.s32.totalorder 0, %v2141
        %v2143 = vsel %vm2142, 0, %v2141
        %v2144 = vsub.s32 32, %v2143
        %v2145 = vshll.u32 %v2136, %v2143
        %v2146 = vshrl.u32 %v2128, %v2144
        %v2147 = vor.u32 %v2145, %v2146
        %v2148 = vsub.s32 4294967266, %v2143
        %v2149 = vadd.s32 %v2148, 127
        %v2150 = vshll.u32 %v2149, 23
        %v2151 = vor.u32 4788187, %v2150
        %v2152 = vand.u32 2147483647, %v2151
        %v2154 = vcvt.s32.f32 %v2147
        %v2155 = vmul.f32 %v2154, %v2152
        %v2156 = vxor.u32 %v2155, 2147483648
        %v2157 = vsel %vm2074, %v2156, %v2155
        %v2158 = vsub.s32 4, %v2134
        %v2159 = vsel %vm2074, %v2158, %v2134
        %v2160 = vsel %vm2073, %v2056, %v2157
        %v2161 = vsel %vm2073, 0, %v2159
        %v2162 = vcosq.f32.pop %v2160
        %v2163 = vsinq.f32.pop %v2160
        %vm2164 = vweird.f32 %v2056
        %v2165 = vadd.s32 %v2161, 3
        %v2166 = vand.u32 %v2165, 3
        %vm2167 = vcmp.lt.s32.totalorder %v2166, 2
        %vm2168 = vcmp.eq.s32.totalorder %v2166, 0
        %v2169 = vxor.u32 %v2163, 2147483648
        %v2170 = vsel %vm2168, %v2162, %v2169
        %vm2171 = vcmp.eq.s32.totalorder %v2166, 2
        %v2172 = vxor.u32 %v2162, 2147483648
        %v2173 = vsel %vm2171, %v2172, %v2163
        %v2174 = vsel %vm2167, %v2170, %v2173
        %v2175 = vsel %vm2164, nan, %v2174
        %v2176 = vand.u32 2147483647, %v2057
        %vm2177 = vcmp.le.f32.partialorder %v2176, 0.7853982
        %vm2178 = vcmp.lt.s32.totalorder %v2057, 0
        %v2179 = vand.u32 %v2057, 2139095040
        %v2180 = vshrl.u32 %v2179, 23
        %v2181 = vsub.s32 %v2180, 127
        %v2182 = vand.u32 2147483647, %v2057
        %v2183 = vand.u32 %v2182, 8388607
        %v2184 = vor.u32 %v2183, 8388608
        %v2185 = vsub.s32 0, %v2184
        %v2186 = vadd.s32 %v2181, 1
        %vm2187 = vcmp.gt.s32.totalorder %v2186, 0
        %v2188 = vsel %vm2187, %v2186, 0
        %v2189 = vshrl.u32 %v2188, 5
        %v2190 = vand.u32 %v2188, 31
        %v2191 = vsub.s32 32, %v2190
        %v2192 = vshrl.u32 683565275, %v2191
        %v2193 = vshll.u32 683565275, %v2190
        %v2194 = vshrl.u32 2475754826, %v2191
        %v2195 = vor.u32 %v2193, %v2194
        %v2196 = vshll.u32 2475754826, %v2190
        %v2197 = vshrl.u32 2131351028, %v2191
        %v2198 = vor.u32 %v2196, %v2197
        %v2199 = vshll.u32 2131351028, %v2190
        %v2200 = vshrl.u32 2102212464, %v2191
        %v2201 = vor.u32 %v2199, %v2200
        %v2202 = vshll.u32 2102212464, %v2190
        %v2203 = vshrl.u32 920167782, %v2191
        %v2204 = vor.u32 %v2202, %v2203
        %v2205 = vshll.u32 920167782, %v2190
        %v2206 = vshrl.u32 1326507024, %v2191
        %v2207 = vor.u32 %v2205, %v2206
        %vm2208 = vcmp.lt.s32.totalorder %v2189, 1
        %vm2209 = vcmp.lt.s32.totalorder %v2189, 2
        %vm2210 = vcmp.lt.s32.totalorder %v2189, 3
        %vm2211 = vcmp.lt.s32.totalorder %v2189, 4
        %v2212 = vsel %vm2208, %v2192, %v2195
        %v2213 = vsel %vm2211, %v2201, 2102212464
        %v2214 = vsel %vm2210, %v2198, %v2213
        %v2215 = vsel %vm2209, %v2212, %v2214
        %v2216 = vsel %vm2208, %v2195, %v2198
        %v2217 = vsel %vm2211, %v2204, 920167782
        %v2218 = vsel %vm2210, %v2201, %v2217
        %v2219 = vsel %vm2209, %v2216, %v2218
        %v2220 = vsel %vm2208, %v2198, %v2201
        %v2221 = vsel %vm2211, %v2207, 1326507024
        %v2222 = vsel %vm2210, %v2204, %v2221
        %v2223 = vsel %vm2209, %v2220, %v2222
        %v2224 = vshll.u32 %v2184, 8
        %v2225 = vmul.u32.u64.compose %v2224, %v2223
        %v2226 = vextract.low.u32 %v2225
        %v2227 = vextract.high.u32 %v2225
        %v2228 = vmul.u32.u64.compose %v2224, %v2219
        %v2229 = vextract.low.u32 %v2228
        %v2230 = vextract.high.u32 %v2228
        %v2231 = vmul.u32 %v2224, %v2215
        %v2232 = vadd.s32 %v2227, %v2229
        %vm2233 = vc.u32 %v2227, %v2229
        %v2234 = vadd.s32 %v2230, 1
        %v2235 = vsel %vm2233, %v2234, %v2230
        %v2236 = vadd.s32 %v2231, %v2235
        %v2237 = vadd.s32 %v2236, 536870912
        %v2238 = vshrl.u32 %v2237, 30
        %v2239 = vshll.u32 %v2238, 30
        %v2240 = vsub.s32 %v2236, %v2239
        %vm2241 = vcmp.lt.s32.totalorder %v2240, 0
        %v2242 = vsub.s32 0, %v2240
        %v2243 = vsel %vm2241, %v2242, %v2240
        %v2244 = vclz %v2243
        %v2245 = vsub.s32 %v2244, 2
        %vm2246 = vcmp.gt.s32.totalorder 0, %v2245
        %v2247 = vsel %vm2246, 0, %v2245
        %v2248 = vsub.s32 32, %v2247
        %v2249 = vshll.u32 %v2240, %v2247
        %v2250 = vshrl.u32 %v2232, %v2248
        %v2251 = vor.u32 %v2249, %v2250
        %v2252 = vsub.s32 4294967266, %v2247
        %v2253 = vadd.s32 %v2252, 127
        %v2254 = vshll.u32 %v2253, 23
        %v2255 = vor.u32 4788187, %v2254
        %v2256 = vand.u32 2147483647, %v2255
        %v2258 = vcvt.s32.f32 %v2251
        %v2259 = vmul.f32 %v2258, %v2256
        %v2260 = vxor.u32 %v2259, 2147483648
        %v2261 = vsel %vm2178, %v2260, %v2259
        %v2262 = vsub.s32 4, %v2238
        %v2263 = vsel %vm2178, %v2262, %v2238
        %v2264 = vsel %vm2177, %v2057, %v2261
        %v2265 = vsel %vm2177, 0, %v2263
        %v2266 = vcosq.f32.pop %v2264
        %v2267 = vsinq.f32.pop %v2264
        %vm2268 = vweird.f32 %v2057
        %v2269 = vadd.s32 %v2265, 3
        %v2270 = vand.u32 %v2269, 3
        %vm2271 = vcmp.lt.s32.totalorder %v2270, 2
        %vm2272 = vcmp.eq.s32.totalorder %v2270, 0
        %v2273 = vxor.u32 %v2267, 2147483648
        %v2274 = vsel %vm2272, %v2266, %v2273
        %vm2275 = vcmp.eq.s32.totalorder %v2270, 2
        %v2276 = vxor.u32 %v2266, 2147483648
        %v2277 = vsel %vm2275, %v2276, %v2267
        %v2278 = vsel %vm2271, %v2274, %v2277
        %v2279 = vsel %vm2268, nan, %v2278
        %v2280 = vand.u32 2147483647, %v2058
        %vm2281 = vcmp.le.f32.partialorder %v2280, 0.7853982
        %vm2282 = vcmp.lt.s32.totalorder %v2058, 0
        %v2283 = vand.u32 %v2058, 2139095040
        %v2284 = vshrl.u32 %v2283, 23
        %v2285 = vsub.s32 %v2284, 127
        %v2286 = vand.u32 2147483647, %v2058
        %v2287 = vand.u32 %v2286, 8388607
        %v2288 = vor.u32 %v2287, 8388608
        %v2289 = vsub.s32 0, %v2288
        %v2290 = vadd.s32 %v2285, 1
        %vm2291 = vcmp.gt.s32.totalorder %v2290, 0
        %v2292 = vsel %vm2291, %v2290, 0
        %v2293 = vshrl.u32 %v2292, 5
        %v2294 = vand.u32 %v2292, 31
        %v2295 = vsub.s32 32, %v2294
        %v2296 = vshrl.u32 683565275, %v2295
        %v2297 = vshll.u32 683565275, %v2294
        %v2298 = vshrl.u32 2475754826, %v2295
        %v2299 = vor.u32 %v2297, %v2298
        %v2300 = vshll.u32 2475754826, %v2294
        %v2301 = vshrl.u32 2131351028, %v2295
        %v2302 = vor.u32 %v2300, %v2301
        %v2303 = vshll.u32 2131351028, %v2294
        %v2304 = vshrl.u32 2102212464, %v2295
        %v2305 = vor.u32 %v2303, %v2304
        %v2306 = vshll.u32 2102212464, %v2294
        %v2307 = vshrl.u32 920167782, %v2295
        %v2308 = vor.u32 %v2306, %v2307
        %v2309 = vshll.u32 920167782, %v2294
        %v2310 = vshrl.u32 1326507024, %v2295
        %v2311 = vor.u32 %v2309, %v2310
        %vm2312 = vcmp.lt.s32.totalorder %v2293, 1
        %vm2313 = vcmp.lt.s32.totalorder %v2293, 2
        %vm2314 = vcmp.lt.s32.totalorder %v2293, 3
        %vm2315 = vcmp.lt.s32.totalorder %v2293, 4
        %v2316 = vsel %vm2312, %v2296, %v2299
        %v2317 = vsel %vm2315, %v2305, 2102212464
        %v2318 = vsel %vm2314, %v2302, %v2317
        %v2319 = vsel %vm2313, %v2316, %v2318
        %v2320 = vsel %vm2312, %v2299, %v2302
        %v2321 = vsel %vm2315, %v2308, 920167782
        %v2322 = vsel %vm2314, %v2305, %v2321
        %v2323 = vsel %vm2313, %v2320, %v2322
        %v2324 = vsel %vm2312, %v2302, %v2305
        %v2325 = vsel %vm2315, %v2311, 1326507024
        %v2326 = vsel %vm2314, %v2308, %v2325
        %v2327 = vsel %vm2313, %v2324, %v2326
        %v2328 = vshll.u32 %v2288, 8
        %v2329 = vmul.u32.u64.compose %v2328, %v2327
        %v2330 = vextract.low.u32 %v2329
        %v2331 = vextract.high.u32 %v2329
        %v2332 = vmul.u32.u64.compose %v2328, %v2323
        %v2333 = vextract.low.u32 %v2332
        %v2334 = vextract.high.u32 %v2332
        %v2335 = vmul.u32 %v2328, %v2319
        %v2336 = vadd.s32 %v2331, %v2333
        %vm2337 = vc.u32 %v2331, %v2333
        %v2338 = vadd.s32 %v2334, 1
        %v2339 = vsel %vm2337, %v2338, %v2334
        %v2340 = vadd.s32 %v2335, %v2339
        %v2341 = vadd.s32 %v2340, 536870912
        %v2342 = vshrl.u32 %v2341, 30
        %v2343 = vshll.u32 %v2342, 30
        %v2344 = vsub.s32 %v2340, %v2343
        %vm2345 = vcmp.lt.s32.totalorder %v2344, 0
        %v2346 = vsub.s32 0, %v2344
        %v2347 = vsel %vm2345, %v2346, %v2344
        %v2348 = vclz %v2347
        %v2349 = vsub.s32 %v2348, 2
        %vm2350 = vcmp.gt.s32.totalorder 0, %v2349
        %v2351 = vsel %vm2350, 0, %v2349
        %v2352 = vsub.s32 32, %v2351
        %v2353 = vshll.u32 %v2344, %v2351
        %v2354 = vshrl.u32 %v2336, %v2352
        %v2355 = vor.u32 %v2353, %v2354
        %v2356 = vsub.s32 4294967266, %v2351
        %v2357 = vadd.s32 %v2356, 127
        %v2358 = vshll.u32 %v2357, 23
        %v2359 = vor.u32 4788187, %v2358
        %v2360 = vand.u32 2147483647, %v2359
        %v2362 = vcvt.s32.f32 %v2355
        %v2363 = vmul.f32 %v2362, %v2360
        %v2364 = vxor.u32 %v2363, 2147483648
        %v2365 = vsel %vm2282, %v2364, %v2363
        %v2366 = vsub.s32 4, %v2342
        %v2367 = vsel %vm2282, %v2366, %v2342
        %v2368 = vsel %vm2281, %v2058, %v2365
        %v2369 = vsel %vm2281, 0, %v2367
        %v2370 = vcosq.f32.pop %v2368
        %v2371 = vsinq.f32.pop %v2368
        %vm2372 = vweird.f32 %v2058
        %v2373 = vadd.s32 %v2369, 3
        %v2374 = vand.u32 %v2373, 3
        %vm2375 = vcmp.lt.s32.totalorder %v2374, 2
        %vm2376 = vcmp.eq.s32.totalorder %v2374, 0
        %v2377 = vxor.u32 %v2371, 2147483648
        %v2378 = vsel %vm2376, %v2370, %v2377
        %vm2379 = vcmp.eq.s32.totalorder %v2374, 2
        %v2380 = vxor.u32 %v2370, 2147483648
        %v2381 = vsel %vm2379, %v2380, %v2371
        %v2382 = vsel %vm2375, %v2378, %v2381
        %v2383 = vsel %vm2372, nan, %v2382
        %v2384 = vand.u32 2147483647, %v2059
        %vm2385 = vcmp.le.f32.partialorder %v2384, 0.7853982
        %vm2386 = vcmp.lt.s32.totalorder %v2059, 0
        %v2387 = vand.u32 %v2059, 2139095040
        %v2388 = vshrl.u32 %v2387, 23
        %v2389 = vsub.s32 %v2388, 127
        %v2390 = vand.u32 2147483647, %v2059
        %v2391 = vand.u32 %v2390, 8388607
        %v2392 = vor.u32 %v2391, 8388608
        %v2393 = vsub.s32 0, %v2392
        %v2394 = vadd.s32 %v2389, 1
        %vm2395 = vcmp.gt.s32.totalorder %v2394, 0
        %v2396 = vsel %vm2395, %v2394, 0
        %v2397 = vshrl.u32 %v2396, 5
        %v2398 = vand.u32 %v2396, 31
        %v2399 = vsub.s32 32, %v2398
        %v2400 = vshrl.u32 683565275, %v2399
        %v2401 = vshll.u32 683565275, %v2398
        %v2402 = vshrl.u32 2475754826, %v2399
        %v2403 = vor.u32 %v2401, %v2402
        %v2404 = vshll.u32 2475754826, %v2398
        %v2405 = vshrl.u32 2131351028, %v2399
        %v2406 = vor.u32 %v2404, %v2405
        %v2407 = vshll.u32 2131351028, %v2398
        %v2408 = vshrl.u32 2102212464, %v2399
        %v2409 = vor.u32 %v2407, %v2408
        %v2410 = vshll.u32 2102212464, %v2398
        %v2411 = vshrl.u32 920167782, %v2399
        %v2412 = vor.u32 %v2410, %v2411
        %v2413 = vshll.u32 920167782, %v2398
        %v2414 = vshrl.u32 1326507024, %v2399
        %v2415 = vor.u32 %v2413, %v2414
        %vm2416 = vcmp.lt.s32.totalorder %v2397, 1
        %vm2417 = vcmp.lt.s32.totalorder %v2397, 2
        %vm2418 = vcmp.lt.s32.totalorder %v2397, 3
        %vm2419 = vcmp.lt.s32.totalorder %v2397, 4
        %v2420 = vsel %vm2416, %v2400, %v2403
        %v2421 = vsel %vm2419, %v2409, 2102212464
        %v2422 = vsel %vm2418, %v2406, %v2421
        %v2423 = vsel %vm2417, %v2420, %v2422
        %v2424 = vsel %vm2416, %v2403, %v2406
        %v2425 = vsel %vm2419, %v2412, 920167782
        %v2426 = vsel %vm2418, %v2409, %v2425
        %v2427 = vsel %vm2417, %v2424, %v2426
        %v2428 = vsel %vm2416, %v2406, %v2409
        %v2429 = vsel %vm2419, %v2415, 1326507024
        %v2430 = vsel %vm2418, %v2412, %v2429
        %v2431 = vsel %vm2417, %v2428, %v2430
        %v2432 = vshll.u32 %v2392, 8
        %v2433 = vmul.u32.u64.compose %v2432, %v2431
        %v2434 = vextract.low.u32 %v2433
        %v2435 = vextract.high.u32 %v2433
        %v2436 = vmul.u32.u64.compose %v2432, %v2427
        %v2437 = vextract.low.u32 %v2436
        %v2438 = vextract.high.u32 %v2436
        %v2439 = vmul.u32 %v2432, %v2423
        %v2440 = vadd.s32 %v2435, %v2437
        %vm2441 = vc.u32 %v2435, %v2437
        %v2442 = vadd.s32 %v2438, 1
        %v2443 = vsel %vm2441, %v2442, %v2438
        %v2444 = vadd.s32 %v2439, %v2443
        %v2445 = vadd.s32 %v2444, 536870912
        %v2446 = vshrl.u32 %v2445, 30
        %v2447 = vshll.u32 %v2446, 30
        %v2448 = vsub.s32 %v2444, %v2447
        %vm2449 = vcmp.lt.s32.totalorder %v2448, 0
        %v2450 = vsub.s32 0, %v2448
        %v2451 = vsel %vm2449, %v2450, %v2448
        %v2452 = vclz %v2451
        %v2453 = vsub.s32 %v2452, 2
        %vm2454 = vcmp.gt.s32.totalorder 0, %v2453
        %v2455 = vsel %vm2454, 0, %v2453
        %v2456 = vsub.s32 32, %v2455
        %v2457 = vshll.u32 %v2448, %v2455
        %v2458 = vshrl.u32 %v2440, %v2456
        %v2459 = vor.u32 %v2457, %v2458
        %v2460 = vsub.s32 4294967266, %v2455
        %v2461 = vadd.s32 %v2460, 127
        %v2462 = vshll.u32 %v2461, 23
        %v2463 = vor.u32 4788187, %v2462
        %v2464 = vand.u32 2147483647, %v2463
        %v2466 = vcvt.s32.f32 %v2459
        %v2467 = vmul.f32 %v2466, %v2464
        %v2468 = vxor.u32 %v2467, 2147483648
        %v2469 = vsel %vm2386, %v2468, %v2467
        %v2470 = vsub.s32 4, %v2446
        %v2471 = vsel %vm2386, %v2470, %v2446
        %v2472 = vsel %vm2385, %v2059, %v2469
        %v2473 = vsel %vm2385, 0, %v2471
        %v2474 = vcosq.f32.pop %v2472
        %v2475 = vsinq.f32.pop %v2472
        %vm2476 = vweird.f32 %v2059
        %v2477 = vadd.s32 %v2473, 3
        %v2478 = vand.u32 %v2477, 3
        %vm2479 = vcmp.lt.s32.totalorder %v2478, 2
        %vm2480 = vcmp.eq.s32.totalorder %v2478, 0
        %v2481 = vxor.u32 %v2475, 2147483648
        %v2482 = vsel %vm2480, %v2474, %v2481
        %vm2483 = vcmp.eq.s32.totalorder %v2478, 2
        %v2484 = vxor.u32 %v2474, 2147483648
        %v2485 = vsel %vm2483, %v2484, %v2475
        %v2486 = vsel %vm2479, %v2482, %v2485
        %v2487 = vsel %vm2476, nan, %v2486
        %v2488 = vand.u32 2147483647, %v2060
        %vm2489 = vcmp.le.f32.partialorder %v2488, 0.7853982
        %vm2490 = vcmp.lt.s32.totalorder %v2060, 0
        %v2491 = vand.u32 %v2060, 2139095040
        %v2492 = vshrl.u32 %v2491, 23
        %v2493 = vsub.s32 %v2492, 127
        %v2494 = vand.u32 2147483647, %v2060
        %v2495 = vand.u32 %v2494, 8388607
        %v2496 = vor.u32 %v2495, 8388608
        %v2497 = vsub.s32 0, %v2496
        %v2498 = vadd.s32 %v2493, 1
        %vm2499 = vcmp.gt.s32.totalorder %v2498, 0
        %v2500 = vsel %vm2499, %v2498, 0
        %v2501 = vshrl.u32 %v2500, 5
        %v2502 = vand.u32 %v2500, 31
        %v2503 = vsub.s32 32, %v2502
        %v2504 = vshrl.u32 683565275, %v2503
        %v2505 = vshll.u32 683565275, %v2502
        %v2506 = vshrl.u32 2475754826, %v2503
        %v2507 = vor.u32 %v2505, %v2506
        %v2508 = vshll.u32 2475754826, %v2502
        %v2509 = vshrl.u32 2131351028, %v2503
        %v2510 = vor.u32 %v2508, %v2509
        %v2511 = vshll.u32 2131351028, %v2502
        %v2512 = vshrl.u32 2102212464, %v2503
        %v2513 = vor.u32 %v2511, %v2512
        %v2514 = vshll.u32 2102212464, %v2502
        %v2515 = vshrl.u32 920167782, %v2503
        %v2516 = vor.u32 %v2514, %v2515
        %v2517 = vshll.u32 920167782, %v2502
        %v2518 = vshrl.u32 1326507024, %v2503
        %v2519 = vor.u32 %v2517, %v2518
        %vm2520 = vcmp.lt.s32.totalorder %v2501, 1
        %vm2521 = vcmp.lt.s32.totalorder %v2501, 2
        %vm2522 = vcmp.lt.s32.totalorder %v2501, 3
        %vm2523 = vcmp.lt.s32.totalorder %v2501, 4
        %v2524 = vsel %vm2520, %v2504, %v2507
        %v2525 = vsel %vm2523, %v2513, 2102212464
        %v2526 = vsel %vm2522, %v2510, %v2525
        %v2527 = vsel %vm2521, %v2524, %v2526
        %v2528 = vsel %vm2520, %v2507, %v2510
        %v2529 = vsel %vm2523, %v2516, 920167782
        %v2530 = vsel %vm2522, %v2513, %v2529
        %v2531 = vsel %vm2521, %v2528, %v2530
        %v2532 = vsel %vm2520, %v2510, %v2513
        %v2533 = vsel %vm2523, %v2519, 1326507024
        %v2534 = vsel %vm2522, %v2516, %v2533
        %v2535 = vsel %vm2521, %v2532, %v2534
        %v2536 = vshll.u32 %v2496, 8
        %v2537 = vmul.u32.u64.compose %v2536, %v2535
        %v2538 = vextract.low.u32 %v2537
        %v2539 = vextract.high.u32 %v2537
        %v2540 = vmul.u32.u64.compose %v2536, %v2531
        %v2541 = vextract.low.u32 %v2540
        %v2542 = vextract.high.u32 %v2540
        %v2543 = vmul.u32 %v2536, %v2527
        %v2544 = vadd.s32 %v2539, %v2541
        %vm2545 = vc.u32 %v2539, %v2541
        %v2546 = vadd.s32 %v2542, 1
        %v2547 = vsel %vm2545, %v2546, %v2542
        %v2548 = vadd.s32 %v2543, %v2547
        %v2549 = vadd.s32 %v2548, 536870912
        %v2550 = vshrl.u32 %v2549, 30
        %v2551 = vshll.u32 %v2550, 30
        %v2552 = vsub.s32 %v2548, %v2551
        %vm2553 = vcmp.lt.s32.totalorder %v2552, 0
        %v2554 = vsub.s32 0, %v2552
        %v2555 = vsel %vm2553, %v2554, %v2552
        %v2556 = vclz %v2555
        %v2557 = vsub.s32 %v2556, 2
        %vm2558 = vcmp.gt.s32.totalorder 0, %v2557
        %v2559 = vsel %vm2558, 0, %v2557
        %v2560 = vsub.s32 32, %v2559
        %v2561 = vshll.u32 %v2552, %v2559
        %v2562 = vshrl.u32 %v2544, %v2560
        %v2563 = vor.u32 %v2561, %v2562
        %v2564 = vsub.s32 4294967266, %v2559
        %v2565 = vadd.s32 %v2564, 127
        %v2566 = vshll.u32 %v2565, 23
        %v2567 = vor.u32 4788187, %v2566
        %v2568 = vand.u32 2147483647, %v2567
        %v2570 = vcvt.s32.f32 %v2563
        %v2571 = vmul.f32 %v2570, %v2568
        %v2572 = vxor.u32 %v2571, 2147483648
        %v2573 = vsel %vm2490, %v2572, %v2571
        %v2574 = vsub.s32 4, %v2550
        %v2575 = vsel %vm2490, %v2574, %v2550
        %v2576 = vsel %vm2489, %v2060, %v2573
        %v2577 = vsel %vm2489, 0, %v2575
        %v2578 = vcosq.f32.pop %v2576
        %v2579 = vsinq.f32.pop %v2576
        %vm2580 = vweird.f32 %v2060
        %v2581 = vadd.s32 %v2577, 3
        %v2582 = vand.u32 %v2581, 3
        %vm2583 = vcmp.lt.s32.totalorder %v2582, 2
        %vm2584 = vcmp.eq.s32.totalorder %v2582, 0
        %v2585 = vxor.u32 %v2579, 2147483648
        %v2586 = vsel %vm2584, %v2578, %v2585
        %vm2587 = vcmp.eq.s32.totalorder %v2582, 2
        %v2588 = vxor.u32 %v2578, 2147483648
        %v2589 = vsel %vm2587, %v2588, %v2579
        %v2590 = vsel %vm2583, %v2586, %v2589
        %v2591 = vsel %vm2580, nan, %v2590
        %v2592 = vand.u32 2147483647, %v2061
        %vm2593 = vcmp.le.f32.partialorder %v2592, 0.7853982
        %vm2594 = vcmp.lt.s32.totalorder %v2061, 0
        %v2595 = vand.u32 %v2061, 2139095040
        %v2596 = vshrl.u32 %v2595, 23
        %v2597 = vsub.s32 %v2596, 127
        %v2598 = vand.u32 2147483647, %v2061
        %v2599 = vand.u32 %v2598, 8388607
        %v2600 = vor.u32 %v2599, 8388608
        %v2601 = vsub.s32 0, %v2600
        %v2602 = vadd.s32 %v2597, 1
        %vm2603 = vcmp.gt.s32.totalorder %v2602, 0
        %v2604 = vsel %vm2603, %v2602, 0
        %v2605 = vshrl.u32 %v2604, 5
        %v2606 = vand.u32 %v2604, 31
        %v2607 = vsub.s32 32, %v2606
        %v2608 = vshrl.u32 683565275, %v2607
        %v2609 = vshll.u32 683565275, %v2606
        %v2610 = vshrl.u32 2475754826, %v2607
        %v2611 = vor.u32 %v2609, %v2610
        %v2612 = vshll.u32 2475754826, %v2606
        %v2613 = vshrl.u32 2131351028, %v2607
        %v2614 = vor.u32 %v2612, %v2613
        %v2615 = vshll.u32 2131351028, %v2606
        %v2616 = vshrl.u32 2102212464, %v2607
        %v2617 = vor.u32 %v2615, %v2616
        %v2618 = vshll.u32 2102212464, %v2606
        %v2619 = vshrl.u32 920167782, %v2607
        %v2620 = vor.u32 %v2618, %v2619
        %v2621 = vshll.u32 920167782, %v2606
        %v2622 = vshrl.u32 1326507024, %v2607
        %v2623 = vor.u32 %v2621, %v2622
        %vm2624 = vcmp.lt.s32.totalorder %v2605, 1
        %vm2625 = vcmp.lt.s32.totalorder %v2605, 2
        %vm2626 = vcmp.lt.s32.totalorder %v2605, 3
        %vm2627 = vcmp.lt.s32.totalorder %v2605, 4
        %v2628 = vsel %vm2624, %v2608, %v2611
        %v2629 = vsel %vm2627, %v2617, 2102212464
        %v2630 = vsel %vm2626, %v2614, %v2629
        %v2631 = vsel %vm2625, %v2628, %v2630
        %v2632 = vsel %vm2624, %v2611, %v2614
        %v2633 = vsel %vm2627, %v2620, 920167782
        %v2634 = vsel %vm2626, %v2617, %v2633
        %v2635 = vsel %vm2625, %v2632, %v2634
        %v2636 = vsel %vm2624, %v2614, %v2617
        %v2637 = vsel %vm2627, %v2623, 1326507024
        %v2638 = vsel %vm2626, %v2620, %v2637
        %v2639 = vsel %vm2625, %v2636, %v2638
        %v2640 = vshll.u32 %v2600, 8
        %v2641 = vmul.u32.u64.compose %v2640, %v2639
        %v2642 = vextract.low.u32 %v2641
        %v2643 = vextract.high.u32 %v2641
        %v2644 = vmul.u32.u64.compose %v2640, %v2635
        %v2645 = vextract.low.u32 %v2644
        %v2646 = vextract.high.u32 %v2644
        %v2647 = vmul.u32 %v2640, %v2631
        %v2648 = vadd.s32 %v2643, %v2645
        %vm2649 = vc.u32 %v2643, %v2645
        %v2650 = vadd.s32 %v2646, 1
        %v2651 = vsel %vm2649, %v2650, %v2646
        %v2652 = vadd.s32 %v2647, %v2651
        %v2653 = vadd.s32 %v2652, 536870912
        %v2654 = vshrl.u32 %v2653, 30
        %v2655 = vshll.u32 %v2654, 30
        %v2656 = vsub.s32 %v2652, %v2655
        %vm2657 = vcmp.lt.s32.totalorder %v2656, 0
        %v2658 = vsub.s32 0, %v2656
        %v2659 = vsel %vm2657, %v2658, %v2656
        %v2660 = vclz %v2659
        %v2661 = vsub.s32 %v2660, 2
        %vm2662 = vcmp.gt.s32.totalorder 0, %v2661
        %v2663 = vsel %vm2662, 0, %v2661
        %v2664 = vsub.s32 32, %v2663
        %v2665 = vshll.u32 %v2656, %v2663
        %v2666 = vshrl.u32 %v2648, %v2664
        %v2667 = vor.u32 %v2665, %v2666
        %v2668 = vsub.s32 4294967266, %v2663
        %v2669 = vadd.s32 %v2668, 127
        %v2670 = vshll.u32 %v2669, 23
        %v2671 = vor.u32 4788187, %v2670
        %v2672 = vand.u32 2147483647, %v2671
        %v2674 = vcvt.s32.f32 %v2667
        %v2675 = vmul.f32 %v2674, %v2672
        %v2676 = vxor.u32 %v2675, 2147483648
        %v2677 = vsel %vm2594, %v2676, %v2675
        %v2678 = vsub.s32 4, %v2654
        %v2679 = vsel %vm2594, %v2678, %v2654
        %v2680 = vsel %vm2593, %v2061, %v2677
        %v2681 = vsel %vm2593, 0, %v2679
        %v2682 = vcosq.f32.pop %v2680
        %v2683 = vsinq.f32.pop %v2680
        %vm2684 = vweird.f32 %v2061
        %v2685 = vadd.s32 %v2681, 3
        %v2686 = vand.u32 %v2685, 3
        %vm2687 = vcmp.lt.s32.totalorder %v2686, 2
        %vm2688 = vcmp.eq.s32.totalorder %v2686, 0
        %v2689 = vxor.u32 %v2683, 2147483648
        %v2690 = vsel %vm2688, %v2682, %v2689
        %vm2691 = vcmp.eq.s32.totalorder %v2686, 2
        %v2692 = vxor.u32 %v2682, 2147483648
        %v2693 = vsel %vm2691, %v2692, %v2683
        %v2694 = vsel %vm2687, %v2690, %v2693
        %v2695 = vsel %vm2684, nan, %v2694
        %v2696 = vand.u32 2147483647, %v2062
        %vm2697 = vcmp.le.f32.partialorder %v2696, 0.7853982
        %vm2698 = vcmp.lt.s32.totalorder %v2062, 0
        %v2699 = vand.u32 %v2062, 2139095040
        %v2700 = vshrl.u32 %v2699, 23
        %v2701 = vsub.s32 %v2700, 127
        %v2702 = vand.u32 2147483647, %v2062
        %v2703 = vand.u32 %v2702, 8388607
        %v2704 = vor.u32 %v2703, 8388608
        %v2705 = vsub.s32 0, %v2704
        %v2706 = vadd.s32 %v2701, 1
        %vm2707 = vcmp.gt.s32.totalorder %v2706, 0
        %v2708 = vsel %vm2707, %v2706, 0
        %v2709 = vshrl.u32 %v2708, 5
        %v2710 = vand.u32 %v2708, 31
        %v2711 = vsub.s32 32, %v2710
        %v2712 = vshrl.u32 683565275, %v2711
        %v2713 = vshll.u32 683565275, %v2710
        %v2714 = vshrl.u32 2475754826, %v2711
        %v2715 = vor.u32 %v2713, %v2714
        %v2716 = vshll.u32 2475754826, %v2710
        %v2717 = vshrl.u32 2131351028, %v2711
        %v2718 = vor.u32 %v2716, %v2717
        %v2719 = vshll.u32 2131351028, %v2710
        %v2720 = vshrl.u32 2102212464, %v2711
        %v2721 = vor.u32 %v2719, %v2720
        %v2722 = vshll.u32 2102212464, %v2710
        %v2723 = vshrl.u32 920167782, %v2711
        %v2724 = vor.u32 %v2722, %v2723
        %v2725 = vshll.u32 920167782, %v2710
        %v2726 = vshrl.u32 1326507024, %v2711
        %v2727 = vor.u32 %v2725, %v2726
        %vm2728 = vcmp.lt.s32.totalorder %v2709, 1
        %vm2729 = vcmp.lt.s32.totalorder %v2709, 2
        %vm2730 = vcmp.lt.s32.totalorder %v2709, 3
        %vm2731 = vcmp.lt.s32.totalorder %v2709, 4
        %v2732 = vsel %vm2728, %v2712, %v2715
        %v2733 = vsel %vm2731, %v2721, 2102212464
        %v2734 = vsel %vm2730, %v2718, %v2733
        %v2735 = vsel %vm2729, %v2732, %v2734
        %v2736 = vsel %vm2728, %v2715, %v2718
        %v2737 = vsel %vm2731, %v2724, 920167782
        %v2738 = vsel %vm2730, %v2721, %v2737
        %v2739 = vsel %vm2729, %v2736, %v2738
        %v2740 = vsel %vm2728, %v2718, %v2721
        %v2741 = vsel %vm2731, %v2727, 1326507024
        %v2742 = vsel %vm2730, %v2724, %v2741
        %v2743 = vsel %vm2729, %v2740, %v2742
        %v2744 = vshll.u32 %v2704, 8
        %v2745 = vmul.u32.u64.compose %v2744, %v2743
        %v2746 = vextract.low.u32 %v2745
        %v2747 = vextract.high.u32 %v2745
        %v2748 = vmul.u32.u64.compose %v2744, %v2739
        %v2749 = vextract.low.u32 %v2748
        %v2750 = vextract.high.u32 %v2748
        %v2751 = vmul.u32 %v2744, %v2735
        %v2752 = vadd.s32 %v2747, %v2749
        %vm2753 = vc.u32 %v2747, %v2749
        %v2754 = vadd.s32 %v2750, 1
        %v2755 = vsel %vm2753, %v2754, %v2750
        %v2756 = vadd.s32 %v2751, %v2755
        %v2757 = vadd.s32 %v2756, 536870912
        %v2758 = vshrl.u32 %v2757, 30
        %v2759 = vshll.u32 %v2758, 30
        %v2760 = vsub.s32 %v2756, %v2759
        %vm2761 = vcmp.lt.s32.totalorder %v2760, 0
        %v2762 = vsub.s32 0, %v2760
        %v2763 = vsel %vm2761, %v2762, %v2760
        %v2764 = vclz %v2763
        %v2765 = vsub.s32 %v2764, 2
        %vm2766 = vcmp.gt.s32.totalorder 0, %v2765
        %v2767 = vsel %vm2766, 0, %v2765
        %v2768 = vsub.s32 32, %v2767
        %v2769 = vshll.u32 %v2760, %v2767
        %v2770 = vshrl.u32 %v2752, %v2768
        %v2771 = vor.u32 %v2769, %v2770
        %v2772 = vsub.s32 4294967266, %v2767
        %v2773 = vadd.s32 %v2772, 127
        %v2774 = vshll.u32 %v2773, 23
        %v2775 = vor.u32 4788187, %v2774
        %v2776 = vand.u32 2147483647, %v2775
        %v2778 = vcvt.s32.f32 %v2771
        %v2779 = vmul.f32 %v2778, %v2776
        %v2780 = vxor.u32 %v2779, 2147483648
        %v2781 = vsel %vm2698, %v2780, %v2779
        %v2782 = vsub.s32 4, %v2758
        %v2783 = vsel %vm2698, %v2782, %v2758
        %v2784 = vsel %vm2697, %v2062, %v2781
        %v2785 = vsel %vm2697, 0, %v2783
        %v2786 = vcosq.f32.pop %v2784
        %v2787 = vsinq.f32.pop %v2784
        %vm2788 = vweird.f32 %v2062
        %v2789 = vadd.s32 %v2785, 3
        %v2790 = vand.u32 %v2789, 3
        %vm2791 = vcmp.lt.s32.totalorder %v2790, 2
        %vm2792 = vcmp.eq.s32.totalorder %v2790, 0
        %v2793 = vxor.u32 %v2787, 2147483648
        %v2794 = vsel %vm2792, %v2786, %v2793
        %vm2795 = vcmp.eq.s32.totalorder %v2790, 2
        %v2796 = vxor.u32 %v2786, 2147483648
        %v2797 = vsel %vm2795, %v2796, %v2787
        %v2798 = vsel %vm2791, %v2794, %v2797
        %v2799 = vsel %vm2788, nan, %v2798
        %v2800 = vand.u32 2147483647, %v2063
        %vm2801 = vcmp.le.f32.partialorder %v2800, 0.7853982
        %vm2802 = vcmp.lt.s32.totalorder %v2063, 0
        %v2803 = vand.u32 %v2063, 2139095040
        %v2804 = vshrl.u32 %v2803, 23
        %v2805 = vsub.s32 %v2804, 127
        %v2806 = vand.u32 2147483647, %v2063
        %v2807 = vand.u32 %v2806, 8388607
        %v2808 = vor.u32 %v2807, 8388608
        %v2809 = vsub.s32 0, %v2808
        %v2810 = vadd.s32 %v2805, 1
        %vm2811 = vcmp.gt.s32.totalorder %v2810, 0
        %v2812 = vsel %vm2811, %v2810, 0
        %v2813 = vshrl.u32 %v2812, 5
        %v2814 = vand.u32 %v2812, 31
        %v2815 = vsub.s32 32, %v2814
        %v2816 = vshrl.u32 683565275, %v2815
        %v2817 = vshll.u32 683565275, %v2814
        %v2818 = vshrl.u32 2475754826, %v2815
        %v2819 = vor.u32 %v2817, %v2818
        %v2820 = vshll.u32 2475754826, %v2814
        %v2821 = vshrl.u32 2131351028, %v2815
        %v2822 = vor.u32 %v2820, %v2821
        %v2823 = vshll.u32 2131351028, %v2814
        %v2824 = vshrl.u32 2102212464, %v2815
        %v2825 = vor.u32 %v2823, %v2824
        %v2826 = vshll.u32 2102212464, %v2814
        %v2827 = vshrl.u32 920167782, %v2815
        %v2828 = vor.u32 %v2826, %v2827
        %v2829 = vshll.u32 920167782, %v2814
        %v2830 = vshrl.u32 1326507024, %v2815
        %v2831 = vor.u32 %v2829, %v2830
        %vm2832 = vcmp.lt.s32.totalorder %v2813, 1
        %vm2833 = vcmp.lt.s32.totalorder %v2813, 2
        %vm2834 = vcmp.lt.s32.totalorder %v2813, 3
        %vm2835 = vcmp.lt.s32.totalorder %v2813, 4
        %v2836 = vsel %vm2832, %v2816, %v2819
        %v2837 = vsel %vm2835, %v2825, 2102212464
        %v2838 = vsel %vm2834, %v2822, %v2837
        %v2839 = vsel %vm2833, %v2836, %v2838
        %v2840 = vsel %vm2832, %v2819, %v2822
        %v2841 = vsel %vm2835, %v2828, 920167782
        %v2842 = vsel %vm2834, %v2825, %v2841
        %v2843 = vsel %vm2833, %v2840, %v2842
        %v2844 = vsel %vm2832, %v2822, %v2825
        %v2845 = vsel %vm2835, %v2831, 1326507024
        %v2846 = vsel %vm2834, %v2828, %v2845
        %v2847 = vsel %vm2833, %v2844, %v2846
        %v2848 = vshll.u32 %v2808, 8
        %v2849 = vmul.u32.u64.compose %v2848, %v2847
        %v2850 = vextract.low.u32 %v2849
        %v2851 = vextract.high.u32 %v2849
        %v2852 = vmul.u32.u64.compose %v2848, %v2843
        %v2853 = vextract.low.u32 %v2852
        %v2854 = vextract.high.u32 %v2852
        %v2855 = vmul.u32 %v2848, %v2839
        %v2856 = vadd.s32 %v2851, %v2853
        %vm2857 = vc.u32 %v2851, %v2853
        %v2858 = vadd.s32 %v2854, 1
        %v2859 = vsel %vm2857, %v2858, %v2854
        %v2860 = vadd.s32 %v2855, %v2859
        %v2861 = vadd.s32 %v2860, 536870912
        %v2862 = vshrl.u32 %v2861, 30
        %v2863 = vshll.u32 %v2862, 30
        %v2864 = vsub.s32 %v2860, %v2863
        %vm2865 = vcmp.lt.s32.totalorder %v2864, 0
        %v2866 = vsub.s32 0, %v2864
        %v2867 = vsel %vm2865, %v2866, %v2864
        %v2868 = vclz %v2867
        %v2869 = vsub.s32 %v2868, 2
        %vm2870 = vcmp.gt.s32.totalorder 0, %v2869
        %v2871 = vsel %vm2870, 0, %v2869
        %v2872 = vsub.s32 32, %v2871
        %v2873 = vshll.u32 %v2864, %v2871
        %v2874 = vshrl.u32 %v2856, %v2872
        %v2875 = vor.u32 %v2873, %v2874
        %v2876 = vsub.s32 4294967266, %v2871
        %v2877 = vadd.s32 %v2876, 127
        %v2878 = vshll.u32 %v2877, 23
        %v2879 = vor.u32 4788187, %v2878
        %v2880 = vand.u32 2147483647, %v2879
        %v2882 = vcvt.s32.f32 %v2875
        %v2883 = vmul.f32 %v2882, %v2880
        %v2884 = vxor.u32 %v2883, 2147483648
        %v2885 = vsel %vm2802, %v2884, %v2883
        %v2886 = vsub.s32 4, %v2862
        %v2887 = vsel %vm2802, %v2886, %v2862
        %v2888 = vsel %vm2801, %v2063, %v2885
        %v2889 = vsel %vm2801, 0, %v2887
        %v2890 = vcosq.f32.pop %v2888
        %v2891 = vsinq.f32.pop %v2888
        %vm2892 = vweird.f32 %v2063
        %v2893 = vadd.s32 %v2889, 3
        %v2894 = vand.u32 %v2893, 3
        %vm2895 = vcmp.lt.s32.totalorder %v2894, 2
        %vm2896 = vcmp.eq.s32.totalorder %v2894, 0
        %v2897 = vxor.u32 %v2891, 2147483648
        %v2898 = vsel %vm2896, %v2890, %v2897
        %vm2899 = vcmp.eq.s32.totalorder %v2894, 2
        %v2900 = vxor.u32 %v2890, 2147483648
        %v2901 = vsel %vm2899, %v2900, %v2891
        %v2902 = vsel %vm2895, %v2898, %v2901
        %v2903 = vsel %vm2892, nan, %v2902
        %v2904 = vand.u32 2147483647, %v2064
        %vm2905 = vcmp.le.f32.partialorder %v2904, 0.7853982
        %vm2906 = vcmp.lt.s32.totalorder %v2064, 0
        %v2907 = vand.u32 %v2064, 2139095040
        %v2908 = vshrl.u32 %v2907, 23
        %v2909 = vsub.s32 %v2908, 127
        %v2910 = vand.u32 2147483647, %v2064
        %v2911 = vand.u32 %v2910, 8388607
        %v2912 = vor.u32 %v2911, 8388608
        %v2913 = vsub.s32 0, %v2912
        %v2914 = vadd.s32 %v2909, 1
        %vm2915 = vcmp.gt.s32.totalorder %v2914, 0
        %v2916 = vsel %vm2915, %v2914, 0
        %v2917 = vshrl.u32 %v2916, 5
        %v2918 = vand.u32 %v2916, 31
        %v2919 = vsub.s32 32, %v2918
        %v2920 = vshrl.u32 683565275, %v2919
        %v2921 = vshll.u32 683565275, %v2918
        %v2922 = vshrl.u32 2475754826, %v2919
        %v2923 = vor.u32 %v2921, %v2922
        %v2924 = vshll.u32 2475754826, %v2918
        %v2925 = vshrl.u32 2131351028, %v2919
        %v2926 = vor.u32 %v2924, %v2925
        %v2927 = vshll.u32 2131351028, %v2918
        %v2928 = vshrl.u32 2102212464, %v2919
        %v2929 = vor.u32 %v2927, %v2928
        %v2930 = vshll.u32 2102212464, %v2918
        %v2931 = vshrl.u32 920167782, %v2919
        %v2932 = vor.u32 %v2930, %v2931
        %v2933 = vshll.u32 920167782, %v2918
        %v2934 = vshrl.u32 1326507024, %v2919
        %v2935 = vor.u32 %v2933, %v2934
        %vm2936 = vcmp.lt.s32.totalorder %v2917, 1
        %vm2937 = vcmp.lt.s32.totalorder %v2917, 2
        %vm2938 = vcmp.lt.s32.totalorder %v2917, 3
        %vm2939 = vcmp.lt.s32.totalorder %v2917, 4
        %v2940 = vsel %vm2936, %v2920, %v2923
        %v2941 = vsel %vm2939, %v2929, 2102212464
        %v2942 = vsel %vm2938, %v2926, %v2941
        %v2943 = vsel %vm2937, %v2940, %v2942
        %v2944 = vsel %vm2936, %v2923, %v2926
        %v2945 = vsel %vm2939, %v2932, 920167782
        %v2946 = vsel %vm2938, %v2929, %v2945
        %v2947 = vsel %vm2937, %v2944, %v2946
        %v2948 = vsel %vm2936, %v2926, %v2929
        %v2949 = vsel %vm2939, %v2935, 1326507024
        %v2950 = vsel %vm2938, %v2932, %v2949
        %v2951 = vsel %vm2937, %v2948, %v2950
        %v2952 = vshll.u32 %v2912, 8
        %v2953 = vmul.u32.u64.compose %v2952, %v2951
        %v2954 = vextract.low.u32 %v2953
        %v2955 = vextract.high.u32 %v2953
        %v2956 = vmul.u32.u64.compose %v2952, %v2947
        %v2957 = vextract.low.u32 %v2956
        %v2958 = vextract.high.u32 %v2956
        %v2959 = vmul.u32 %v2952, %v2943
        %v2960 = vadd.s32 %v2955, %v2957
        %vm2961 = vc.u32 %v2955, %v2957
        %v2962 = vadd.s32 %v2958, 1
        %v2963 = vsel %vm2961, %v2962, %v2958
        %v2964 = vadd.s32 %v2959, %v2963
        %v2965 = vadd.s32 %v2964, 536870912
        %v2966 = vshrl.u32 %v2965, 30
        %v2967 = vshll.u32 %v2966, 30
        %v2968 = vsub.s32 %v2964, %v2967
        %vm2969 = vcmp.lt.s32.totalorder %v2968, 0
        %v2970 = vsub.s32 0, %v2968
        %v2971 = vsel %vm2969, %v2970, %v2968
        %v2972 = vclz %v2971
        %v2973 = vsub.s32 %v2972, 2
        %vm2974 = vcmp.gt.s32.totalorder 0, %v2973
        %v2975 = vsel %vm2974, 0, %v2973
        %v2976 = vsub.s32 32, %v2975
        %v2977 = vshll.u32 %v2968, %v2975
        %v2978 = vshrl.u32 %v2960, %v2976
        %v2979 = vor.u32 %v2977, %v2978
        %v2980 = vsub.s32 4294967266, %v2975
        %v2981 = vadd.s32 %v2980, 127
        %v2982 = vshll.u32 %v2981, 23
        %v2983 = vor.u32 4788187, %v2982
        %v2984 = vand.u32 2147483647, %v2983
        %v2986 = vcvt.s32.f32 %v2979
        %v2987 = vmul.f32 %v2986, %v2984
        %v2988 = vxor.u32 %v2987, 2147483648
        %v2989 = vsel %vm2906, %v2988, %v2987
        %v2990 = vsub.s32 4, %v2966
        %v2991 = vsel %vm2906, %v2990, %v2966
        %v2992 = vsel %vm2905, %v2064, %v2989
        %v2993 = vsel %vm2905, 0, %v2991
        %v2994 = vcosq.f32.pop %v2992
        %v2995 = vsinq.f32.pop %v2992
        %vm2996 = vweird.f32 %v2064
        %v2997 = vadd.s32 %v2993, 3
        %v2998 = vand.u32 %v2997, 3
        %vm2999 = vcmp.lt.s32.totalorder %v2998, 2
        %vm3000 = vcmp.eq.s32.totalorder %v2998, 0
        %v3001 = vxor.u32 %v2995, 2147483648
        %v3002 = vsel %vm3000, %v2994, %v3001
        %vm3003 = vcmp.eq.s32.totalorder %v2998, 2
        %v3004 = vxor.u32 %v2994, 2147483648
        %v3005 = vsel %vm3003, %v3004, %v2995
        %v3006 = vsel %vm2999, %v3002, %v3005
        %v3007 = vsel %vm2996, nan, %v3006
        %v3008 = vand.u32 2147483647, %v2065
        %vm3009 = vcmp.le.f32.partialorder %v3008, 0.7853982
        %vm3010 = vcmp.lt.s32.totalorder %v2065, 0
        %v3011 = vand.u32 %v2065, 2139095040
        %v3012 = vshrl.u32 %v3011, 23
        %v3013 = vsub.s32 %v3012, 127
        %v3014 = vand.u32 2147483647, %v2065
        %v3015 = vand.u32 %v3014, 8388607
        %v3016 = vor.u32 %v3015, 8388608
        %v3017 = vsub.s32 0, %v3016
        %v3018 = vadd.s32 %v3013, 1
        %vm3019 = vcmp.gt.s32.totalorder %v3018, 0
        %v3020 = vsel %vm3019, %v3018, 0
        %v3021 = vshrl.u32 %v3020, 5
        %v3022 = vand.u32 %v3020, 31
        %v3023 = vsub.s32 32, %v3022
        %v3024 = vshrl.u32 683565275, %v3023
        %v3025 = vshll.u32 683565275, %v3022
        %v3026 = vshrl.u32 2475754826, %v3023
        %v3027 = vor.u32 %v3025, %v3026
        %v3028 = vshll.u32 2475754826, %v3022
        %v3029 = vshrl.u32 2131351028, %v3023
        %v3030 = vor.u32 %v3028, %v3029
        %v3031 = vshll.u32 2131351028, %v3022
        %v3032 = vshrl.u32 2102212464, %v3023
        %v3033 = vor.u32 %v3031, %v3032
        %v3034 = vshll.u32 2102212464, %v3022
        %v3035 = vshrl.u32 920167782, %v3023
        %v3036 = vor.u32 %v3034, %v3035
        %v3037 = vshll.u32 920167782, %v3022
        %v3038 = vshrl.u32 1326507024, %v3023
        %v3039 = vor.u32 %v3037, %v3038
        %vm3040 = vcmp.lt.s32.totalorder %v3021, 1
        %vm3041 = vcmp.lt.s32.totalorder %v3021, 2
        %vm3042 = vcmp.lt.s32.totalorder %v3021, 3
        %vm3043 = vcmp.lt.s32.totalorder %v3021, 4
        %v3044 = vsel %vm3040, %v3024, %v3027
        %v3045 = vsel %vm3043, %v3033, 2102212464
        %v3046 = vsel %vm3042, %v3030, %v3045
        %v3047 = vsel %vm3041, %v3044, %v3046
        %v3048 = vsel %vm3040, %v3027, %v3030
        %v3049 = vsel %vm3043, %v3036, 920167782
        %v3050 = vsel %vm3042, %v3033, %v3049
        %v3051 = vsel %vm3041, %v3048, %v3050
        %v3052 = vsel %vm3040, %v3030, %v3033
        %v3053 = vsel %vm3043, %v3039, 1326507024
        %v3054 = vsel %vm3042, %v3036, %v3053
        %v3055 = vsel %vm3041, %v3052, %v3054
        %v3056 = vshll.u32 %v3016, 8
        %v3057 = vmul.u32.u64.compose %v3056, %v3055
        %v3058 = vextract.low.u32 %v3057
        %v3059 = vextract.high.u32 %v3057
        %v3060 = vmul.u32.u64.compose %v3056, %v3051
        %v3061 = vextract.low.u32 %v3060
        %v3062 = vextract.high.u32 %v3060
        %v3063 = vmul.u32 %v3056, %v3047
        %v3064 = vadd.s32 %v3059, %v3061
        %vm3065 = vc.u32 %v3059, %v3061
        %v3066 = vadd.s32 %v3062, 1
        %v3067 = vsel %vm3065, %v3066, %v3062
        %v3068 = vadd.s32 %v3063, %v3067
        %v3069 = vadd.s32 %v3068, 536870912
        %v3070 = vshrl.u32 %v3069, 30
        %v3071 = vshll.u32 %v3070, 30
        %v3072 = vsub.s32 %v3068, %v3071
        %vm3073 = vcmp.lt.s32.totalorder %v3072, 0
        %v3074 = vsub.s32 0, %v3072
        %v3075 = vsel %vm3073, %v3074, %v3072
        %v3076 = vclz %v3075
        %v3077 = vsub.s32 %v3076, 2
        %vm3078 = vcmp.gt.s32.totalorder 0, %v3077
        %v3079 = vsel %vm3078, 0, %v3077
        %v3080 = vsub.s32 32, %v3079
        %v3081 = vshll.u32 %v3072, %v3079
        %v3082 = vshrl.u32 %v3064, %v3080
        %v3083 = vor.u32 %v3081, %v3082
        %v3084 = vsub.s32 4294967266, %v3079
        %v3085 = vadd.s32 %v3084, 127
        %v3086 = vshll.u32 %v3085, 23
        %v3087 = vor.u32 4788187, %v3086
        %v3088 = vand.u32 2147483647, %v3087
        %v3090 = vcvt.s32.f32 %v3083
        %v3091 = vmul.f32 %v3090, %v3088
        %v3092 = vxor.u32 %v3091, 2147483648
        %v3093 = vsel %vm3010, %v3092, %v3091
        %v3094 = vsub.s32 4, %v3070
        %v3095 = vsel %vm3010, %v3094, %v3070
        %v3096 = vsel %vm3009, %v2065, %v3093
        %v3097 = vsel %vm3009, 0, %v3095
        %v3098 = vcosq.f32.pop %v3096
        %v3099 = vsinq.f32.pop %v3096
        %vm3100 = vweird.f32 %v2065
        %v3101 = vadd.s32 %v3097, 3
        %v3102 = vand.u32 %v3101, 3
        %vm3103 = vcmp.lt.s32.totalorder %v3102, 2
        %vm3104 = vcmp.eq.s32.totalorder %v3102, 0
        %v3105 = vxor.u32 %v3099, 2147483648
        %v3106 = vsel %vm3104, %v3098, %v3105
        %vm3107 = vcmp.eq.s32.totalorder %v3102, 2
        %v3108 = vxor.u32 %v3098, 2147483648
        %v3109 = vsel %vm3107, %v3108, %v3099
        %v3110 = vsel %vm3103, %v3106, %v3109
        %v3111 = vsel %vm3100, nan, %v3110
        %v3112 = vand.u32 2147483647, %v2066
        %vm3113 = vcmp.le.f32.partialorder %v3112, 0.7853982
        %vm3114 = vcmp.lt.s32.totalorder %v2066, 0
        %v3115 = vand.u32 %v2066, 2139095040
        %v3116 = vshrl.u32 %v3115, 23
        %v3117 = vsub.s32 %v3116, 127
        %v3118 = vand.u32 2147483647, %v2066
        %v3119 = vand.u32 %v3118, 8388607
        %v3120 = vor.u32 %v3119, 8388608
        %v3121 = vsub.s32 0, %v3120
        %v3122 = vadd.s32 %v3117, 1
        %vm3123 = vcmp.gt.s32.totalorder %v3122, 0
        %v3124 = vsel %vm3123, %v3122, 0
        %v3125 = vshrl.u32 %v3124, 5
        %v3126 = vand.u32 %v3124, 31
        %v3127 = vsub.s32 32, %v3126
        %v3128 = vshrl.u32 683565275, %v3127
        %v3129 = vshll.u32 683565275, %v3126
        %v3130 = vshrl.u32 2475754826, %v3127
        %v3131 = vor.u32 %v3129, %v3130
        %v3132 = vshll.u32 2475754826, %v3126
        %v3133 = vshrl.u32 2131351028, %v3127
        %v3134 = vor.u32 %v3132, %v3133
        %v3135 = vshll.u32 2131351028, %v3126
        %v3136 = vshrl.u32 2102212464, %v3127
        %v3137 = vor.u32 %v3135, %v3136
        %v3138 = vshll.u32 2102212464, %v3126
        %v3139 = vshrl.u32 920167782, %v3127
        %v3140 = vor.u32 %v3138, %v3139
        %v3141 = vshll.u32 920167782, %v3126
        %v3142 = vshrl.u32 1326507024, %v3127
        %v3143 = vor.u32 %v3141, %v3142
        %vm3144 = vcmp.lt.s32.totalorder %v3125, 1
        %vm3145 = vcmp.lt.s32.totalorder %v3125, 2
        %vm3146 = vcmp.lt.s32.totalorder %v3125, 3
        %vm3147 = vcmp.lt.s32.totalorder %v3125, 4
        %v3148 = vsel %vm3144, %v3128, %v3131
        %v3149 = vsel %vm3147, %v3137, 2102212464
        %v3150 = vsel %vm3146, %v3134, %v3149
        %v3151 = vsel %vm3145, %v3148, %v3150
        %v3152 = vsel %vm3144, %v3131, %v3134
        %v3153 = vsel %vm3147, %v3140, 920167782
        %v3154 = vsel %vm3146, %v3137, %v3153
        %v3155 = vsel %vm3145, %v3152, %v3154
        %v3156 = vsel %vm3144, %v3134, %v3137
        %v3157 = vsel %vm3147, %v3143, 1326507024
        %v3158 = vsel %vm3146, %v3140, %v3157
        %v3159 = vsel %vm3145, %v3156, %v3158
        %v3160 = vshll.u32 %v3120, 8
        %v3161 = vmul.u32.u64.compose %v3160, %v3159
        %v3162 = vextract.low.u32 %v3161
        %v3163 = vextract.high.u32 %v3161
        %v3164 = vmul.u32.u64.compose %v3160, %v3155
        %v3165 = vextract.low.u32 %v3164
        %v3166 = vextract.high.u32 %v3164
        %v3167 = vmul.u32 %v3160, %v3151
        %v3168 = vadd.s32 %v3163, %v3165
        %vm3169 = vc.u32 %v3163, %v3165
        %v3170 = vadd.s32 %v3166, 1
        %v3171 = vsel %vm3169, %v3170, %v3166
        %v3172 = vadd.s32 %v3167, %v3171
        %v3173 = vadd.s32 %v3172, 536870912
        %v3174 = vshrl.u32 %v3173, 30
        %v3175 = vshll.u32 %v3174, 30
        %v3176 = vsub.s32 %v3172, %v3175
        %vm3177 = vcmp.lt.s32.totalorder %v3176, 0
        %v3178 = vsub.s32 0, %v3176
        %v3179 = vsel %vm3177, %v3178, %v3176
        %v3180 = vclz %v3179
        %v3181 = vsub.s32 %v3180, 2
        %vm3182 = vcmp.gt.s32.totalorder 0, %v3181
        %v3183 = vsel %vm3182, 0, %v3181
        %v3184 = vsub.s32 32, %v3183
        %v3185 = vshll.u32 %v3176, %v3183
        %v3186 = vshrl.u32 %v3168, %v3184
        %v3187 = vor.u32 %v3185, %v3186
        %v3188 = vsub.s32 4294967266, %v3183
        %v3189 = vadd.s32 %v3188, 127
        %v3190 = vshll.u32 %v3189, 23
        %v3191 = vor.u32 4788187, %v3190
        %v3192 = vand.u32 2147483647, %v3191
        %v3194 = vcvt.s32.f32 %v3187
        %v3195 = vmul.f32 %v3194, %v3192
        %v3196 = vxor.u32 %v3195, 2147483648
        %v3197 = vsel %vm3114, %v3196, %v3195
        %v3198 = vsub.s32 4, %v3174
        %v3199 = vsel %vm3114, %v3198, %v3174
        %v3200 = vsel %vm3113, %v2066, %v3197
        %v3201 = vsel %vm3113, 0, %v3199
        %v3202 = vcosq.f32.pop %v3200
        %v3203 = vsinq.f32.pop %v3200
        %vm3204 = vweird.f32 %v2066
        %v3205 = vadd.s32 %v3201, 3
        %v3206 = vand.u32 %v3205, 3
        %vm3207 = vcmp.lt.s32.totalorder %v3206, 2
        %vm3208 = vcmp.eq.s32.totalorder %v3206, 0
        %v3209 = vxor.u32 %v3203, 2147483648
        %v3210 = vsel %vm3208, %v3202, %v3209
        %vm3211 = vcmp.eq.s32.totalorder %v3206, 2
        %v3212 = vxor.u32 %v3202, 2147483648
        %v3213 = vsel %vm3211, %v3212, %v3203
        %v3214 = vsel %vm3207, %v3210, %v3213
        %v3215 = vsel %vm3204, nan, %v3214
        %v3216 = vand.u32 2147483647, %v2067
        %vm3217 = vcmp.le.f32.partialorder %v3216, 0.7853982
        %vm3218 = vcmp.lt.s32.totalorder %v2067, 0
        %v3219 = vand.u32 %v2067, 2139095040
        %v3220 = vshrl.u32 %v3219, 23
        %v3221 = vsub.s32 %v3220, 127
        %v3222 = vand.u32 2147483647, %v2067
        %v3223 = vand.u32 %v3222, 8388607
        %v3224 = vor.u32 %v3223, 8388608
        %v3225 = vsub.s32 0, %v3224
        %v3226 = vadd.s32 %v3221, 1
        %vm3227 = vcmp.gt.s32.totalorder %v3226, 0
        %v3228 = vsel %vm3227, %v3226, 0
        %v3229 = vshrl.u32 %v3228, 5
        %v3230 = vand.u32 %v3228, 31
        %v3231 = vsub.s32 32, %v3230
        %v3232 = vshrl.u32 683565275, %v3231
        %v3233 = vshll.u32 683565275, %v3230
        %v3234 = vshrl.u32 2475754826, %v3231
        %v3235 = vor.u32 %v3233, %v3234
        %v3236 = vshll.u32 2475754826, %v3230
        %v3237 = vshrl.u32 2131351028, %v3231
        %v3238 = vor.u32 %v3236, %v3237
        %v3239 = vshll.u32 2131351028, %v3230
        %v3240 = vshrl.u32 2102212464, %v3231
        %v3241 = vor.u32 %v3239, %v3240
        %v3242 = vshll.u32 2102212464, %v3230
        %v3243 = vshrl.u32 920167782, %v3231
        %v3244 = vor.u32 %v3242, %v3243
        %v3245 = vshll.u32 920167782, %v3230
        %v3246 = vshrl.u32 1326507024, %v3231
        %v3247 = vor.u32 %v3245, %v3246
        %vm3248 = vcmp.lt.s32.totalorder %v3229, 1
        %vm3249 = vcmp.lt.s32.totalorder %v3229, 2
        %vm3250 = vcmp.lt.s32.totalorder %v3229, 3
        %vm3251 = vcmp.lt.s32.totalorder %v3229, 4
        %v3252 = vsel %vm3248, %v3232, %v3235
        %v3253 = vsel %vm3251, %v3241, 2102212464
        %v3254 = vsel %vm3250, %v3238, %v3253
        %v3255 = vsel %vm3249, %v3252, %v3254
        %v3256 = vsel %vm3248, %v3235, %v3238
        %v3257 = vsel %vm3251, %v3244, 920167782
        %v3258 = vsel %vm3250, %v3241, %v3257
        %v3259 = vsel %vm3249, %v3256, %v3258
        %v3260 = vsel %vm3248, %v3238, %v3241
        %v3261 = vsel %vm3251, %v3247, 1326507024
        %v3262 = vsel %vm3250, %v3244, %v3261
        %v3263 = vsel %vm3249, %v3260, %v3262
        %v3264 = vshll.u32 %v3224, 8
        %v3265 = vmul.u32.u64.compose %v3264, %v3263
        %v3266 = vextract.low.u32 %v3265
        %v3267 = vextract.high.u32 %v3265
        %v3268 = vmul.u32.u64.compose %v3264, %v3259
        %v3269 = vextract.low.u32 %v3268
        %v3270 = vextract.high.u32 %v3268
        %v3271 = vmul.u32 %v3264, %v3255
        %v3272 = vadd.s32 %v3267, %v3269
        %vm3273 = vc.u32 %v3267, %v3269
        %v3274 = vadd.s32 %v3270, 1
        %v3275 = vsel %vm3273, %v3274, %v3270
        %v3276 = vadd.s32 %v3271, %v3275
        %v3277 = vadd.s32 %v3276, 536870912
        %v3278 = vshrl.u32 %v3277, 30
        %v3279 = vshll.u32 %v3278, 30
        %v3280 = vsub.s32 %v3276, %v3279
        %vm3281 = vcmp.lt.s32.totalorder %v3280, 0
        %v3282 = vsub.s32 0, %v3280
        %v3283 = vsel %vm3281, %v3282, %v3280
        %v3284 = vclz %v3283
        %v3285 = vsub.s32 %v3284, 2
        %vm3286 = vcmp.gt.s32.totalorder 0, %v3285
        %v3287 = vsel %vm3286, 0, %v3285
        %v3288 = vsub.s32 32, %v3287
        %v3289 = vshll.u32 %v3280, %v3287
        %v3290 = vshrl.u32 %v3272, %v3288
        %v3291 = vor.u32 %v3289, %v3290
        %v3292 = vsub.s32 4294967266, %v3287
        %v3293 = vadd.s32 %v3292, 127
        %v3294 = vshll.u32 %v3293, 23
        %v3295 = vor.u32 4788187, %v3294
        %v3296 = vand.u32 2147483647, %v3295
        %v3298 = vcvt.s32.f32 %v3291
        %v3299 = vmul.f32 %v3298, %v3296
        %v3300 = vxor.u32 %v3299, 2147483648
        %v3301 = vsel %vm3218, %v3300, %v3299
        %v3302 = vsub.s32 4, %v3278
        %v3303 = vsel %vm3218, %v3302, %v3278
        %v3304 = vsel %vm3217, %v2067, %v3301
        %v3305 = vsel %vm3217, 0, %v3303
        %v3306 = vcosq.f32.pop %v3304
        %v3307 = vsinq.f32.pop %v3304
        %vm3308 = vweird.f32 %v2067
        %v3309 = vadd.s32 %v3305, 3
        %v3310 = vand.u32 %v3309, 3
        %vm3311 = vcmp.lt.s32.totalorder %v3310, 2
        %vm3312 = vcmp.eq.s32.totalorder %v3310, 0
        %v3313 = vxor.u32 %v3307, 2147483648
        %v3314 = vsel %vm3312, %v3306, %v3313
        %vm3315 = vcmp.eq.s32.totalorder %v3310, 2
        %v3316 = vxor.u32 %v3306, 2147483648
        %v3317 = vsel %vm3315, %v3316, %v3307
        %v3318 = vsel %vm3311, %v3314, %v3317
        %v3319 = vsel %vm3308, nan, %v3318
        %v3320 = vand.u32 2147483647, %v2068
        %vm3321 = vcmp.le.f32.partialorder %v3320, 0.7853982
        %vm3322 = vcmp.lt.s32.totalorder %v2068, 0
        %v3323 = vand.u32 %v2068, 2139095040
        %v3324 = vshrl.u32 %v3323, 23
        %v3325 = vsub.s32 %v3324, 127
        %v3326 = vand.u32 2147483647, %v2068
        %v3327 = vand.u32 %v3326, 8388607
        %v3328 = vor.u32 %v3327, 8388608
        %v3329 = vsub.s32 0, %v3328
        %v3330 = vadd.s32 %v3325, 1
        %vm3331 = vcmp.gt.s32.totalorder %v3330, 0
        %v3332 = vsel %vm3331, %v3330, 0
        %v3333 = vshrl.u32 %v3332, 5
        %v3334 = vand.u32 %v3332, 31
        %v3335 = vsub.s32 32, %v3334
        %v3336 = vshrl.u32 683565275, %v3335
        %v3337 = vshll.u32 683565275, %v3334
        %v3338 = vshrl.u32 2475754826, %v3335
        %v3339 = vor.u32 %v3337, %v3338
        %v3340 = vshll.u32 2475754826, %v3334
        %v3341 = vshrl.u32 2131351028, %v3335
        %v3342 = vor.u32 %v3340, %v3341
        %v3343 = vshll.u32 2131351028, %v3334
        %v3344 = vshrl.u32 2102212464, %v3335
        %v3345 = vor.u32 %v3343, %v3344
        %v3346 = vshll.u32 2102212464, %v3334
        %v3347 = vshrl.u32 920167782, %v3335
        %v3348 = vor.u32 %v3346, %v3347
        %v3349 = vshll.u32 920167782, %v3334
        %v3350 = vshrl.u32 1326507024, %v3335
        %v3351 = vor.u32 %v3349, %v3350
        %vm3352 = vcmp.lt.s32.totalorder %v3333, 1
        %vm3353 = vcmp.lt.s32.totalorder %v3333, 2
        %vm3354 = vcmp.lt.s32.totalorder %v3333, 3
        %vm3355 = vcmp.lt.s32.totalorder %v3333, 4
        %v3356 = vsel %vm3352, %v3336, %v3339
        %v3357 = vsel %vm3355, %v3345, 2102212464
        %v3358 = vsel %vm3354, %v3342, %v3357
        %v3359 = vsel %vm3353, %v3356, %v3358
        %v3360 = vsel %vm3352, %v3339, %v3342
        %v3361 = vsel %vm3355, %v3348, 920167782
        %v3362 = vsel %vm3354, %v3345, %v3361
        %v3363 = vsel %vm3353, %v3360, %v3362
        %v3364 = vsel %vm3352, %v3342, %v3345
        %v3365 = vsel %vm3355, %v3351, 1326507024
        %v3366 = vsel %vm3354, %v3348, %v3365
        %v3367 = vsel %vm3353, %v3364, %v3366
        %v3368 = vshll.u32 %v3328, 8
        %v3369 = vmul.u32.u64.compose %v3368, %v3367
        %v3370 = vextract.low.u32 %v3369
        %v3371 = vextract.high.u32 %v3369
        %v3372 = vmul.u32.u64.compose %v3368, %v3363
        %v3373 = vextract.low.u32 %v3372
        %v3374 = vextract.high.u32 %v3372
        %v3375 = vmul.u32 %v3368, %v3359
        %v3376 = vadd.s32 %v3371, %v3373
        %vm3377 = vc.u32 %v3371, %v3373
        %v3378 = vadd.s32 %v3374, 1
        %v3379 = vsel %vm3377, %v3378, %v3374
        %v3380 = vadd.s32 %v3375, %v3379
        %v3381 = vadd.s32 %v3380, 536870912
        %v3382 = vshrl.u32 %v3381, 30
        %v3383 = vshll.u32 %v3382, 30
        %v3384 = vsub.s32 %v3380, %v3383
        %vm3385 = vcmp.lt.s32.totalorder %v3384, 0
        %v3386 = vsub.s32 0, %v3384
        %v3387 = vsel %vm3385, %v3386, %v3384
        %v3388 = vclz %v3387
        %v3389 = vsub.s32 %v3388, 2
        %vm3390 = vcmp.gt.s32.totalorder 0, %v3389
        %v3391 = vsel %vm3390, 0, %v3389
        %v3392 = vsub.s32 32, %v3391
        %v3393 = vshll.u32 %v3384, %v3391
        %v3394 = vshrl.u32 %v3376, %v3392
        %v3395 = vor.u32 %v3393, %v3394
        %v3396 = vsub.s32 4294967266, %v3391
        %v3397 = vadd.s32 %v3396, 127
        %v3398 = vshll.u32 %v3397, 23
        %v3399 = vor.u32 4788187, %v3398
        %v3400 = vand.u32 2147483647, %v3399
        %v3402 = vcvt.s32.f32 %v3395
        %v3403 = vmul.f32 %v3402, %v3400
        %v3404 = vxor.u32 %v3403, 2147483648
        %v3405 = vsel %vm3322, %v3404, %v3403
        %v3406 = vsub.s32 4, %v3382
        %v3407 = vsel %vm3322, %v3406, %v3382
        %v3408 = vsel %vm3321, %v2068, %v3405
        %v3409 = vsel %vm3321, 0, %v3407
        %v3410 = vcosq.f32.pop %v3408
        %v3411 = vsinq.f32.pop %v3408
        %vm3412 = vweird.f32 %v2068
        %v3413 = vadd.s32 %v3409, 3
        %v3414 = vand.u32 %v3413, 3
        %vm3415 = vcmp.lt.s32.totalorder %v3414, 2
        %vm3416 = vcmp.eq.s32.totalorder %v3414, 0
        %v3417 = vxor.u32 %v3411, 2147483648
        %v3418 = vsel %vm3416, %v3410, %v3417
        %vm3419 = vcmp.eq.s32.totalorder %v3414, 2
        %v3420 = vxor.u32 %v3410, 2147483648
        %v3421 = vsel %vm3419, %v3420, %v3411
        %v3422 = vsel %vm3415, %v3418, %v3421
        %v3423 = vsel %vm3412, nan, %v3422
        %v3424 = vand.u32 2147483647, %v2069
        %vm3425 = vcmp.le.f32.partialorder %v3424, 0.7853982
        %vm3426 = vcmp.lt.s32.totalorder %v2069, 0
        %v3427 = vand.u32 %v2069, 2139095040
        %v3428 = vshrl.u32 %v3427, 23
        %v3429 = vsub.s32 %v3428, 127
        %v3430 = vand.u32 2147483647, %v2069
        %v3431 = vand.u32 %v3430, 8388607
        %v3432 = vor.u32 %v3431, 8388608
        %v3433 = vsub.s32 0, %v3432
        %v3434 = vadd.s32 %v3429, 1
        %vm3435 = vcmp.gt.s32.totalorder %v3434, 0
        %v3436 = vsel %vm3435, %v3434, 0
        %v3437 = vshrl.u32 %v3436, 5
        %v3438 = vand.u32 %v3436, 31
        %v3439 = vsub.s32 32, %v3438
        %v3440 = vshrl.u32 683565275, %v3439
        %v3441 = vshll.u32 683565275, %v3438
        %v3442 = vshrl.u32 2475754826, %v3439
        %v3443 = vor.u32 %v3441, %v3442
        %v3444 = vshll.u32 2475754826, %v3438
        %v3445 = vshrl.u32 2131351028, %v3439
        %v3446 = vor.u32 %v3444, %v3445
        %v3447 = vshll.u32 2131351028, %v3438
        %v3448 = vshrl.u32 2102212464, %v3439
        %v3449 = vor.u32 %v3447, %v3448
        %v3450 = vshll.u32 2102212464, %v3438
        %v3451 = vshrl.u32 920167782, %v3439
        %v3452 = vor.u32 %v3450, %v3451
        %v3453 = vshll.u32 920167782, %v3438
        %v3454 = vshrl.u32 1326507024, %v3439
        %v3455 = vor.u32 %v3453, %v3454
        %vm3456 = vcmp.lt.s32.totalorder %v3437, 1
        %vm3457 = vcmp.lt.s32.totalorder %v3437, 2
        %vm3458 = vcmp.lt.s32.totalorder %v3437, 3
        %vm3459 = vcmp.lt.s32.totalorder %v3437, 4
        %v3460 = vsel %vm3456, %v3440, %v3443
        %v3461 = vsel %vm3459, %v3449, 2102212464
        %v3462 = vsel %vm3458, %v3446, %v3461
        %v3463 = vsel %vm3457, %v3460, %v3462
        %v3464 = vsel %vm3456, %v3443, %v3446
        %v3465 = vsel %vm3459, %v3452, 920167782
        %v3466 = vsel %vm3458, %v3449, %v3465
        %v3467 = vsel %vm3457, %v3464, %v3466
        %v3468 = vsel %vm3456, %v3446, %v3449
        %v3469 = vsel %vm3459, %v3455, 1326507024
        %v3470 = vsel %vm3458, %v3452, %v3469
        %v3471 = vsel %vm3457, %v3468, %v3470
        %v3472 = vshll.u32 %v3432, 8
        %v3473 = vmul.u32.u64.compose %v3472, %v3471
        %v3474 = vextract.low.u32 %v3473
        %v3475 = vextract.high.u32 %v3473
        %v3476 = vmul.u32.u64.compose %v3472, %v3467
        %v3477 = vextract.low.u32 %v3476
        %v3478 = vextract.high.u32 %v3476
        %v3479 = vmul.u32 %v3472, %v3463
        %v3480 = vadd.s32 %v3475, %v3477
        %vm3481 = vc.u32 %v3475, %v3477
        %v3482 = vadd.s32 %v3478, 1
        %v3483 = vsel %vm3481, %v3482, %v3478
        %v3484 = vadd.s32 %v3479, %v3483
        %v3485 = vadd.s32 %v3484, 536870912
        %v3486 = vshrl.u32 %v3485, 30
        %v3487 = vshll.u32 %v3486, 30
        %v3488 = vsub.s32 %v3484, %v3487
        %vm3489 = vcmp.lt.s32.totalorder %v3488, 0
        %v3490 = vsub.s32 0, %v3488
        %v3491 = vsel %vm3489, %v3490, %v3488
        %v3492 = vclz %v3491
        %v3493 = vsub.s32 %v3492, 2
        %vm3494 = vcmp.gt.s32.totalorder 0, %v3493
        %v3495 = vsel %vm3494, 0, %v3493
        %v3496 = vsub.s32 32, %v3495
        %v3497 = vshll.u32 %v3488, %v3495
        %v3498 = vshrl.u32 %v3480, %v3496
        %v3499 = vor.u32 %v3497, %v3498
        %v3500 = vsub.s32 4294967266, %v3495
        %v3501 = vadd.s32 %v3500, 127
        %v3502 = vshll.u32 %v3501, 23
        %v3503 = vor.u32 4788187, %v3502
        %v3504 = vand.u32 2147483647, %v3503
        %v3506 = vcvt.s32.f32 %v3499
        %v3507 = vmul.f32 %v3506, %v3504
        %v3508 = vxor.u32 %v3507, 2147483648
        %v3509 = vsel %vm3426, %v3508, %v3507
        %v3510 = vsub.s32 4, %v3486
        %v3511 = vsel %vm3426, %v3510, %v3486
        %v3512 = vsel %vm3425, %v2069, %v3509
        %v3513 = vsel %vm3425, 0, %v3511
        %v3514 = vcosq.f32.pop %v3512
        %v3515 = vsinq.f32.pop %v3512
        %vm3516 = vweird.f32 %v2069
        %v3517 = vadd.s32 %v3513, 3
        %v3518 = vand.u32 %v3517, 3
        %vm3519 = vcmp.lt.s32.totalorder %v3518, 2
        %vm3520 = vcmp.eq.s32.totalorder %v3518, 0
        %v3521 = vxor.u32 %v3515, 2147483648
        %v3522 = vsel %vm3520, %v3514, %v3521
        %vm3523 = vcmp.eq.s32.totalorder %v3518, 2
        %v3524 = vxor.u32 %v3514, 2147483648
        %v3525 = vsel %vm3523, %v3524, %v3515
        %v3526 = vsel %vm3519, %v3522, %v3525
        %v3527 = vsel %vm3516, nan, %v3526
        %v3528 = vand.u32 2147483647, %v2070
        %vm3529 = vcmp.le.f32.partialorder %v3528, 0.7853982
        %vm3530 = vcmp.lt.s32.totalorder %v2070, 0
        %v3531 = vand.u32 %v2070, 2139095040
        %v3532 = vshrl.u32 %v3531, 23
        %v3533 = vsub.s32 %v3532, 127
        %v3534 = vand.u32 2147483647, %v2070
        %v3535 = vand.u32 %v3534, 8388607
        %v3536 = vor.u32 %v3535, 8388608
        %v3537 = vsub.s32 0, %v3536
        %v3538 = vadd.s32 %v3533, 1
        %vm3539 = vcmp.gt.s32.totalorder %v3538, 0
        %v3540 = vsel %vm3539, %v3538, 0
        %v3541 = vshrl.u32 %v3540, 5
        %v3542 = vand.u32 %v3540, 31
        %v3543 = vsub.s32 32, %v3542
        %v3544 = vshrl.u32 683565275, %v3543
        %v3545 = vshll.u32 683565275, %v3542
        %v3546 = vshrl.u32 2475754826, %v3543
        %v3547 = vor.u32 %v3545, %v3546
        %v3548 = vshll.u32 2475754826, %v3542
        %v3549 = vshrl.u32 2131351028, %v3543
        %v3550 = vor.u32 %v3548, %v3549
        %v3551 = vshll.u32 2131351028, %v3542
        %v3552 = vshrl.u32 2102212464, %v3543
        %v3553 = vor.u32 %v3551, %v3552
        %v3554 = vshll.u32 2102212464, %v3542
        %v3555 = vshrl.u32 920167782, %v3543
        %v3556 = vor.u32 %v3554, %v3555
        %v3557 = vshll.u32 920167782, %v3542
        %v3558 = vshrl.u32 1326507024, %v3543
        %v3559 = vor.u32 %v3557, %v3558
        %vm3560 = vcmp.lt.s32.totalorder %v3541, 1
        %vm3561 = vcmp.lt.s32.totalorder %v3541, 2
        %vm3562 = vcmp.lt.s32.totalorder %v3541, 3
        %vm3563 = vcmp.lt.s32.totalorder %v3541, 4
        %v3564 = vsel %vm3560, %v3544, %v3547
        %v3565 = vsel %vm3563, %v3553, 2102212464
        %v3566 = vsel %vm3562, %v3550, %v3565
        %v3567 = vsel %vm3561, %v3564, %v3566
        %v3568 = vsel %vm3560, %v3547, %v3550
        %v3569 = vsel %vm3563, %v3556, 920167782
        %v3570 = vsel %vm3562, %v3553, %v3569
        %v3571 = vsel %vm3561, %v3568, %v3570
        %v3572 = vsel %vm3560, %v3550, %v3553
        %v3573 = vsel %vm3563, %v3559, 1326507024
        %v3574 = vsel %vm3562, %v3556, %v3573
        %v3575 = vsel %vm3561, %v3572, %v3574
        %v3576 = vshll.u32 %v3536, 8
        %v3577 = vmul.u32.u64.compose %v3576, %v3575
        %v3578 = vextract.low.u32 %v3577
        %v3579 = vextract.high.u32 %v3577
        %v3580 = vmul.u32.u64.compose %v3576, %v3571
        %v3581 = vextract.low.u32 %v3580
        %v3582 = vextract.high.u32 %v3580
        %v3583 = vmul.u32 %v3576, %v3567
        %v3584 = vadd.s32 %v3579, %v3581
        %vm3585 = vc.u32 %v3579, %v3581
        %v3586 = vadd.s32 %v3582, 1
        %v3587 = vsel %vm3585, %v3586, %v3582
        %v3588 = vadd.s32 %v3583, %v3587
        %v3589 = vadd.s32 %v3588, 536870912
        %v3590 = vshrl.u32 %v3589, 30
        %v3591 = vshll.u32 %v3590, 30
        %v3592 = vsub.s32 %v3588, %v3591
        %vm3593 = vcmp.lt.s32.totalorder %v3592, 0
        %v3594 = vsub.s32 0, %v3592
        %v3595 = vsel %vm3593, %v3594, %v3592
        %v3596 = vclz %v3595
        %v3597 = vsub.s32 %v3596, 2
        %vm3598 = vcmp.gt.s32.totalorder 0, %v3597
        %v3599 = vsel %vm3598, 0, %v3597
        %v3600 = vsub.s32 32, %v3599
        %v3601 = vshll.u32 %v3592, %v3599
        %v3602 = vshrl.u32 %v3584, %v3600
        %v3603 = vor.u32 %v3601, %v3602
        %v3604 = vsub.s32 4294967266, %v3599
        %v3605 = vadd.s32 %v3604, 127
        %v3606 = vshll.u32 %v3605, 23
        %v3607 = vor.u32 4788187, %v3606
        %v3608 = vand.u32 2147483647, %v3607
        %v3610 = vcvt.s32.f32 %v3603
        %v3611 = vmul.f32 %v3610, %v3608
        %v3612 = vxor.u32 %v3611, 2147483648
        %v3613 = vsel %vm3530, %v3612, %v3611
        %v3614 = vsub.s32 4, %v3590
        %v3615 = vsel %vm3530, %v3614, %v3590
        %v3616 = vsel %vm3529, %v2070, %v3613
        %v3617 = vsel %vm3529, 0, %v3615
        %v3618 = vcosq.f32.pop %v3616
        %v3619 = vsinq.f32.pop %v3616
        %vm3620 = vweird.f32 %v2070
        %v3621 = vadd.s32 %v3617, 3
        %v3622 = vand.u32 %v3621, 3
        %vm3623 = vcmp.lt.s32.totalorder %v3622, 2
        %vm3624 = vcmp.eq.s32.totalorder %v3622, 0
        %v3625 = vxor.u32 %v3619, 2147483648
        %v3626 = vsel %vm3624, %v3618, %v3625
        %vm3627 = vcmp.eq.s32.totalorder %v3622, 2
        %v3628 = vxor.u32 %v3618, 2147483648
        %v3629 = vsel %vm3627, %v3628, %v3619
        %v3630 = vsel %vm3623, %v3626, %v3629
        %v3631 = vsel %vm3620, nan, %v3630
        %v3632 = vand.u32 2147483647, %v2071
        %vm3633 = vcmp.le.f32.partialorder %v3632, 0.7853982
        %vm3634 = vcmp.lt.s32.totalorder %v2071, 0
        %v3635 = vand.u32 %v2071, 2139095040
        %v3636 = vshrl.u32 %v3635, 23
        %v3637 = vsub.s32 %v3636, 127
        %v3638 = vand.u32 2147483647, %v2071
        %v3639 = vand.u32 %v3638, 8388607
        %v3640 = vor.u32 %v3639, 8388608
        %v3641 = vsub.s32 0, %v3640
        %v3642 = vadd.s32 %v3637, 1
        %vm3643 = vcmp.gt.s32.totalorder %v3642, 0
        %v3644 = vsel %vm3643, %v3642, 0
        %v3645 = vshrl.u32 %v3644, 5
        %v3646 = vand.u32 %v3644, 31
        %v3647 = vsub.s32 32, %v3646
        %v3648 = vshrl.u32 683565275, %v3647
        %v3649 = vshll.u32 683565275, %v3646
        %v3650 = vshrl.u32 2475754826, %v3647
        %v3651 = vor.u32 %v3649, %v3650
        %v3652 = vshll.u32 2475754826, %v3646
        %v3653 = vshrl.u32 2131351028, %v3647
        %v3654 = vor.u32 %v3652, %v3653
        %v3655 = vshll.u32 2131351028, %v3646
        %v3656 = vshrl.u32 2102212464, %v3647
        %v3657 = vor.u32 %v3655, %v3656
        %v3658 = vshll.u32 2102212464, %v3646
        %v3659 = vshrl.u32 920167782, %v3647
        %v3660 = vor.u32 %v3658, %v3659
        %v3661 = vshll.u32 920167782, %v3646
        %v3662 = vshrl.u32 1326507024, %v3647
        %v3663 = vor.u32 %v3661, %v3662
        %vm3664 = vcmp.lt.s32.totalorder %v3645, 1
        %vm3665 = vcmp.lt.s32.totalorder %v3645, 2
        %vm3666 = vcmp.lt.s32.totalorder %v3645, 3
        %vm3667 = vcmp.lt.s32.totalorder %v3645, 4
        %v3668 = vsel %vm3664, %v3648, %v3651
        %v3669 = vsel %vm3667, %v3657, 2102212464
        %v3670 = vsel %vm3666, %v3654, %v3669
        %v3671 = vsel %vm3665, %v3668, %v3670
        %v3672 = vsel %vm3664, %v3651, %v3654
        %v3673 = vsel %vm3667, %v3660, 920167782
        %v3674 = vsel %vm3666, %v3657, %v3673
        %v3675 = vsel %vm3665, %v3672, %v3674
        %v3676 = vsel %vm3664, %v3654, %v3657
        %v3677 = vsel %vm3667, %v3663, 1326507024
        %v3678 = vsel %vm3666, %v3660, %v3677
        %v3679 = vsel %vm3665, %v3676, %v3678
        %v3680 = vshll.u32 %v3640, 8
        %v3681 = vmul.u32.u64.compose %v3680, %v3679
        %v3682 = vextract.low.u32 %v3681
        %v3683 = vextract.high.u32 %v3681
        %v3684 = vmul.u32.u64.compose %v3680, %v3675
        %v3685 = vextract.low.u32 %v3684
        %v3686 = vextract.high.u32 %v3684
        %v3687 = vmul.u32 %v3680, %v3671
        %v3688 = vadd.s32 %v3683, %v3685
        %vm3689 = vc.u32 %v3683, %v3685
        %v3690 = vadd.s32 %v3686, 1
        %v3691 = vsel %vm3689, %v3690, %v3686
        %v3692 = vadd.s32 %v3687, %v3691
        %v3693 = vadd.s32 %v3692, 536870912
        %v3694 = vshrl.u32 %v3693, 30
        %v3695 = vshll.u32 %v3694, 30
        %v3696 = vsub.s32 %v3692, %v3695
        %vm3697 = vcmp.lt.s32.totalorder %v3696, 0
        %v3698 = vsub.s32 0, %v3696
        %v3699 = vsel %vm3697, %v3698, %v3696
        %v3700 = vclz %v3699
        %v3701 = vsub.s32 %v3700, 2
        %vm3702 = vcmp.gt.s32.totalorder 0, %v3701
        %v3703 = vsel %vm3702, 0, %v3701
        %v3704 = vsub.s32 32, %v3703
        %v3705 = vshll.u32 %v3696, %v3703
        %v3706 = vshrl.u32 %v3688, %v3704
        %v3707 = vor.u32 %v3705, %v3706
        %v3708 = vsub.s32 4294967266, %v3703
        %v3709 = vadd.s32 %v3708, 127
        %v3710 = vshll.u32 %v3709, 23
        %v3711 = vor.u32 4788187, %v3710
        %v3712 = vand.u32 2147483647, %v3711
        %v3714 = vcvt.s32.f32 %v3707
        %v3715 = vmul.f32 %v3714, %v3712
        %v3716 = vxor.u32 %v3715, 2147483648
        %v3717 = vsel %vm3634, %v3716, %v3715
        %v3718 = vsub.s32 4, %v3694
        %v3719 = vsel %vm3634, %v3718, %v3694
        %v3720 = vsel %vm3633, %v2071, %v3717
        %v3721 = vsel %vm3633, 0, %v3719
        %v3722 = vcosq.f32.pop %v3720
        %v3723 = vsinq.f32.pop %v3720
        %vm3724 = vweird.f32 %v2071
        %v3725 = vadd.s32 %v3721, 3
        %v3726 = vand.u32 %v3725, 3
        %vm3727 = vcmp.lt.s32.totalorder %v3726, 2
        %vm3728 = vcmp.eq.s32.totalorder %v3726, 0
        %v3729 = vxor.u32 %v3723, 2147483648
        %v3730 = vsel %vm3728, %v3722, %v3729
        %vm3731 = vcmp.eq.s32.totalorder %v3726, 2
        %v3732 = vxor.u32 %v3722, 2147483648
        %v3733 = vsel %vm3731, %v3732, %v3723
        %v3734 = vsel %vm3727, %v3730, %v3733
        %v3735 = vsel %vm3724, nan, %v3734
        %3736 = vst [vmem:[%s219 + $0x80] sm:$0xff] %v2175
        %3737 = vst [vmem:[%s219 + $0x88] sm:$0xff] %v2279
        %3738 = vst [vmem:[%s219 + $0x90] sm:$0xff] %v2383
        %3739 = vst [vmem:[%s219 + $0x98] sm:$0xff] %v2487
        %3740 = vst [vmem:[%s219 + $0xa0] sm:$0xff] %v2591
        %3741 = vst [vmem:[%s219 + $0xa8] sm:$0xff] %v2695
        %3742 = vst [vmem:[%s219 + $0xb0] sm:$0xff] %v2799
        %3743 = vst [vmem:[%s219 + $0xb8] sm:$0xff] %v2903
        %3744 = vst [vmem:[%s219 + $0xc0] sm:$0xff] %v3007
        %3745 = vst [vmem:[%s219 + $0xc8] sm:$0xff] %v3111
        %3746 = vst [vmem:[%s219 + $0xd0] sm:$0xff] %v3215
        %3747 = vst [vmem:[%s219 + $0xd8] sm:$0xff] %v3319
        %3748 = vst [vmem:[%s219 + $0xe0] sm:$0xff] %v3423
        %3749 = vst [vmem:[%s219 + $0xe8] sm:$0xff] %v3527
        %3750 = vst [vmem:[%s219 + $0xf0] sm:$0xff] %v3631
        %3751 = vst [vmem:[%s219 + $0xf8] sm:$0xff] %v3735
        %s3752 = sand.u32 %s100, 1
        %s3753 = scalar_lea.sflag [#allocation4], %s3752
        %s3754 = sand.u32 %s100, 1
        %s3755 = smul.addr %s3754, 256
        %s3756 = scalar_lea.vmem [#allocation7], %s3755
        // Predicated region
        $region37: #{tpu_custom_call.1} parent=27 // pred_check
          %p3757 = pneg %p110
        $region38: #{tpu_custom_call.1} parent=27 // pred_check_branch
          %3759 = sbr.rel (%p3757) target = $region40
        $region39: #{tpu_custom_call.1} parent=27 // pred_region
          %s3760 = smul.u32 2, %s27
          %s3762 = ssub.s32 4096, 4096
          %3763 = vsyncadd %s3753, %s3762
          %s3764 = smul.addr %s26, 32
          %s3765 = sadd.s32 %s3760, %s3764
          %s3766 = smul.addr %s3765, 128
          %s3767 = scalar_lea.hbm %s2, %s3766
          %s3768 = sshll.u32 %s3756, 4
          %s3769 = int_to_ptr.vmem [resolvable:$true] %s3768
          %3774 = dma.vmem_to_hbm [thread:$0]  %s3769, 4096, %s3767, %s3753, 256, 256, 16
        $region40: #{tpu_custom_call.1} parent=27 // pred_fallthru
          _
      $region28: #{tpu_custom_call.1} parent=5 // pred_fallthru
        _
      %p3775 = scmp.le.s32.totalorder 2, %s17
      // Predicated region
      $region41: #{tpu_custom_call.1} parent=5 // pred_check
        %p3776 = pneg %p3775
      $region42: #{tpu_custom_call.1} parent=5 // pred_check_branch
        %3778 = sbr.rel (%p3776) target = $region44
      $region43: #{tpu_custom_call.1} parent=5 // pred_region
        %s3779 = ssub.s32 %s17, 2
        // Predicated region
        $region45: #{tpu_custom_call.1} parent=43 // pred_check
          %p3780 = pneg %p116
        $region46: #{tpu_custom_call.1} parent=43 // pred_check_branch
          %3782 = sbr.rel (%p3780) target = $region48
        $region47: #{tpu_custom_call.1} parent=43 // pred_region
          %s3783 = sand.u32 %s101, 1
          %s3784 = scalar_lea.sflag [#allocation4], %s3783
          %s3785 = sand.u32 %s101, 1
          %s3786 = smul.addr %s3785, 256
          %s3787 = scalar_lea.vmem [#allocation7], %s3786
          %3788 = dma.done %s3784, 4096
        $region48: #{tpu_custom_call.1} parent=43 // pred_fallthru
          _
      $region44: #{tpu_custom_call.1} parent=5 // pred_fallthru
        _
    $region6: #{tpu_custom_call.1} parent=1 // loop_footer
      %s21 = sadd.s32 1, %s17
    $region7: #{tpu_custom_call.1} parent=1 // loop_footer_branch
      %16 = sbr.rel target = $region3
    $region8: #{tpu_custom_call.1} parent=1 // loop_exit
      _
    %3789 = vsyncpa [#allocation3], 1
    %s3790 = scalar_lea.sflag [#allocation3], 1
    %3791 = vsyncpa %s3790, 1
    %3792 = vsyncpa [#allocation6], 1
    %s3793 = scalar_lea.sflag [#allocation6], 1
    %3794 = vsyncpa %s3793, 1
    %3795 = vsyncpa [#allocation4], 1
    %s3796 = scalar_lea.sflag [#allocation4], 1
    %3797 = vsyncpa %s3796, 1

</llo_original>
